<compile_context>
chip_gen: v7x
topology: tpu7x:2x2x1
jax: 0.10.0
libtpu: 0.0.40
codegen_flags: <defaults>
</compile_context>

<pallas_src>
import functools

import jax
import jax.numpy as jnp
from jax import lax
from jax.experimental import pallas as pl
from jax.experimental.pallas import tpu as pltpu

LANE = 128


def _round_up(n, m):
    return ((n + m - 1) // m) * m


def _pick_time_chunk(T):
    # Unrolled steps per grid iteration, capped at 16 (live-range / code-size
    # control); must divide T and be a multiple of 8 (block rule) or equal T.
    for tt in (16, 8):
        if T % tt == 0:
            return tt
    # TODO(synk): for long sequences whose length has no multiple-of-8 divisor,
    # pad T on the host instead of unrolling the whole sequence in one step.
    return T


def _pick_batch_chunk(B, cap=64):
    # Keep the per-step batch tile <= 64 rows so the [Bb, 4*Hq] gate tensors
    # stay inside the 64-entry vreg file (no spills on the recurrence path).
    bb = min(B, cap)
    while B % bb:
        bb -= 1
    return bb


def _gate_width(H):
    # Per-gate lane slab width.  When 4*H <= 128 all four gates share a single
    # 128-lane vreg (gate matmul N = 128); otherwise use wider aligned slabs.
    if H <= 32:
        return 32
    if H <= 64:
        return 64
    return _round_up(H, LANE)


# --------------------------------------------------------------------------
# Fused kernel: 2-layer LSTM recurrence over a time chunk + masked softmax +
# pseudo-alignment accumulation, grid = (batch blocks, time chunks).
# Gate order (PyTorch): i, f, g, o — gate k in lanes [k*Hq, k*Hq + H).
# --------------------------------------------------------------------------
def _ctc_fused_kernel(x_ref, wi1_ref, wh1_ref, b1_ref, wi2_ref, wh2_ref, b2_ref,
                      logits_ref, pseudo_ref,
                      h1_ref, c1_ref, h2_ref, c2_ref, acc_ref,
                      *, H, S, Hq, Tt):
    t_idx = pl.program_id(1)

    @pl.when(t_idx == 0)
    def _():
        h1_ref[...] = jnp.zeros_like(h1_ref)
        c1_ref[...] = jnp.zeros_like(c1_ref)
        h2_ref[...] = jnp.zeros_like(h2_ref)
        c2_ref[...] = jnp.zeros_like(c2_ref)
        acc_ref[...] = jnp.zeros_like(acc_ref)

    wi1 = wi1_ref[...]
    wh1 = wh1_ref[...]
    b1 = b1_ref[...]
    wi2 = wi2_ref[...]
    wh2 = wh2_ref[...]
    b2 = b2_ref[...]

    def sigmoid(v):  # tanh form: single EUP op, exact sigmoid
        return 0.5 * jnp.tanh(0.5 * v) + 0.5

    def cell(gates, c):
        # Padded gate lanes carry exactly 0 pre-activation (zero weight columns
        # / zero pad bias), so padded h/c lanes stay exactly 0:
        #   c_pad' = 0.5*c_pad + 0.5*tanh(0) = 0 ; h_pad = 0.5*tanh(0) = 0.
        sg = sigmoid(gates)                       # i, f, o read from this slab
        i = sg[:, 0 * Hq:1 * Hq]
        f = sg[:, 1 * Hq:2 * Hq]
        o = sg[:, 3 * Hq:4 * Hq]
        g = jnp.tanh(gates[:, 2 * Hq:3 * Hq])
        c_new = f * c + i * g
        h_new = o * jnp.tanh(c_new)
        return h_new, c_new

    # Recurrence state: vreg-resident within the chunk (no VMEM staging).
    h1 = h1_ref[...]
    c1 = c1_ref[...]
    h2 = h2_ref[...]
    c2 = c2_ref[...]

    for t in range(Tt):  # static unroll, Tt capped at 16
        x_t = x_ref[:, t, :].astype(jnp.float32)                      # [Bb, D]
        g1 = (jnp.dot(x_t, wi1, preferred_element_type=jnp.float32)
              + jnp.dot(h1, wh1, preferred_element_type=jnp.float32) + b1)
        h1, c1 = cell(g1, c1)
        g2 = (jnp.dot(h1, wi2, preferred_element_type=jnp.float32)
              + jnp.dot(h2, wh2, preferred_element_type=jnp.float32) + b2)
        h2, c2 = cell(g2, c2)
        logits_ref[:, t, :] = h2[:, :H].astype(logits_ref.dtype)      # unpadded

    # Persist state for the next time chunk.
    h1_ref[...] = h1
    c1_ref[...] = c1
    h2_ref[...] = h2
    c2_ref[...] = c2

    # ---- fused alignment: softmax over H classes + P^T @ x for this chunk ----
    logits = logits_ref[...].astype(jnp.float32)                      # [Bb,Tt,H]
    m = jnp.max(logits, axis=-1, keepdims=True)
    e = jnp.exp(logits - m)
    p = e * pl.reciprocal(jnp.sum(e, axis=-1, keepdims=True), approx=True)
    x_c = x_ref[...].astype(jnp.float32)                              # [Bb,Tt,D]
    # NOTE: contraction over t (sublane axis of both operands); may lower with
    # per-batch XLU transposes — acceptable for the small Tt/H chunks used here.
    acc_ref[...] += jnp.einsum("bth,btd->bhd", p, x_c,
                               preferred_element_type=jnp.float32)    # [Bb,H,D]

    @pl.when(t_idx == pl.num_programs(1) - 1)
    def _():
        # Drop the blank class (index 0) as a post-matmul sublane slice.
        pseudo_ref[...] = acc_ref[:, 1:1 + S, :].astype(pseudo_ref.dtype)


# --------------------------------------------------------------------------
# Wrapper-side weight packing: gate k of a [rows, 4H] matrix goes to columns
# [k*Hq, k*Hq + H) of a [rows, 4Hq] matrix; pad columns / rows are zero.
# --------------------------------------------------------------------------
def _pack_gate_cols(w, H, Hq):
    cols = []
    for k in range(4):
        g = w[:, k * H:(k + 1) * H]
        cols.append(jnp.pad(g, ((0, 0), (0, Hq - H))))
    return jnp.concatenate(cols, axis=1)


def _pack_layer(w_ih, w_hh, b_ih, b_hh, H, Hq, in_rows):
    wi = _pack_gate_cols(w_ih.astype(jnp.float32).T, H, Hq)       # [in, 4Hq]
    if wi.shape[0] != in_rows:
        wi = jnp.pad(wi, ((0, in_rows - wi.shape[0]), (0, 0)))
    wh = _pack_gate_cols(w_hh.astype(jnp.float32).T, H, Hq)       # [H, 4Hq]
    wh = jnp.pad(wh, ((0, Hq - H), (0, 0)))                       # [Hq, 4Hq]
    b = _pack_gate_cols((b_ih + b_hh).astype(jnp.float32)[None, :], H, Hq)
    return wi, wh, b


# --------------------------------------------------------------------------
# Parameter init (deterministic, PyTorch-LSTM-like uniform(-1/sqrt(H), 1/sqrt(H)))
# --------------------------------------------------------------------------
def init_ctc_params(key, in_dim, out_seq_len, dtype=jnp.float32):
    H = out_seq_len + 1
    bound = 1.0 / (H ** 0.5)
    shapes = {
        "w_ih_l0": (4 * H, in_dim),
        "w_hh_l0": (4 * H, H),
        "b_ih_l0": (4 * H,),
        "b_hh_l0": (4 * H,),
        "w_ih_l1": (4 * H, H),
        "w_hh_l1": (4 * H, H),
        "b_ih_l1": (4 * H,),
        "b_hh_l1": (4 * H,),
    }
    keys = jax.random.split(key, len(shapes))
    return {
        name: jax.random.uniform(k, shape, dtype, minval=-bound, maxval=bound)
        for k, (name, shape) in zip(keys, shapes.items())
    }


# --------------------------------------------------------------------------
# Forward: weight packing in plain JAX, everything else in one Pallas kernel.
# --------------------------------------------------------------------------
@jax.jit
def ctc_forward(x, params):
    B, T, D = x.shape
    H = params["w_hh_l0"].shape[1]              # hidden size = out_seq_len + 1
    S = H - 1                                   # out_seq_len
    Hq = _gate_width(H)                         # per-gate lane slab
    Gp = 4 * Hq                                 # gate matmul N
    Tt = _pick_time_chunk(T)
    Bb = _pick_batch_chunk(B)

    wi1, wh1, b1 = _pack_layer(params["w_ih_l0"], params["w_hh_l0"],
                               params["b_ih_l0"], params["b_hh_l0"], H, Hq, D)
    wi2, wh2, b2 = _pack_layer(params["w_ih_l1"], params["w_hh_l1"],
                               params["b_ih_l1"], params["b_hh_l1"], H, Hq, Hq)

    logits, pseudo = pl.pallas_call(
        functools.partial(_ctc_fused_kernel, H=H, S=S, Hq=Hq, Tt=Tt),
        out_shape=(
            jax.ShapeDtypeStruct((B, T, H), x.dtype),    # logits (incl. blank)
            jax.ShapeDtypeStruct((B, S, D), x.dtype),    # pseudo-aligned out
        ),
        grid_spec=pltpu.PrefetchScalarGridSpec(
            num_scalar_prefetch=0,
            grid=(B // Bb, T // Tt),
            in_specs=[
                pl.BlockSpec((Bb, Tt, D), lambda b, t: (b, t, 0)),
                pl.BlockSpec((D, Gp), lambda b, t: (0, 0)),
                pl.BlockSpec((Hq, Gp), lambda b, t: (0, 0)),
                pl.BlockSpec((1, Gp), lambda b, t: (0, 0)),
                pl.BlockSpec((Hq, Gp), lambda b, t: (0, 0)),
                pl.BlockSpec((Hq, Gp), lambda b, t: (0, 0)),
                pl.BlockSpec((1, Gp), lambda b, t: (0, 0)),
            ],
            out_specs=(
                pl.BlockSpec((Bb, Tt, H), lambda b, t: (b, t, 0)),
                pl.BlockSpec((Bb, S, D), lambda b, t: (b, 0, 0)),
            ),
            scratch_shapes=[
                pltpu.VMEM((Bb, Hq), jnp.float32),     # h1
                pltpu.VMEM((Bb, Hq), jnp.float32),     # c1
                pltpu.VMEM((Bb, Hq), jnp.float32),     # h2
                pltpu.VMEM((Bb, Hq), jnp.float32),     # c2
                pltpu.VMEM((Bb, H, D), jnp.float32),   # pseudo accumulator
            ],
        ),
        compiler_params=pltpu.CompilerParams(
            dimension_semantics=("parallel", "arbitrary"),  # batch || , time seq
            vmem_limit_bytes=32 * 1024 * 1024,
        ),
    )(x, wi1, wh1, b1, wi2, wh2, b2)

    return pseudo, logits


# --------------------------------------------------------------------------
# Pure-JAX reference (for a light correctness check).
# --------------------------------------------------------------------------
def _reference_forward(x, params):
    xf = x.astype(jnp.float32)

    def lstm_layer(inp, w_ih, w_hh, b_ih, b_hh):
        Hh = w_hh.shape[1]
        Bsz = inp.shape[0]

        def step(carry, x_t):
            h, c = carry
            gates = x_t @ w_ih.T + h @ w_hh.T + b_ih + b_hh
            i, f, g, o = jnp.split(gates, 4, axis=-1)
            c = jax.nn.sigmoid(f) * c + jax.nn.sigmoid(i) * jnp.tanh(g)
            h = jax.nn.sigmoid(o) * jnp.tanh(c)
            return (h, c), h

        carry0 = (jnp.zeros((Bsz, Hh), jnp.float32),
                  jnp.zeros((Bsz, Hh), jnp.float32))
        _, hs = lax.scan(step, carry0, jnp.swapaxes(inp, 0, 1))
        return jnp.swapaxes(hs, 0, 1)

    h1 = lstm_layer(xf, params["w_ih_l0"].astype(jnp.float32),
                    params["w_hh_l0"].astype(jnp.float32),
                    params["b_ih_l0"].astype(jnp.float32),
                    params["b_hh_l0"].astype(jnp.float32))
    logits = lstm_layer(h1, params["w_ih_l1"].astype(jnp.float32),
                        params["w_hh_l1"].astype(jnp.float32),
                        params["b_ih_l1"].astype(jnp.float32),
                        params["b_hh_l1"].astype(jnp.float32))
    p = jax.nn.softmax(logits, axis=2)[:, :, 1:]
    pseudo = jnp.einsum("bts,btd->bsd", p, xf)
    return pseudo, logits


if __name__ == "__main__":
    B, T_in, in_dim, out_seq_len = 2, 8, 32, 8

    key = jax.random.PRNGKey(0)
    kx, kp = jax.random.split(key)
    x = jax.random.normal(kx, (B, T_in, in_dim), dtype=jnp.float32)
    params = init_ctc_params(kp, in_dim, out_seq_len)

    pseudo_aligned_out, pred_output_position_inclu_blank = ctc_forward(x, params)
    jax.block_until_ready((pseudo_aligned_out, pred_output_position_inclu_blank))

    assert pseudo_aligned_out.shape == (B, out_seq_len, in_dim)
    assert pred_output_position_inclu_blank.shape == (B, T_in, out_seq_len + 1)

    ref_pseudo, ref_logits = _reference_forward(x, params)
    err_logits = float(jnp.max(jnp.abs(
        pred_output_position_inclu_blank.astype(jnp.float32) - ref_logits)))
    err_pseudo = float(jnp.max(jnp.abs(
        pseudo_aligned_out.astype(jnp.float32) - ref_pseudo)))
    assert err_logits < 5e-2, err_logits
    assert err_pseudo < 5e-2, err_pseudo

    print("KERNEL_OK")
</pallas_src>

<mosaic_0001>
module attributes {stable_mosaic.version = 11 : i64} {
  func.func @_ctc_fused_kernel(%arg0: i32, %arg1: i32, %arg2: memref<2x8x32xf32, #tpu.memory_space<vmem>>, %arg3: memref<32x128xf32, #tpu.memory_space<vmem>>, %arg4: memref<32x128xf32, #tpu.memory_space<vmem>>, %arg5: memref<1x128xf32, #tpu.memory_space<vmem>>, %arg6: memref<32x128xf32, #tpu.memory_space<vmem>>, %arg7: memref<32x128xf32, #tpu.memory_space<vmem>>, %arg8: memref<1x128xf32, #tpu.memory_space<vmem>>, %arg9: memref<2x8x9xf32, #tpu.memory_space<vmem>>, %arg10: memref<2x8x32xf32, #tpu.memory_space<vmem>>, %arg11: memref<2x32xf32, #tpu.memory_space<vmem>>, %arg12: memref<2x32xf32, #tpu.memory_space<vmem>>, %arg13: memref<2x32xf32, #tpu.memory_space<vmem>>, %arg14: memref<2x32xf32, #tpu.memory_space<vmem>>, %arg15: memref<2x9x32xf32, #tpu.memory_space<vmem>>) attributes {dimension_semantics = [#tpu.dimension_semantics<parallel>, #tpu.dimension_semantics<arbitrary>], iteration_bounds = array<i64: 1, 1>, scalar_prefetch = 0 : i64, scratch_operands = 5 : i64, tpu.core_type = #tpu.core_type<tc>, window_params = [{transform_indices = @transform_0, window_bounds = array<i64: 2, 8, 32>}, {pipeline_mode = #tpu.pipeline_mode<synchronous>, transform_indices = @transform_1, window_bounds = array<i64: 32, 128>}, {pipeline_mode = #tpu.pipeline_mode<synchronous>, transform_indices = @transform_2, window_bounds = array<i64: 32, 128>}, {pipeline_mode = #tpu.pipeline_mode<synchronous>, transform_indices = @transform_3, window_bounds = array<i64: 1, 128>}, {pipeline_mode = #tpu.pipeline_mode<synchronous>, transform_indices = @transform_4, window_bounds = array<i64: 32, 128>}, {pipeline_mode = #tpu.pipeline_mode<synchronous>, transform_indices = @transform_5, window_bounds = array<i64: 32, 128>}, {pipeline_mode = #tpu.pipeline_mode<synchronous>, transform_indices = @transform_6, window_bounds = array<i64: 1, 128>}, {transform_indices = @transform_7, window_bounds = array<i64: 2, 8, 9>}, {transform_indices = @transform_8, window_bounds = array<i64: 2, 8, 32>}]} {
    %c0_i32 = arith.constant 0 : i32
    %0 = arith.cmpi eq, %arg1, %c0_i32 : i32
    %1 = arith.extui %0 : i1 to i32
    %c0_i32_0 = arith.constant 0 : i32
    %2 = arith.cmpi ne, %1, %c0_i32_0 : i32
    scf.if %2 {
      %cst_165 = arith.constant 0.000000e+00 : f32
      %436 = vector.broadcast %cst_165 : f32 to vector<2x32xf32>
      %c0_166 = arith.constant 0 : index
      %c0_167 = arith.constant 0 : index
      %437 = vector.load %arg11[%c0_166, %c0_167] : memref<2x32xf32, #tpu.memory_space<vmem>>, vector<2x32xf32>
      tpu.vector_store %arg11[%c0_166, %c0_167], %436 {strides = array<i32>} : memref<2x32xf32, #tpu.memory_space<vmem>>, vector<2x32xf32>,
      %cst_168 = arith.constant 0.000000e+00 : f32
      %438 = vector.broadcast %cst_168 : f32 to vector<2x32xf32>
      %c0_169 = arith.constant 0 : index
      %c0_170 = arith.constant 0 : index
      %439 = vector.load %arg12[%c0_169, %c0_170] : memref<2x32xf32, #tpu.memory_space<vmem>>, vector<2x32xf32>
      tpu.vector_store %arg12[%c0_169, %c0_170], %438 {strides = array<i32>} : memref<2x32xf32, #tpu.memory_space<vmem>>, vector<2x32xf32>,
      %cst_171 = arith.constant 0.000000e+00 : f32
      %440 = vector.broadcast %cst_171 : f32 to vector<2x32xf32>
      %c0_172 = arith.constant 0 : index
      %c0_173 = arith.constant 0 : index
      %441 = vector.load %arg13[%c0_172, %c0_173] : memref<2x32xf32, #tpu.memory_space<vmem>>, vector<2x32xf32>
      tpu.vector_store %arg13[%c0_172, %c0_173], %440 {strides = array<i32>} : memref<2x32xf32, #tpu.memory_space<vmem>>, vector<2x32xf32>,
      %cst_174 = arith.constant 0.000000e+00 : f32
      %442 = vector.broadcast %cst_174 : f32 to vector<2x32xf32>
      %c0_175 = arith.constant 0 : index
      %c0_176 = arith.constant 0 : index
      %443 = vector.load %arg14[%c0_175, %c0_176] : memref<2x32xf32, #tpu.memory_space<vmem>>, vector<2x32xf32>
      tpu.vector_store %arg14[%c0_175, %c0_176], %442 {strides = array<i32>} : memref<2x32xf32, #tpu.memory_space<vmem>>, vector<2x32xf32>,
      %cst_177 = arith.constant 0.000000e+00 : f32
      %444 = vector.broadcast %cst_177 : f32 to vector<2x9x32xf32>
      %c0_178 = arith.constant 0 : index
      %c0_179 = arith.constant 0 : index
      %c0_180 = arith.constant 0 : index
      %445 = vector.load %arg15[%c0_178, %c0_179, %c0_180] : memref<2x9x32xf32, #tpu.memory_space<vmem>>, vector<2x9x32xf32>
      tpu.vector_store %arg15[%c0_178, %c0_179, %c0_180], %444 {strides = array<i32>} : memref<2x9x32xf32, #tpu.memory_space<vmem>>, vector<2x9x32xf32>,
    } else {
    }
    %c0 = arith.constant 0 : index
    %c0_1 = arith.constant 0 : index
    %3 = vector.load %arg3[%c0, %c0_1] : memref<32x128xf32, #tpu.memory_space<vmem>>, vector<32x128xf32>
    %c0_2 = arith.constant 0 : index
    %c0_3 = arith.constant 0 : index
    %4 = vector.load %arg4[%c0_2, %c0_3] : memref<32x128xf32, #tpu.memory_space<vmem>>, vector<32x128xf32>
    %c0_4 = arith.constant 0 : index
    %c0_5 = arith.constant 0 : index
    %5 = vector.load %arg5[%c0_4, %c0_5] : memref<1x128xf32, #tpu.memory_space<vmem>>, vector<1x128xf32>
    %c0_6 = arith.constant 0 : index
    %c0_7 = arith.constant 0 : index
    %6 = vector.load %arg6[%c0_6, %c0_7] : memref<32x128xf32, #tpu.memory_space<vmem>>, vector<32x128xf32>
    %c0_8 = arith.constant 0 : index
    %c0_9 = arith.constant 0 : index
    %7 = vector.load %arg7[%c0_8, %c0_9] : memref<32x128xf32, #tpu.memory_space<vmem>>, vector<32x128xf32>
    %c0_10 = arith.constant 0 : index
    %c0_11 = arith.constant 0 : index
    %8 = vector.load %arg8[%c0_10, %c0_11] : memref<1x128xf32, #tpu.memory_space<vmem>>, vector<1x128xf32>
    %c0_12 = arith.constant 0 : index
    %c0_13 = arith.constant 0 : index
    %9 = vector.load %arg11[%c0_12, %c0_13] : memref<2x32xf32, #tpu.memory_space<vmem>>, vector<2x32xf32>
    %c0_14 = arith.constant 0 : index
    %c0_15 = arith.constant 0 : index
    %10 = vector.load %arg12[%c0_14, %c0_15] : memref<2x32xf32, #tpu.memory_space<vmem>>, vector<2x32xf32>
    %c0_16 = arith.constant 0 : index
    %c0_17 = arith.constant 0 : index
    %11 = vector.load %arg13[%c0_16, %c0_17] : memref<2x32xf32, #tpu.memory_space<vmem>>, vector<2x32xf32>
    %c0_18 = arith.constant 0 : index
    %c0_19 = arith.constant 0 : index
    %12 = vector.load %arg14[%c0_18, %c0_19] : memref<2x32xf32, #tpu.memory_space<vmem>>, vector<2x32xf32>
    %c0_20 = arith.constant 0 : index
    %c0_21 = arith.constant 0 : index
    %c0_22 = arith.constant 0 : index
    %13 = vector.load %arg2[%c0_20, %c0_21, %c0_22] : memref<2x8x32xf32, #tpu.memory_space<vmem>>, vector<2x1x32xf32>
    %14 = vector.shape_cast %13 : vector<2x1x32xf32> to vector<2x32xf32>
    %cst = arith.constant dense<0.000000e+00> : vector<2x128xf32>
    %15 = tpu.matmul %14, %3, %cst {dimension_numbers = #tpu.dot_dimension_numbers<[1], [0], [0], [1], [0, 0, 1, 1], [], []>} : vector<2x32xf32>, vector<32x128xf32>, vector<2x128xf32> -> vector<2x128xf32>
    %cst_23 = arith.constant dense<0.000000e+00> : vector<2x128xf32>
    %16 = tpu.matmul %9, %4, %cst_23 {dimension_numbers = #tpu.dot_dimension_numbers<[1], [0], [0], [1], [0, 0, 1, 1], [], []>} : vector<2x32xf32>, vector<32x128xf32>, vector<2x128xf32> -> vector<2x128xf32>
    %17 = arith.addf %15, %16 : vector<2x128xf32>
    %18 = vector.broadcast %5 : vector<1x128xf32> to vector<2x128xf32>
    %19 = arith.addf %17, %18 : vector<2x128xf32>
    %cst_24 = arith.constant 5.000000e-01 : f32
    %20 = vector.broadcast %cst_24 : f32 to vector<2x128xf32>
    %21 = arith.mulf %20, %19 : vector<2x128xf32>
    %22 = math.tanh %21 : vector<2x128xf32>
    %cst_25 = arith.constant 5.000000e-01 : f32
    %23 = vector.broadcast %cst_25 : f32 to vector<2x128xf32>
    %24 = arith.mulf %23, %22 : vector<2x128xf32>
    %cst_26 = arith.constant 5.000000e-01 : f32
    %25 = vector.broadcast %cst_26 : f32 to vector<2x128xf32>
    %26 = arith.addf %24, %25 : vector<2x128xf32>
    %27 = vector.extract_strided_slice %26 {offsets = [0, 0], sizes = [2, 32], strides = [1, 1]} : vector<2x128xf32> to vector<2x32xf32>
    %28 = vector.extract_strided_slice %26 {offsets = [0, 32], sizes = [2, 32], strides = [1, 1]} : vector<2x128xf32> to vector<2x32xf32>
    %29 = vector.extract_strided_slice %26 {offsets = [0, 96], sizes = [2, 32], strides = [1, 1]} : vector<2x128xf32> to vector<2x32xf32>
    %30 = vector.extract_strided_slice %19 {offsets = [0, 64], sizes = [2, 32], strides = [1, 1]} : vector<2x128xf32> to vector<2x32xf32>
    %31 = math.tanh %30 : vector<2x32xf32>
    %32 = arith.mulf %28, %10 : vector<2x32xf32>
    %33 = arith.mulf %27, %31 : vector<2x32xf32>
    %34 = arith.addf %32, %33 : vector<2x32xf32>
    %35 = math.tanh %34 : vector<2x32xf32>
    %36 = arith.mulf %29, %35 : vector<2x32xf32>
    %cst_27 = arith.constant dense<0.000000e+00> : vector<2x128xf32>
    %37 = tpu.matmul %36, %6, %cst_27 {dimension_numbers = #tpu.dot_dimension_numbers<[1], [0], [0], [1], [0, 0, 1, 1], [], []>} : vector<2x32xf32>, vector<32x128xf32>, vector<2x128xf32> -> vector<2x128xf32>
    %cst_28 = arith.constant dense<0.000000e+00> : vector<2x128xf32>
    %38 = tpu.matmul %11, %7, %cst_28 {dimension_numbers = #tpu.dot_dimension_numbers<[1], [0], [0], [1], [0, 0, 1, 1], [], []>} : vector<2x32xf32>, vector<32x128xf32>, vector<2x128xf32> -> vector<2x128xf32>
    %39 = arith.addf %37, %38 : vector<2x128xf32>
    %40 = vector.broadcast %8 : vector<1x128xf32> to vector<2x128xf32>
    %41 = arith.addf %39, %40 : vector<2x128xf32>
    %cst_29 = arith.constant 5.000000e-01 : f32
    %42 = vector.broadcast %cst_29 : f32 to vector<2x128xf32>
    %43 = arith.mulf %42, %41 : vector<2x128xf32>
    %44 = math.tanh %43 : vector<2x128xf32>
    %cst_30 = arith.constant 5.000000e-01 : f32
    %45 = vector.broadcast %cst_30 : f32 to vector<2x128xf32>
    %46 = arith.mulf %45, %44 : vector<2x128xf32>
    %cst_31 = arith.constant 5.000000e-01 : f32
    %47 = vector.broadcast %cst_31 : f32 to vector<2x128xf32>
    %48 = arith.addf %46, %47 : vector<2x128xf32>
    %49 = vector.extract_strided_slice %48 {offsets = [0, 0], sizes = [2, 32], strides = [1, 1]} : vector<2x128xf32> to vector<2x32xf32>
    %50 = vector.extract_strided_slice %48 {offsets = [0, 32], sizes = [2, 32], strides = [1, 1]} : vector<2x128xf32> to vector<2x32xf32>
    %51 = vector.extract_strided_slice %48 {offsets = [0, 96], sizes = [2, 32], strides = [1, 1]} : vector<2x128xf32> to vector<2x32xf32>
    %52 = vector.extract_strided_slice %41 {offsets = [0, 64], sizes = [2, 32], strides = [1, 1]} : vector<2x128xf32> to vector<2x32xf32>
    %53 = math.tanh %52 : vector<2x32xf32>
    %54 = arith.mulf %50, %12 : vector<2x32xf32>
    %55 = arith.mulf %49, %53 : vector<2x32xf32>
    %56 = arith.addf %54, %55 : vector<2x32xf32>
    %57 = math.tanh %56 : vector<2x32xf32>
    %58 = arith.mulf %51, %57 : vector<2x32xf32>
    %59 = vector.extract_strided_slice %58 {offsets = [0, 0], sizes = [2, 9], strides = [1, 1]} : vector<2x32xf32> to vector<2x9xf32>
    %c0_32 = arith.constant 0 : index
    %c0_33 = arith.constant 0 : index
    %c0_34 = arith.constant 0 : index
    %60 = vector.load %arg9[%c0_32, %c0_33, %c0_34] : memref<2x8x9xf32, #tpu.memory_space<vmem>>, vector<2x1x9xf32>
    %61 = vector.shape_cast %60 : vector<2x1x9xf32> to vector<2x9xf32>
    %62 = vector.shape_cast %59 : vector<2x9xf32> to vector<2x1x9xf32>
    tpu.vector_store %arg9[%c0_32, %c0_33, %c0_34], %62 {strides = array<i32>} : memref<2x8x9xf32, #tpu.memory_space<vmem>>, vector<2x1x9xf32>,
    %c0_35 = arith.constant 0 : index
    %c1 = arith.constant 1 : index
    %c0_36 = arith.constant 0 : index
    %63 = vector.load %arg2[%c0_35, %c1, %c0_36] : memref<2x8x32xf32, #tpu.memory_space<vmem>>, vector<2x1x32xf32>
    %64 = vector.shape_cast %63 : vector<2x1x32xf32> to vector<2x32xf32>
    %cst_37 = arith.constant dense<0.000000e+00> : vector<2x128xf32>
    %65 = tpu.matmul %64, %3, %cst_37 {dimension_numbers = #tpu.dot_dimension_numbers<[1], [0], [0], [1], [0, 0, 1, 1], [], []>} : vector<2x32xf32>, vector<32x128xf32>, vector<2x128xf32> -> vector<2x128xf32>
    %cst_38 = arith.constant dense<0.000000e+00> : vector<2x128xf32>
    %66 = tpu.matmul %36, %4, %cst_38 {dimension_numbers = #tpu.dot_dimension_numbers<[1], [0], [0], [1], [0, 0, 1, 1], [], []>} : vector<2x32xf32>, vector<32x128xf32>, vector<2x128xf32> -> vector<2x128xf32>
    %67 = arith.addf %65, %66 : vector<2x128xf32>
    %68 = vector.broadcast %5 : vector<1x128xf32> to vector<2x128xf32>
    %69 = arith.addf %67, %68 : vector<2x128xf32>
    %cst_39 = arith.constant 5.000000e-01 : f32
    %70 = vector.broadcast %cst_39 : f32 to vector<2x128xf32>
    %71 = arith.mulf %70, %69 : vector<2x128xf32>
    %72 = math.tanh %71 : vector<2x128xf32>
    %cst_40 = arith.constant 5.000000e-01 : f32
    %73 = vector.broadcast %cst_40 : f32 to vector<2x128xf32>
    %74 = arith.mulf %73, %72 : vector<2x128xf32>
    %cst_41 = arith.constant 5.000000e-01 : f32
    %75 = vector.broadcast %cst_41 : f32 to vector<2x128xf32>
    %76 = arith.addf %74, %75 : vector<2x128xf32>
    %77 = vector.extract_strided_slice %76 {offsets = [0, 0], sizes = [2, 32], strides = [1, 1]} : vector<2x128xf32> to vector<2x32xf32>
    %78 = vector.extract_strided_slice %76 {offsets = [0, 32], sizes = [2, 32], strides = [1, 1]} : vector<2x128xf32> to vector<2x32xf32>
    %79 = vector.extract_strided_slice %76 {offsets = [0, 96], sizes = [2, 32], strides = [1, 1]} : vector<2x128xf32> to vector<2x32xf32>
    %80 = vector.extract_strided_slice %69 {offsets = [0, 64], sizes = [2, 32], strides = [1, 1]} : vector<2x128xf32> to vector<2x32xf32>
    %81 = math.tanh %80 : vector<2x32xf32>
    %82 = arith.mulf %78, %34 : vector<2x32xf32>
    %83 = arith.mulf %77, %81 : vector<2x32xf32>
    %84 = arith.addf %82, %83 : vector<2x32xf32>
    %85 = math.tanh %84 : vector<2x32xf32>
    %86 = arith.mulf %79, %85 : vector<2x32xf32>
    %cst_42 = arith.constant dense<0.000000e+00> : vector<2x128xf32>
    %87 = tpu.matmul %86, %6, %cst_42 {dimension_numbers = #tpu.dot_dimension_numbers<[1], [0], [0], [1], [0, 0, 1, 1], [], []>} : vector<2x32xf32>, vector<32x128xf32>, vector<2x128xf32> -> vector<2x128xf32>
    %cst_43 = arith.constant dense<0.000000e+00> : vector<2x128xf32>
    %88 = tpu.matmul %58, %7, %cst_43 {dimension_numbers = #tpu.dot_dimension_numbers<[1], [0], [0], [1], [0, 0, 1, 1], [], []>} : vector<2x32xf32>, vector<32x128xf32>, vector<2x128xf32> -> vector<2x128xf32>
    %89 = arith.addf %87, %88 : vector<2x128xf32>
    %90 = vector.broadcast %8 : vector<1x128xf32> to vector<2x128xf32>
    %91 = arith.addf %89, %90 : vector<2x128xf32>
    %cst_44 = arith.constant 5.000000e-01 : f32
    %92 = vector.broadcast %cst_44 : f32 to vector<2x128xf32>
    %93 = arith.mulf %92, %91 : vector<2x128xf32>
    %94 = math.tanh %93 : vector<2x128xf32>
    %cst_45 = arith.constant 5.000000e-01 : f32
    %95 = vector.broadcast %cst_45 : f32 to vector<2x128xf32>
    %96 = arith.mulf %95, %94 : vector<2x128xf32>
    %cst_46 = arith.constant 5.000000e-01 : f32
    %97 = vector.broadcast %cst_46 : f32 to vector<2x128xf32>
    %98 = arith.addf %96, %97 : vector<2x128xf32>
    %99 = vector.extract_strided_slice %98 {offsets = [0, 0], sizes = [2, 32], strides = [1, 1]} : vector<2x128xf32> to vector<2x32xf32>
    %100 = vector.extract_strided_slice %98 {offsets = [0, 32], sizes = [2, 32], strides = [1, 1]} : vector<2x128xf32> to vector<2x32xf32>
    %101 = vector.extract_strided_slice %98 {offsets = [0, 96], sizes = [2, 32], strides = [1, 1]} : vector<2x128xf32> to vector<2x32xf32>
    %102 = vector.extract_strided_slice %91 {offsets = [0, 64], sizes = [2, 32], strides = [1, 1]} : vector<2x128xf32> to vector<2x32xf32>
    %103 = math.tanh %102 : vector<2x32xf32>
    %104 = arith.mulf %100, %56 : vector<2x32xf32>
    %105 = arith.mulf %99, %103 : vector<2x32xf32>
    %106 = arith.addf %104, %105 : vector<2x32xf32>
    %107 = math.tanh %106 : vector<2x32xf32>
    %108 = arith.mulf %101, %107 : vector<2x32xf32>
    %109 = vector.extract_strided_slice %108 {offsets = [0, 0], sizes = [2, 9], strides = [1, 1]} : vector<2x32xf32> to vector<2x9xf32>
    %c0_47 = arith.constant 0 : index
    %c1_48 = arith.constant 1 : index
    %c0_49 = arith.constant 0 : index
    %110 = vector.load %arg9[%c0_47, %c1_48, %c0_49] : memref<2x8x9xf32, #tpu.memory_space<vmem>>, vector<2x1x9xf32>
    %111 = vector.shape_cast %110 : vector<2x1x9xf32> to vector<2x9xf32>
    %112 = vector.shape_cast %109 : vector<2x9xf32> to vector<2x1x9xf32>
    tpu.vector_store %arg9[%c0_47, %c1_48, %c0_49], %112 {strides = array<i32>} : memref<2x8x9xf32, #tpu.memory_space<vmem>>, vector<2x1x9xf32>,
    %c0_50 = arith.constant 0 : index
    %c2 = arith.constant 2 : index
    %c0_51 = arith.constant 0 : index
    %113 = vector.load %arg2[%c0_50, %c2, %c0_51] : memref<2x8x32xf32, #tpu.memory_space<vmem>>, vector<2x1x32xf32>
    %114 = vector.shape_cast %113 : vector<2x1x32xf32> to vector<2x32xf32>
    %cst_52 = arith.constant dense<0.000000e+00> : vector<2x128xf32>
    %115 = tpu.matmul %114, %3, %cst_52 {dimension_numbers = #tpu.dot_dimension_numbers<[1], [0], [0], [1], [0, 0, 1, 1], [], []>} : vector<2x32xf32>, vector<32x128xf32>, vector<2x128xf32> -> vector<2x128xf32>
    %cst_53 = arith.constant dense<0.000000e+00> : vector<2x128xf32>
    %116 = tpu.matmul %86, %4, %cst_53 {dimension_numbers = #tpu.dot_dimension_numbers<[1], [0], [0], [1], [0, 0, 1, 1], [], []>} : vector<2x32xf32>, vector<32x128xf32>, vector<2x128xf32> -> vector<2x128xf32>
    %117 = arith.addf %115, %116 : vector<2x128xf32>
    %118 = vector.broadcast %5 : vector<1x128xf32> to vector<2x128xf32>
    %119 = arith.addf %117, %118 : vector<2x128xf32>
    %cst_54 = arith.constant 5.000000e-01 : f32
    %120 = vector.broadcast %cst_54 : f32 to vector<2x128xf32>
    %121 = arith.mulf %120, %119 : vector<2x128xf32>
    %122 = math.tanh %121 : vector<2x128xf32>
    %cst_55 = arith.constant 5.000000e-01 : f32
    %123 = vector.broadcast %cst_55 : f32 to vector<2x128xf32>
    %124 = arith.mulf %123, %122 : vector<2x128xf32>
    %cst_56 = arith.constant 5.000000e-01 : f32
    %125 = vector.broadcast %cst_56 : f32 to vector<2x128xf32>
    %126 = arith.addf %124, %125 : vector<2x128xf32>
    %127 = vector.extract_strided_slice %126 {offsets = [0, 0], sizes = [2, 32], strides = [1, 1]} : vector<2x128xf32> to vector<2x32xf32>
    %128 = vector.extract_strided_slice %126 {offsets = [0, 32], sizes = [2, 32], strides = [1, 1]} : vector<2x128xf32> to vector<2x32xf32>
    %129 = vector.extract_strided_slice %126 {offsets = [0, 96], sizes = [2, 32], strides = [1, 1]} : vector<2x128xf32> to vector<2x32xf32>
    %130 = vector.extract_strided_slice %119 {offsets = [0, 64], sizes = [2, 32], strides = [1, 1]} : vector<2x128xf32> to vector<2x32xf32>
    %131 = math.tanh %130 : vector<2x32xf32>
    %132 = arith.mulf %128, %84 : vector<2x32xf32>
    %133 = arith.mulf %127, %131 : vector<2x32xf32>
    %134 = arith.addf %132, %133 : vector<2x32xf32>
    %135 = math.tanh %134 : vector<2x32xf32>
    %136 = arith.mulf %129, %135 : vector<2x32xf32>
    %cst_57 = arith.constant dense<0.000000e+00> : vector<2x128xf32>
    %137 = tpu.matmul %136, %6, %cst_57 {dimension_numbers = #tpu.dot_dimension_numbers<[1], [0], [0], [1], [0, 0, 1, 1], [], []>} : vector<2x32xf32>, vector<32x128xf32>, vector<2x128xf32> -> vector<2x128xf32>
    %cst_58 = arith.constant dense<0.000000e+00> : vector<2x128xf32>
    %138 = tpu.matmul %108, %7, %cst_58 {dimension_numbers = #tpu.dot_dimension_numbers<[1], [0], [0], [1], [0, 0, 1, 1], [], []>} : vector<2x32xf32>, vector<32x128xf32>, vector<2x128xf32> -> vector<2x128xf32>
    %139 = arith.addf %137, %138 : vector<2x128xf32>
    %140 = vector.broadcast %8 : vector<1x128xf32> to vector<2x128xf32>
    %141 = arith.addf %139, %140 : vector<2x128xf32>
    %cst_59 = arith.constant 5.000000e-01 : f32
    %142 = vector.broadcast %cst_59 : f32 to vector<2x128xf32>
    %143 = arith.mulf %142, %141 : vector<2x128xf32>
    %144 = math.tanh %143 : vector<2x128xf32>
    %cst_60 = arith.constant 5.000000e-01 : f32
    %145 = vector.broadcast %cst_60 : f32 to vector<2x128xf32>
    %146 = arith.mulf %145, %144 : vector<2x128xf32>
    %cst_61 = arith.constant 5.000000e-01 : f32
    %147 = vector.broadcast %cst_61 : f32 to vector<2x128xf32>
    %148 = arith.addf %146, %147 : vector<2x128xf32>
    %149 = vector.extract_strided_slice %148 {offsets = [0, 0], sizes = [2, 32], strides = [1, 1]} : vector<2x128xf32> to vector<2x32xf32>
    %150 = vector.extract_strided_slice %148 {offsets = [0, 32], sizes = [2, 32], strides = [1, 1]} : vector<2x128xf32> to vector<2x32xf32>
    %151 = vector.extract_strided_slice %148 {offsets = [0, 96], sizes = [2, 32], strides = [1, 1]} : vector<2x128xf32> to vector<2x32xf32>
    %152 = vector.extract_strided_slice %141 {offsets = [0, 64], sizes = [2, 32], strides = [1, 1]} : vector<2x128xf32> to vector<2x32xf32>
    %153 = math.tanh %152 : vector<2x32xf32>
    %154 = arith.mulf %150, %106 : vector<2x32xf32>
    %155 = arith.mulf %149, %153 : vector<2x32xf32>
    %156 = arith.addf %154, %155 : vector<2x32xf32>
    %157 = math.tanh %156 : vector<2x32xf32>
    %158 = arith.mulf %151, %157 : vector<2x32xf32>
    %159 = vector.extract_strided_slice %158 {offsets = [0, 0], sizes = [2, 9], strides = [1, 1]} : vector<2x32xf32> to vector<2x9xf32>
    %c0_62 = arith.constant 0 : index
    %c2_63 = arith.constant 2 : index
    %c0_64 = arith.constant 0 : index
    %160 = vector.load %arg9[%c0_62, %c2_63, %c0_64] : memref<2x8x9xf32, #tpu.memory_space<vmem>>, vector<2x1x9xf32>
    %161 = vector.shape_cast %160 : vector<2x1x9xf32> to vector<2x9xf32>
    %162 = vector.shape_cast %159 : vector<2x9xf32> to vector<2x1x9xf32>
    tpu.vector_store %arg9[%c0_62, %c2_63, %c0_64], %162 {strides = array<i32>} : memref<2x8x9xf32, #tpu.memory_space<vmem>>, vector<2x1x9xf32>,
    %c0_65 = arith.constant 0 : index
    %c3 = arith.constant 3 : index
    %c0_66 = arith.constant 0 : index
    %163 = vector.load %arg2[%c0_65, %c3, %c0_66] : memref<2x8x32xf32, #tpu.memory_space<vmem>>, vector<2x1x32xf32>
    %164 = vector.shape_cast %163 : vector<2x1x32xf32> to vector<2x32xf32>
    %cst_67 = arith.constant dense<0.000000e+00> : vector<2x128xf32>
    %165 = tpu.matmul %164, %3, %cst_67 {dimension_numbers = #tpu.dot_dimension_numbers<[1], [0], [0], [1], [0, 0, 1, 1], [], []>} : vector<2x32xf32>, vector<32x128xf32>, vector<2x128xf32> -> vector<2x128xf32>
    %cst_68 = arith.constant dense<0.000000e+00> : vector<2x128xf32>
    %166 = tpu.matmul %136, %4, %cst_68 {dimension_numbers = #tpu.dot_dimension_numbers<[1], [0], [0], [1], [0, 0, 1, 1], [], []>} : vector<2x32xf32>, vector<32x128xf32>, vector<2x128xf32> -> vector<2x128xf32>
    %167 = arith.addf %165, %166 : vector<2x128xf32>
    %168 = vector.broadcast %5 : vector<1x128xf32> to vector<2x128xf32>
    %169 = arith.addf %167, %168 : vector<2x128xf32>
    %cst_69 = arith.constant 5.000000e-01 : f32
    %170 = vector.broadcast %cst_69 : f32 to vector<2x128xf32>
    %171 = arith.mulf %170, %169 : vector<2x128xf32>
    %172 = math.tanh %171 : vector<2x128xf32>
    %cst_70 = arith.constant 5.000000e-01 : f32
    %173 = vector.broadcast %cst_70 : f32 to vector<2x128xf32>
    %174 = arith.mulf %173, %172 : vector<2x128xf32>
    %cst_71 = arith.constant 5.000000e-01 : f32
    %175 = vector.broadcast %cst_71 : f32 to vector<2x128xf32>
    %176 = arith.addf %174, %175 : vector<2x128xf32>
    %177 = vector.extract_strided_slice %176 {offsets = [0, 0], sizes = [2, 32], strides = [1, 1]} : vector<2x128xf32> to vector<2x32xf32>
    %178 = vector.extract_strided_slice %176 {offsets = [0, 32], sizes = [2, 32], strides = [1, 1]} : vector<2x128xf32> to vector<2x32xf32>
    %179 = vector.extract_strided_slice %176 {offsets = [0, 96], sizes = [2, 32], strides = [1, 1]} : vector<2x128xf32> to vector<2x32xf32>
    %180 = vector.extract_strided_slice %169 {offsets = [0, 64], sizes = [2, 32], strides = [1, 1]} : vector<2x128xf32> to vector<2x32xf32>
    %181 = math.tanh %180 : vector<2x32xf32>
    %182 = arith.mulf %178, %134 : vector<2x32xf32>
    %183 = arith.mulf %177, %181 : vector<2x32xf32>
    %184 = arith.addf %182, %183 : vector<2x32xf32>
    %185 = math.tanh %184 : vector<2x32xf32>
    %186 = arith.mulf %179, %185 : vector<2x32xf32>
    %cst_72 = arith.constant dense<0.000000e+00> : vector<2x128xf32>
    %187 = tpu.matmul %186, %6, %cst_72 {dimension_numbers = #tpu.dot_dimension_numbers<[1], [0], [0], [1], [0, 0, 1, 1], [], []>} : vector<2x32xf32>, vector<32x128xf32>, vector<2x128xf32> -> vector<2x128xf32>
    %cst_73 = arith.constant dense<0.000000e+00> : vector<2x128xf32>
    %188 = tpu.matmul %158, %7, %cst_73 {dimension_numbers = #tpu.dot_dimension_numbers<[1], [0], [0], [1], [0, 0, 1, 1], [], []>} : vector<2x32xf32>, vector<32x128xf32>, vector<2x128xf32> -> vector<2x128xf32>
    %189 = arith.addf %187, %188 : vector<2x128xf32>
    %190 = vector.broadcast %8 : vector<1x128xf32> to vector<2x128xf32>
    %191 = arith.addf %189, %190 : vector<2x128xf32>
    %cst_74 = arith.constant 5.000000e-01 : f32
    %192 = vector.broadcast %cst_74 : f32 to vector<2x128xf32>
    %193 = arith.mulf %192, %191 : vector<2x128xf32>
    %194 = math.tanh %193 : vector<2x128xf32>
    %cst_75 = arith.constant 5.000000e-01 : f32
    %195 = vector.broadcast %cst_75 : f32 to vector<2x128xf32>
    %196 = arith.mulf %195, %194 : vector<2x128xf32>
    %cst_76 = arith.constant 5.000000e-01 : f32
    %197 = vector.broadcast %cst_76 : f32 to vector<2x128xf32>
    %198 = arith.addf %196, %197 : vector<2x128xf32>
    %199 = vector.extract_strided_slice %198 {offsets = [0, 0], sizes = [2, 32], strides = [1, 1]} : vector<2x128xf32> to vector<2x32xf32>
    %200 = vector.extract_strided_slice %198 {offsets = [0, 32], sizes = [2, 32], strides = [1, 1]} : vector<2x128xf32> to vector<2x32xf32>
    %201 = vector.extract_strided_slice %198 {offsets = [0, 96], sizes = [2, 32], strides = [1, 1]} : vector<2x128xf32> to vector<2x32xf32>
    %202 = vector.extract_strided_slice %191 {offsets = [0, 64], sizes = [2, 32], strides = [1, 1]} : vector<2x128xf32> to vector<2x32xf32>
    %203 = math.tanh %202 : vector<2x32xf32>
    %204 = arith.mulf %200, %156 : vector<2x32xf32>
    %205 = arith.mulf %199, %203 : vector<2x32xf32>
    %206 = arith.addf %204, %205 : vector<2x32xf32>
    %207 = math.tanh %206 : vector<2x32xf32>
    %208 = arith.mulf %201, %207 : vector<2x32xf32>
    %209 = vector.extract_strided_slice %208 {offsets = [0, 0], sizes = [2, 9], strides = [1, 1]} : vector<2x32xf32> to vector<2x9xf32>
    %c0_77 = arith.constant 0 : index
    %c3_78 = arith.constant 3 : index
    %c0_79 = arith.constant 0 : index
    %210 = vector.load %arg9[%c0_77, %c3_78, %c0_79] : memref<2x8x9xf32, #tpu.memory_space<vmem>>, vector<2x1x9xf32>
    %211 = vector.shape_cast %210 : vector<2x1x9xf32> to vector<2x9xf32>
    %212 = vector.shape_cast %209 : vector<2x9xf32> to vector<2x1x9xf32>
    tpu.vector_store %arg9[%c0_77, %c3_78, %c0_79], %212 {strides = array<i32>} : memref<2x8x9xf32, #tpu.memory_space<vmem>>, vector<2x1x9xf32>,
    %c0_80 = arith.constant 0 : index
    %c4 = arith.constant 4 : index
    %c0_81 = arith.constant 0 : index
    %213 = vector.load %arg2[%c0_80, %c4, %c0_81] : memref<2x8x32xf32, #tpu.memory_space<vmem>>, vector<2x1x32xf32>
    %214 = vector.shape_cast %213 : vector<2x1x32xf32> to vector<2x32xf32>
    %cst_82 = arith.constant dense<0.000000e+00> : vector<2x128xf32>
    %215 = tpu.matmul %214, %3, %cst_82 {dimension_numbers = #tpu.dot_dimension_numbers<[1], [0], [0], [1], [0, 0, 1, 1], [], []>} : vector<2x32xf32>, vector<32x128xf32>, vector<2x128xf32> -> vector<2x128xf32>
    %cst_83 = arith.constant dense<0.000000e+00> : vector<2x128xf32>
    %216 = tpu.matmul %186, %4, %cst_83 {dimension_numbers = #tpu.dot_dimension_numbers<[1], [0], [0], [1], [0, 0, 1, 1], [], []>} : vector<2x32xf32>, vector<32x128xf32>, vector<2x128xf32> -> vector<2x128xf32>
    %217 = arith.addf %215, %216 : vector<2x128xf32>
    %218 = vector.broadcast %5 : vector<1x128xf32> to vector<2x128xf32>
    %219 = arith.addf %217, %218 : vector<2x128xf32>
    %cst_84 = arith.constant 5.000000e-01 : f32
    %220 = vector.broadcast %cst_84 : f32 to vector<2x128xf32>
    %221 = arith.mulf %220, %219 : vector<2x128xf32>
    %222 = math.tanh %221 : vector<2x128xf32>
    %cst_85 = arith.constant 5.000000e-01 : f32
    %223 = vector.broadcast %cst_85 : f32 to vector<2x128xf32>
    %224 = arith.mulf %223, %222 : vector<2x128xf32>
    %cst_86 = arith.constant 5.000000e-01 : f32
    %225 = vector.broadcast %cst_86 : f32 to vector<2x128xf32>
    %226 = arith.addf %224, %225 : vector<2x128xf32>
    %227 = vector.extract_strided_slice %226 {offsets = [0, 0], sizes = [2, 32], strides = [1, 1]} : vector<2x128xf32> to vector<2x32xf32>
    %228 = vector.extract_strided_slice %226 {offsets = [0, 32], sizes = [2, 32], strides = [1, 1]} : vector<2x128xf32> to vector<2x32xf32>
    %229 = vector.extract_strided_slice %226 {offsets = [0, 96], sizes = [2, 32], strides = [1, 1]} : vector<2x128xf32> to vector<2x32xf32>
    %230 = vector.extract_strided_slice %219 {offsets = [0, 64], sizes = [2, 32], strides = [1, 1]} : vector<2x128xf32> to vector<2x32xf32>
    %231 = math.tanh %230 : vector<2x32xf32>
    %232 = arith.mulf %228, %184 : vector<2x32xf32>
    %233 = arith.mulf %227, %231 : vector<2x32xf32>
    %234 = arith.addf %232, %233 : vector<2x32xf32>
    %235 = math.tanh %234 : vector<2x32xf32>
    %236 = arith.mulf %229, %235 : vector<2x32xf32>
    %cst_87 = arith.constant dense<0.000000e+00> : vector<2x128xf32>
    %237 = tpu.matmul %236, %6, %cst_87 {dimension_numbers = #tpu.dot_dimension_numbers<[1], [0], [0], [1], [0, 0, 1, 1], [], []>} : vector<2x32xf32>, vector<32x128xf32>, vector<2x128xf32> -> vector<2x128xf32>
    %cst_88 = arith.constant dense<0.000000e+00> : vector<2x128xf32>
    %238 = tpu.matmul %208, %7, %cst_88 {dimension_numbers = #tpu.dot_dimension_numbers<[1], [0], [0], [1], [0, 0, 1, 1], [], []>} : vector<2x32xf32>, vector<32x128xf32>, vector<2x128xf32> -> vector<2x128xf32>
    %239 = arith.addf %237, %238 : vector<2x128xf32>
    %240 = vector.broadcast %8 : vector<1x128xf32> to vector<2x128xf32>
    %241 = arith.addf %239, %240 : vector<2x128xf32>
    %cst_89 = arith.constant 5.000000e-01 : f32
    %242 = vector.broadcast %cst_89 : f32 to vector<2x128xf32>
    %243 = arith.mulf %242, %241 : vector<2x128xf32>
    %244 = math.tanh %243 : vector<2x128xf32>
    %cst_90 = arith.constant 5.000000e-01 : f32
    %245 = vector.broadcast %cst_90 : f32 to vector<2x128xf32>
    %246 = arith.mulf %245, %244 : vector<2x128xf32>
    %cst_91 = arith.constant 5.000000e-01 : f32
    %247 = vector.broadcast %cst_91 : f32 to vector<2x128xf32>
    %248 = arith.addf %246, %247 : vector<2x128xf32>
    %249 = vector.extract_strided_slice %248 {offsets = [0, 0], sizes = [2, 32], strides = [1, 1]} : vector<2x128xf32> to vector<2x32xf32>
    %250 = vector.extract_strided_slice %248 {offsets = [0, 32], sizes = [2, 32], strides = [1, 1]} : vector<2x128xf32> to vector<2x32xf32>
    %251 = vector.extract_strided_slice %248 {offsets = [0, 96], sizes = [2, 32], strides = [1, 1]} : vector<2x128xf32> to vector<2x32xf32>
    %252 = vector.extract_strided_slice %241 {offsets = [0, 64], sizes = [2, 32], strides = [1, 1]} : vector<2x128xf32> to vector<2x32xf32>
    %253 = math.tanh %252 : vector<2x32xf32>
    %254 = arith.mulf %250, %206 : vector<2x32xf32>
    %255 = arith.mulf %249, %253 : vector<2x32xf32>
    %256 = arith.addf %254, %255 : vector<2x32xf32>
    %257 = math.tanh %256 : vector<2x32xf32>
    %258 = arith.mulf %251, %257 : vector<2x32xf32>
    %259 = vector.extract_strided_slice %258 {offsets = [0, 0], sizes = [2, 9], strides = [1, 1]} : vector<2x32xf32> to vector<2x9xf32>
    %c0_92 = arith.constant 0 : index
    %c4_93 = arith.constant 4 : index
    %c0_94 = arith.constant 0 : index
    %260 = vector.load %arg9[%c0_92, %c4_93, %c0_94] : memref<2x8x9xf32, #tpu.memory_space<vmem>>, vector<2x1x9xf32>
    %261 = vector.shape_cast %260 : vector<2x1x9xf32> to vector<2x9xf32>
    %262 = vector.shape_cast %259 : vector<2x9xf32> to vector<2x1x9xf32>
    tpu.vector_store %arg9[%c0_92, %c4_93, %c0_94], %262 {strides = array<i32>} : memref<2x8x9xf32, #tpu.memory_space<vmem>>, vector<2x1x9xf32>,
    %c0_95 = arith.constant 0 : index
    %c5 = arith.constant 5 : index
    %c0_96 = arith.constant 0 : index
    %263 = vector.load %arg2[%c0_95, %c5, %c0_96] : memref<2x8x32xf32, #tpu.memory_space<vmem>>, vector<2x1x32xf32>
    %264 = vector.shape_cast %263 : vector<2x1x32xf32> to vector<2x32xf32>
    %cst_97 = arith.constant dense<0.000000e+00> : vector<2x128xf32>
    %265 = tpu.matmul %264, %3, %cst_97 {dimension_numbers = #tpu.dot_dimension_numbers<[1], [0], [0], [1], [0, 0, 1, 1], [], []>} : vector<2x32xf32>, vector<32x128xf32>, vector<2x128xf32> -> vector<2x128xf32>
    %cst_98 = arith.constant dense<0.000000e+00> : vector<2x128xf32>
    %266 = tpu.matmul %236, %4, %cst_98 {dimension_numbers = #tpu.dot_dimension_numbers<[1], [0], [0], [1], [0, 0, 1, 1], [], []>} : vector<2x32xf32>, vector<32x128xf32>, vector<2x128xf32> -> vector<2x128xf32>
    %267 = arith.addf %265, %266 : vector<2x128xf32>
    %268 = vector.broadcast %5 : vector<1x128xf32> to vector<2x128xf32>
    %269 = arith.addf %267, %268 : vector<2x128xf32>
    %cst_99 = arith.constant 5.000000e-01 : f32
    %270 = vector.broadcast %cst_99 : f32 to vector<2x128xf32>
    %271 = arith.mulf %270, %269 : vector<2x128xf32>
    %272 = math.tanh %271 : vector<2x128xf32>
    %cst_100 = arith.constant 5.000000e-01 : f32
    %273 = vector.broadcast %cst_100 : f32 to vector<2x128xf32>
    %274 = arith.mulf %273, %272 : vector<2x128xf32>
    %cst_101 = arith.constant 5.000000e-01 : f32
    %275 = vector.broadcast %cst_101 : f32 to vector<2x128xf32>
    %276 = arith.addf %274, %275 : vector<2x128xf32>
    %277 = vector.extract_strided_slice %276 {offsets = [0, 0], sizes = [2, 32], strides = [1, 1]} : vector<2x128xf32> to vector<2x32xf32>
    %278 = vector.extract_strided_slice %276 {offsets = [0, 32], sizes = [2, 32], strides = [1, 1]} : vector<2x128xf32> to vector<2x32xf32>
    %279 = vector.extract_strided_slice %276 {offsets = [0, 96], sizes = [2, 32], strides = [1, 1]} : vector<2x128xf32> to vector<2x32xf32>
    %280 = vector.extract_strided_slice %269 {offsets = [0, 64], sizes = [2, 32], strides = [1, 1]} : vector<2x128xf32> to vector<2x32xf32>
    %281 = math.tanh %280 : vector<2x32xf32>
    %282 = arith.mulf %278, %234 : vector<2x32xf32>
    %283 = arith.mulf %277, %281 : vector<2x32xf32>
    %284 = arith.addf %282, %283 : vector<2x32xf32>
    %285 = math.tanh %284 : vector<2x32xf32>
    %286 = arith.mulf %279, %285 : vector<2x32xf32>
    %cst_102 = arith.constant dense<0.000000e+00> : vector<2x128xf32>
    %287 = tpu.matmul %286, %6, %cst_102 {dimension_numbers = #tpu.dot_dimension_numbers<[1], [0], [0], [1], [0, 0, 1, 1], [], []>} : vector<2x32xf32>, vector<32x128xf32>, vector<2x128xf32> -> vector<2x128xf32>
    %cst_103 = arith.constant dense<0.000000e+00> : vector<2x128xf32>
    %288 = tpu.matmul %258, %7, %cst_103 {dimension_numbers = #tpu.dot_dimension_numbers<[1], [0], [0], [1], [0, 0, 1, 1], [], []>} : vector<2x32xf32>, vector<32x128xf32>, vector<2x128xf32> -> vector<2x128xf32>
    %289 = arith.addf %287, %288 : vector<2x128xf32>
    %290 = vector.broadcast %8 : vector<1x128xf32> to vector<2x128xf32>
    %291 = arith.addf %289, %290 : vector<2x128xf32>
    %cst_104 = arith.constant 5.000000e-01 : f32
    %292 = vector.broadcast %cst_104 : f32 to vector<2x128xf32>
    %293 = arith.mulf %292, %291 : vector<2x128xf32>
    %294 = math.tanh %293 : vector<2x128xf32>
    %cst_105 = arith.constant 5.000000e-01 : f32
    %295 = vector.broadcast %cst_105 : f32 to vector<2x128xf32>
    %296 = arith.mulf %295, %294 : vector<2x128xf32>
    %cst_106 = arith.constant 5.000000e-01 : f32
    %297 = vector.broadcast %cst_106 : f32 to vector<2x128xf32>
    %298 = arith.addf %296, %297 : vector<2x128xf32>
    %299 = vector.extract_strided_slice %298 {offsets = [0, 0], sizes = [2, 32], strides = [1, 1]} : vector<2x128xf32> to vector<2x32xf32>
    %300 = vector.extract_strided_slice %298 {offsets = [0, 32], sizes = [2, 32], strides = [1, 1]} : vector<2x128xf32> to vector<2x32xf32>
    %301 = vector.extract_strided_slice %298 {offsets = [0, 96], sizes = [2, 32], strides = [1, 1]} : vector<2x128xf32> to vector<2x32xf32>
    %302 = vector.extract_strided_slice %291 {offsets = [0, 64], sizes = [2, 32], strides = [1, 1]} : vector<2x128xf32> to vector<2x32xf32>
    %303 = math.tanh %302 : vector<2x32xf32>
    %304 = arith.mulf %300, %256 : vector<2x32xf32>
    %305 = arith.mulf %299, %303 : vector<2x32xf32>
    %306 = arith.addf %304, %305 : vector<2x32xf32>
    %307 = math.tanh %306 : vector<2x32xf32>
    %308 = arith.mulf %301, %307 : vector<2x32xf32>
    %309 = vector.extract_strided_slice %308 {offsets = [0, 0], sizes = [2, 9], strides = [1, 1]} : vector<2x32xf32> to vector<2x9xf32>
    %c0_107 = arith.constant 0 : index
    %c5_108 = arith.constant 5 : index
    %c0_109 = arith.constant 0 : index
    %310 = vector.load %arg9[%c0_107, %c5_108, %c0_109] : memref<2x8x9xf32, #tpu.memory_space<vmem>>, vector<2x1x9xf32>
    %311 = vector.shape_cast %310 : vector<2x1x9xf32> to vector<2x9xf32>
    %312 = vector.shape_cast %309 : vector<2x9xf32> to vector<2x1x9xf32>
    tpu.vector_store %arg9[%c0_107, %c5_108, %c0_109], %312 {strides = array<i32>} : memref<2x8x9xf32, #tpu.memory_space<vmem>>, vector<2x1x9xf32>,
    %c0_110 = arith.constant 0 : index
    %c6 = arith.constant 6 : index
    %c0_111 = arith.constant 0 : index
    %313 = vector.load %arg2[%c0_110, %c6, %c0_111] : memref<2x8x32xf32, #tpu.memory_space<vmem>>, vector<2x1x32xf32>
    %314 = vector.shape_cast %313 : vector<2x1x32xf32> to vector<2x32xf32>
    %cst_112 = arith.constant dense<0.000000e+00> : vector<2x128xf32>
    %315 = tpu.matmul %314, %3, %cst_112 {dimension_numbers = #tpu.dot_dimension_numbers<[1], [0], [0], [1], [0, 0, 1, 1], [], []>} : vector<2x32xf32>, vector<32x128xf32>, vector<2x128xf32> -> vector<2x128xf32>
    %cst_113 = arith.constant dense<0.000000e+00> : vector<2x128xf32>
    %316 = tpu.matmul %286, %4, %cst_113 {dimension_numbers = #tpu.dot_dimension_numbers<[1], [0], [0], [1], [0, 0, 1, 1], [], []>} : vector<2x32xf32>, vector<32x128xf32>, vector<2x128xf32> -> vector<2x128xf32>
    %317 = arith.addf %315, %316 : vector<2x128xf32>
    %318 = vector.broadcast %5 : vector<1x128xf32> to vector<2x128xf32>
    %319 = arith.addf %317, %318 : vector<2x128xf32>
    %cst_114 = arith.constant 5.000000e-01 : f32
    %320 = vector.broadcast %cst_114 : f32 to vector<2x128xf32>
    %321 = arith.mulf %320, %319 : vector<2x128xf32>
    %322 = math.tanh %321 : vector<2x128xf32>
    %cst_115 = arith.constant 5.000000e-01 : f32
    %323 = vector.broadcast %cst_115 : f32 to vector<2x128xf32>
    %324 = arith.mulf %323, %322 : vector<2x128xf32>
    %cst_116 = arith.constant 5.000000e-01 : f32
    %325 = vector.broadcast %cst_116 : f32 to vector<2x128xf32>
    %326 = arith.addf %324, %325 : vector<2x128xf32>
    %327 = vector.extract_strided_slice %326 {offsets = [0, 0], sizes = [2, 32], strides = [1, 1]} : vector<2x128xf32> to vector<2x32xf32>
    %328 = vector.extract_strided_slice %326 {offsets = [0, 32], sizes = [2, 32], strides = [1, 1]} : vector<2x128xf32> to vector<2x32xf32>
    %329 = vector.extract_strided_slice %326 {offsets = [0, 96], sizes = [2, 32], strides = [1, 1]} : vector<2x128xf32> to vector<2x32xf32>
    %330 = vector.extract_strided_slice %319 {offsets = [0, 64], sizes = [2, 32], strides = [1, 1]} : vector<2x128xf32> to vector<2x32xf32>
    %331 = math.tanh %330 : vector<2x32xf32>
    %332 = arith.mulf %328, %284 : vector<2x32xf32>
    %333 = arith.mulf %327, %331 : vector<2x32xf32>
    %334 = arith.addf %332, %333 : vector<2x32xf32>
    %335 = math.tanh %334 : vector<2x32xf32>
    %336 = arith.mulf %329, %335 : vector<2x32xf32>
    %cst_117 = arith.constant dense<0.000000e+00> : vector<2x128xf32>
    %337 = tpu.matmul %336, %6, %cst_117 {dimension_numbers = #tpu.dot_dimension_numbers<[1], [0], [0], [1], [0, 0, 1, 1], [], []>} : vector<2x32xf32>, vector<32x128xf32>, vector<2x128xf32> -> vector<2x128xf32>
    %cst_118 = arith.constant dense<0.000000e+00> : vector<2x128xf32>
    %338 = tpu.matmul %308, %7, %cst_118 {dimension_numbers = #tpu.dot_dimension_numbers<[1], [0], [0], [1], [0, 0, 1, 1], [], []>} : vector<2x32xf32>, vector<32x128xf32>, vector<2x128xf32> -> vector<2x128xf32>
    %339 = arith.addf %337, %338 : vector<2x128xf32>
    %340 = vector.broadcast %8 : vector<1x128xf32> to vector<2x128xf32>
    %341 = arith.addf %339, %340 : vector<2x128xf32>
    %cst_119 = arith.constant 5.000000e-01 : f32
    %342 = vector.broadcast %cst_119 : f32 to vector<2x128xf32>
    %343 = arith.mulf %342, %341 : vector<2x128xf32>
    %344 = math.tanh %343 : vector<2x128xf32>
    %cst_120 = arith.constant 5.000000e-01 : f32
    %345 = vector.broadcast %cst_120 : f32 to vector<2x128xf32>
    %346 = arith.mulf %345, %344 : vector<2x128xf32>
    %cst_121 = arith.constant 5.000000e-01 : f32
    %347 = vector.broadcast %cst_121 : f32 to vector<2x128xf32>
    %348 = arith.addf %346, %347 : vector<2x128xf32>
    %349 = vector.extract_strided_slice %348 {offsets = [0, 0], sizes = [2, 32], strides = [1, 1]} : vector<2x128xf32> to vector<2x32xf32>
    %350 = vector.extract_strided_slice %348 {offsets = [0, 32], sizes = [2, 32], strides = [1, 1]} : vector<2x128xf32> to vector<2x32xf32>
    %351 = vector.extract_strided_slice %348 {offsets = [0, 96], sizes = [2, 32], strides = [1, 1]} : vector<2x128xf32> to vector<2x32xf32>
    %352 = vector.extract_strided_slice %341 {offsets = [0, 64], sizes = [2, 32], strides = [1, 1]} : vector<2x128xf32> to vector<2x32xf32>
    %353 = math.tanh %352 : vector<2x32xf32>
    %354 = arith.mulf %350, %306 : vector<2x32xf32>
    %355 = arith.mulf %349, %353 : vector<2x32xf32>
    %356 = arith.addf %354, %355 : vector<2x32xf32>
    %357 = math.tanh %356 : vector<2x32xf32>
    %358 = arith.mulf %351, %357 : vector<2x32xf32>
    %359 = vector.extract_strided_slice %358 {offsets = [0, 0], sizes = [2, 9], strides = [1, 1]} : vector<2x32xf32> to vector<2x9xf32>
    %c0_122 = arith.constant 0 : index
    %c6_123 = arith.constant 6 : index
    %c0_124 = arith.constant 0 : index
    %360 = vector.load %arg9[%c0_122, %c6_123, %c0_124] : memref<2x8x9xf32, #tpu.memory_space<vmem>>, vector<2x1x9xf32>
    %361 = vector.shape_cast %360 : vector<2x1x9xf32> to vector<2x9xf32>
    %362 = vector.shape_cast %359 : vector<2x9xf32> to vector<2x1x9xf32>
    tpu.vector_store %arg9[%c0_122, %c6_123, %c0_124], %362 {strides = array<i32>} : memref<2x8x9xf32, #tpu.memory_space<vmem>>, vector<2x1x9xf32>,
    %c0_125 = arith.constant 0 : index
    %c7 = arith.constant 7 : index
    %c0_126 = arith.constant 0 : index
    %363 = vector.load %arg2[%c0_125, %c7, %c0_126] : memref<2x8x32xf32, #tpu.memory_space<vmem>>, vector<2x1x32xf32>
    %364 = vector.shape_cast %363 : vector<2x1x32xf32> to vector<2x32xf32>
    %cst_127 = arith.constant dense<0.000000e+00> : vector<2x128xf32>
    %365 = tpu.matmul %364, %3, %cst_127 {dimension_numbers = #tpu.dot_dimension_numbers<[1], [0], [0], [1], [0, 0, 1, 1], [], []>} : vector<2x32xf32>, vector<32x128xf32>, vector<2x128xf32> -> vector<2x128xf32>
    %cst_128 = arith.constant dense<0.000000e+00> : vector<2x128xf32>
    %366 = tpu.matmul %336, %4, %cst_128 {dimension_numbers = #tpu.dot_dimension_numbers<[1], [0], [0], [1], [0, 0, 1, 1], [], []>} : vector<2x32xf32>, vector<32x128xf32>, vector<2x128xf32> -> vector<2x128xf32>
    %367 = arith.addf %365, %366 : vector<2x128xf32>
    %368 = vector.broadcast %5 : vector<1x128xf32> to vector<2x128xf32>
    %369 = arith.addf %367, %368 : vector<2x128xf32>
    %cst_129 = arith.constant 5.000000e-01 : f32
    %370 = vector.broadcast %cst_129 : f32 to vector<2x128xf32>
    %371 = arith.mulf %370, %369 : vector<2x128xf32>
    %372 = math.tanh %371 : vector<2x128xf32>
    %cst_130 = arith.constant 5.000000e-01 : f32
    %373 = vector.broadcast %cst_130 : f32 to vector<2x128xf32>
    %374 = arith.mulf %373, %372 : vector<2x128xf32>
    %cst_131 = arith.constant 5.000000e-01 : f32
    %375 = vector.broadcast %cst_131 : f32 to vector<2x128xf32>
    %376 = arith.addf %374, %375 : vector<2x128xf32>
    %377 = vector.extract_strided_slice %376 {offsets = [0, 0], sizes = [2, 32], strides = [1, 1]} : vector<2x128xf32> to vector<2x32xf32>
    %378 = vector.extract_strided_slice %376 {offsets = [0, 32], sizes = [2, 32], strides = [1, 1]} : vector<2x128xf32> to vector<2x32xf32>
    %379 = vector.extract_strided_slice %376 {offsets = [0, 96], sizes = [2, 32], strides = [1, 1]} : vector<2x128xf32> to vector<2x32xf32>
    %380 = vector.extract_strided_slice %369 {offsets = [0, 64], sizes = [2, 32], strides = [1, 1]} : vector<2x128xf32> to vector<2x32xf32>
    %381 = math.tanh %380 : vector<2x32xf32>
    %382 = arith.mulf %378, %334 : vector<2x32xf32>
    %383 = arith.mulf %377, %381 : vector<2x32xf32>
    %384 = arith.addf %382, %383 : vector<2x32xf32>
    %385 = math.tanh %384 : vector<2x32xf32>
    %386 = arith.mulf %379, %385 : vector<2x32xf32>
    %cst_132 = arith.constant dense<0.000000e+00> : vector<2x128xf32>
    %387 = tpu.matmul %386, %6, %cst_132 {dimension_numbers = #tpu.dot_dimension_numbers<[1], [0], [0], [1], [0, 0, 1, 1], [], []>} : vector<2x32xf32>, vector<32x128xf32>, vector<2x128xf32> -> vector<2x128xf32>
    %cst_133 = arith.constant dense<0.000000e+00> : vector<2x128xf32>
    %388 = tpu.matmul %358, %7, %cst_133 {dimension_numbers = #tpu.dot_dimension_numbers<[1], [0], [0], [1], [0, 0, 1, 1], [], []>} : vector<2x32xf32>, vector<32x128xf32>, vector<2x128xf32> -> vector<2x128xf32>
    %389 = arith.addf %387, %388 : vector<2x128xf32>
    %390 = vector.broadcast %8 : vector<1x128xf32> to vector<2x128xf32>
    %391 = arith.addf %389, %390 : vector<2x128xf32>
    %cst_134 = arith.constant 5.000000e-01 : f32
    %392 = vector.broadcast %cst_134 : f32 to vector<2x128xf32>
    %393 = arith.mulf %392, %391 : vector<2x128xf32>
    %394 = math.tanh %393 : vector<2x128xf32>
    %cst_135 = arith.constant 5.000000e-01 : f32
    %395 = vector.broadcast %cst_135 : f32 to vector<2x128xf32>
    %396 = arith.mulf %395, %394 : vector<2x128xf32>
    %cst_136 = arith.constant 5.000000e-01 : f32
    %397 = vector.broadcast %cst_136 : f32 to vector<2x128xf32>
    %398 = arith.addf %396, %397 : vector<2x128xf32>
    %399 = vector.extract_strided_slice %398 {offsets = [0, 0], sizes = [2, 32], strides = [1, 1]} : vector<2x128xf32> to vector<2x32xf32>
    %400 = vector.extract_strided_slice %398 {offsets = [0, 32], sizes = [2, 32], strides = [1, 1]} : vector<2x128xf32> to vector<2x32xf32>
    %401 = vector.extract_strided_slice %398 {offsets = [0, 96], sizes = [2, 32], strides = [1, 1]} : vector<2x128xf32> to vector<2x32xf32>
    %402 = vector.extract_strided_slice %391 {offsets = [0, 64], sizes = [2, 32], strides = [1, 1]} : vector<2x128xf32> to vector<2x32xf32>
    %403 = math.tanh %402 : vector<2x32xf32>
    %404 = arith.mulf %400, %356 : vector<2x32xf32>
    %405 = arith.mulf %399, %403 : vector<2x32xf32>
    %406 = arith.addf %404, %405 : vector<2x32xf32>
    %407 = math.tanh %406 : vector<2x32xf32>
    %408 = arith.mulf %401, %407 : vector<2x32xf32>
    %409 = vector.extract_strided_slice %408 {offsets = [0, 0], sizes = [2, 9], strides = [1, 1]} : vector<2x32xf32> to vector<2x9xf32>
    %c0_137 = arith.constant 0 : index
    %c7_138 = arith.constant 7 : index
    %c0_139 = arith.constant 0 : index
    %410 = vector.load %arg9[%c0_137, %c7_138, %c0_139] : memref<2x8x9xf32, #tpu.memory_space<vmem>>, vector<2x1x9xf32>
    %411 = vector.shape_cast %410 : vector<2x1x9xf32> to vector<2x9xf32>
    %412 = vector.shape_cast %409 : vector<2x9xf32> to vector<2x1x9xf32>
    tpu.vector_store %arg9[%c0_137, %c7_138, %c0_139], %412 {strides = array<i32>} : memref<2x8x9xf32, #tpu.memory_space<vmem>>, vector<2x1x9xf32>,
    %c0_140 = arith.constant 0 : index
    %c0_141 = arith.constant 0 : index
    %413 = vector.load %arg11[%c0_140, %c0_141] : memref<2x32xf32, #tpu.memory_space<vmem>>, vector<2x32xf32>
    tpu.vector_store %arg11[%c0_140, %c0_141], %386 {strides = array<i32>} : memref<2x32xf32, #tpu.memory_space<vmem>>, vector<2x32xf32>,
    %c0_142 = arith.constant 0 : index
    %c0_143 = arith.constant 0 : index
    %414 = vector.load %arg12[%c0_142, %c0_143] : memref<2x32xf32, #tpu.memory_space<vmem>>, vector<2x32xf32>
    tpu.vector_store %arg12[%c0_142, %c0_143], %384 {strides = array<i32>} : memref<2x32xf32, #tpu.memory_space<vmem>>, vector<2x32xf32>,
    %c0_144 = arith.constant 0 : index
    %c0_145 = arith.constant 0 : index
    %415 = vector.load %arg13[%c0_144, %c0_145] : memref<2x32xf32, #tpu.memory_space<vmem>>, vector<2x32xf32>
    tpu.vector_store %arg13[%c0_144, %c0_145], %408 {strides = array<i32>} : memref<2x32xf32, #tpu.memory_space<vmem>>, vector<2x32xf32>,
    %c0_146 = arith.constant 0 : index
    %c0_147 = arith.constant 0 : index
    %416 = vector.load %arg14[%c0_146, %c0_147] : memref<2x32xf32, #tpu.memory_space<vmem>>, vector<2x32xf32>
    tpu.vector_store %arg14[%c0_146, %c0_147], %406 {strides = array<i32>} : memref<2x32xf32, #tpu.memory_space<vmem>>, vector<2x32xf32>,
    %c0_148 = arith.constant 0 : index
    %c0_149 = arith.constant 0 : index
    %c0_150 = arith.constant 0 : index
    %417 = vector.load %arg9[%c0_148, %c0_149, %c0_150] : memref<2x8x9xf32, #tpu.memory_space<vmem>>, vector<2x8x9xf32>
    %cst_151 = arith.constant dense<0xFF800000> : vector<2x8xf32>
    %418 = vector.multi_reduction <maximumf>, %417, %cst_151 [2] : vector<2x8x9xf32> to vector<2x8xf32>
    %419 = vector.shape_cast %418 : vector<2x8xf32> to vector<2x8x1xf32>
    %420 = vector.broadcast %419 : vector<2x8x1xf32> to vector<2x8x9xf32>
    %421 = arith.subf %417, %420 : vector<2x8x9xf32>
    %422 = math.exp %421 : vector<2x8x9xf32>
    %cst_152 = arith.constant dense<0.000000e+00> : vector<2x8xf32>
    %423 = vector.multi_reduction <add>, %422, %cst_152 [2] : vector<2x8x9xf32> to vector<2x8xf32>
    %424 = vector.shape_cast %423 : vector<2x8xf32> to vector<2x8x1xf32>
    %425 = tpu.reciprocal %424 {approx = true} : vector<2x8x1xf32> -> vector<2x8x1xf32>
    %426 = vector.broadcast %425 : vector<2x8x1xf32> to vector<2x8x9xf32>
    %427 = arith.mulf %422, %426 : vector<2x8x9xf32>
    %c0_153 = arith.constant 0 : index
    %c0_154 = arith.constant 0 : index
    %c0_155 = arith.constant 0 : index
    %428 = vector.load %arg2[%c0_153, %c0_154, %c0_155] : memref<2x8x32xf32, #tpu.memory_space<vmem>>, vector<2x8x32xf32>
    %c0_156 = arith.constant 0 : index
    %c0_157 = arith.constant 0 : index
    %c0_158 = arith.constant 0 : index
    %429 = vector.load %arg15[%c0_156, %c0_157, %c0_158] : memref<2x9x32xf32, #tpu.memory_space<vmem>>, vector<2x9x32xf32>
    "tpu.trace_start"() <{level = 10 : i32, message = "bth,btd->bhd"}> : () -> ()
    %cst_159 = arith.constant dense<0.000000e+00> : vector<2x9x32xf32>
    %430 = tpu.matmul %427, %428, %cst_159 {dimension_numbers = #tpu.dot_dimension_numbers<[1], [1], [2], [2], [0, 0, 0, 2, 1, 2], [0], [0]>} : vector<2x8x9xf32>, vector<2x8x32xf32>, vector<2x9x32xf32> -> vector<2x9x32xf32>
    "tpu.trace_stop"() : () -> ()
    %431 = arith.addf %429, %430 : vector<2x9x32xf32>
    %c0_160 = arith.constant 0 : index
    %c0_161 = arith.constant 0 : index
    %c0_162 = arith.constant 0 : index
    %432 = vector.load %arg15[%c0_160, %c0_161, %c0_162] : memref<2x9x32xf32, #tpu.memory_space<vmem>>, vector<2x9x32xf32>
    tpu.vector_store %arg15[%c0_160, %c0_161, %c0_162], %431 {strides = array<i32>} : memref<2x9x32xf32, #tpu.memory_space<vmem>>, vector<2x9x32xf32>,
    %c0_i32_163 = arith.constant 0 : i32
    %433 = arith.cmpi eq, %arg1, %c0_i32_163 : i32
    %434 = arith.extui %433 : i1 to i32
    %c0_i32_164 = arith.constant 0 : i32
    %435 = arith.cmpi ne, %434, %c0_i32_164 : i32
    scf.if %435 {
      %c0_165 = arith.constant 0 : index
      %c1_166 = arith.constant 1 : index
      %c0_167 = arith.constant 0 : index
      %436 = vector.load %arg15[%c0_165, %c1_166, %c0_167] : memref<2x9x32xf32, #tpu.memory_space<vmem>>, vector<2x8x32xf32>
      %c0_168 = arith.constant 0 : index
      %c0_169 = arith.constant 0 : index
      %c0_170 = arith.constant 0 : index
      %437 = vector.load %arg10[%c0_168, %c0_169, %c0_170] : memref<2x8x32xf32, #tpu.memory_space<vmem>>, vector<2x8x32xf32>
      tpu.vector_store %arg10[%c0_168, %c0_169, %c0_170], %436 {strides = array<i32>} : memref<2x8x32xf32, #tpu.memory_space<vmem>>, vector<2x8x32xf32>,
    } else {
    }
    return
  }
  func.func @transform_0(%arg0: i32, %arg1: i32) -> (i32, i32, i32) {
    %c0_i32 = arith.constant 0 : i32
    %c0_i32_0 = arith.constant 0 : i32
    return %arg0, %arg1, %c0_i32 : i32, i32, i32
  }
  func.func @transform_1(%arg0: i32, %arg1: i32) -> (i32, i32) {
    %c0_i32 = arith.constant 0 : i32
    %c0_i32_0 = arith.constant 0 : i32
    %c0_i32_1 = arith.constant 0 : i32
    return %c0_i32, %c0_i32_0 : i32, i32
  }
  func.func @transform_2(%arg0: i32, %arg1: i32) -> (i32, i32) {
    %c0_i32 = arith.constant 0 : i32
    %c0_i32_0 = arith.constant 0 : i32
    %c0_i32_1 = arith.constant 0 : i32
    return %c0_i32, %c0_i32_0 : i32, i32
  }
  func.func @transform_3(%arg0: i32, %arg1: i32) -> (i32, i32) {
    %c0_i32 = arith.constant 0 : i32
    %c0_i32_0 = arith.constant 0 : i32
    %c0_i32_1 = arith.constant 0 : i32
    return %c0_i32, %c0_i32_0 : i32, i32
  }
  func.func @transform_4(%arg0: i32, %arg1: i32) -> (i32, i32) {
    %c0_i32 = arith.constant 0 : i32
    %c0_i32_0 = arith.constant 0 : i32
    %c0_i32_1 = arith.constant 0 : i32
    return %c0_i32, %c0_i32_0 : i32, i32
  }
  func.func @transform_5(%arg0: i32, %arg1: i32) -> (i32, i32) {
    %c0_i32 = arith.constant 0 : i32
    %c0_i32_0 = arith.constant 0 : i32
    %c0_i32_1 = arith.constant 0 : i32
    return %c0_i32, %c0_i32_0 : i32, i32
  }
  func.func @transform_6(%arg0: i32, %arg1: i32) -> (i32, i32) {
    %c0_i32 = arith.constant 0 : i32
    %c0_i32_0 = arith.constant 0 : i32
    %c0_i32_1 = arith.constant 0 : i32
    return %c0_i32, %c0_i32_0 : i32, i32
  }
  func.func @transform_7(%arg0: i32, %arg1: i32) -> (i32, i32, i32) {
    %c0_i32 = arith.constant 0 : i32
    %c0_i32_0 = arith.constant 0 : i32
    return %arg0, %arg1, %c0_i32 : i32, i32, i32
  }
  func.func @transform_8(%arg0: i32, %arg1: i32) -> (i32, i32, i32) {
    %c0_i32 = arith.constant 0 : i32
    %c0_i32_0 = arith.constant 0 : i32
    %c0_i32_1 = arith.constant 0 : i32
    return %arg0, %c0_i32, %c0_i32_0 : i32, i32, i32
  }
}

</mosaic_0001>

<llo_original>
// kernel: ctc_forward.1
$region0: #{ctc_forward.1}
  #allocation0 [shape = 'u32[]', space=smem, size = 0x4, offset = 0x4, fixed_abs, tag = 'smem constant byte address 0x4 - core index']
  #allocation1 [shape = 'u32[144,128]{1,0:T(1,128)}', space=vmem, size = 0x12000, scoped, tag = 'internal scratch']
  #allocation2 [shape = 'f32[2,32]{1,0:T(2,128)}', space=vmem, size = 0x400, scoped, tag = 'scratch operand']
  #allocation3 [shape = 'f32[2,32]{1,0:T(2,128)}', space=vmem, size = 0x400, scoped, tag = 'scratch operand']
  #allocation4 [shape = 'f32[2,32]{1,0:T(2,128)}', space=vmem, size = 0x400, scoped, tag = 'scratch operand']
  #allocation5 [shape = 'f32[2,32]{1,0:T(2,128)}', space=vmem, size = 0x400, scoped, tag = 'scratch operand']
  #allocation6 [shape = 'f32[2,9,32]{2,1,0:T(8,128)}', space=vmem, size = 0x4000, scoped, tag = 'scratch operand']
  %s0 = inlined_call_operand.vmem [shape: f32[2,8,32], index: 0, kind: input, shape index: {}]
  %s1 = inlined_call_operand.vmem [shape: f32[32,128], index: 1, kind: input, shape index: {}]
  %s2 = inlined_call_operand.vmem [shape: f32[32,128], index: 2, kind: input, shape index: {}]
  %s3 = inlined_call_operand.vmem [shape: f32[1,128], index: 3, kind: input, shape index: {}]
  %s4 = inlined_call_operand.vmem [shape: f32[32,128], index: 4, kind: input, shape index: {}]
  %s5 = inlined_call_operand.vmem [shape: f32[32,128], index: 5, kind: input, shape index: {}]
  %s6 = inlined_call_operand.vmem [shape: f32[1,128], index: 6, kind: input, shape index: {}]
  %s7 = inlined_call_operand.hbm [shape: f32[2,8,9], index: 7, kind: output, shape index: {0}]
  %s8 = inlined_call_operand.hbm [shape: f32[2,8,32], index: 8, kind: output, shape index: {1}]
  %9 = xla_tuple %s7, %s8
  %s10 = sld [smem:[#allocation0]]
  $region54: #{ctc_forward.1} parent=0
    _
  %s12 = ssub.s32 1, %s10
  %s13 = scalar_select 0, %s12, %s10
  $region1: #{ctc_forward.1} parent=0
    #allocation7 [shape = 'u8[8192]{0}', space=vmem, size = 0x2000, scoped, tag = 'output window, operand 0, single buffered']
    #allocation8 [shape = 's32[1]{0}', space=sflag, size = 0x4, scoped, tag = 'scoped memory for ctc_forward.1']
    #allocation9 [shape = 'u8[8192]{0}', space=vmem, size = 0x2000, scoped, tag = 'output window, operand 1, single buffered']
    #allocation10 [shape = 's32[1]{0}', space=sflag, size = 0x4, scoped, tag = 'scoped memory for ctc_forward.1']
    %14 = vsyncpa [#allocation8], 0
    %15 = vsyncpa [#allocation10], 0
    // Predicated region
    $region2: #{ctc_forward.1} parent=1 // pred_check
      _
    $region3: #{ctc_forward.1} parent=1 // pred_check_branch
      %17 = sbr.rel (0) target = $region5
    $region4: #{ctc_forward.1} parent=1 // pred_region
      _
    $region5: #{ctc_forward.1} parent=1 // pred_fallthru
      _
    // Predicated region
    $region6: #{ctc_forward.1} parent=1 // pred_check
      _
    $region7: #{ctc_forward.1} parent=1 // pred_check_branch
      %19 = sbr.rel (0) target = $region9
    $region8: #{ctc_forward.1} parent=1 // pred_region
      _
    $region9: #{ctc_forward.1} parent=1 // pred_fallthru
      _
    // Predicated region
    $region10: #{ctc_forward.1} parent=1 // pred_check
      _
    $region11: #{ctc_forward.1} parent=1 // pred_check_branch
      %21 = sbr.rel (0) target = $region13
    $region12: #{ctc_forward.1} parent=1 // pred_region
      _
    $region13: #{ctc_forward.1} parent=1 // pred_fallthru
      _
    // Predicated region
    $region14: #{ctc_forward.1} parent=1 // pred_check
      _
    $region15: #{ctc_forward.1} parent=1 // pred_check_branch
      %23 = sbr.rel (0) target = $region17
    $region16: #{ctc_forward.1} parent=1 // pred_region
      _
    $region17: #{ctc_forward.1} parent=1 // pred_fallthru
      _
    // Predicated region
    $region18: #{ctc_forward.1} parent=1 // pred_check
      _
    $region19: #{ctc_forward.1} parent=1 // pred_check_branch
      %25 = sbr.rel (0) target = $region21
    $region20: #{ctc_forward.1} parent=1 // pred_region
      _
    $region21: #{ctc_forward.1} parent=1 // pred_fallthru
      _
    // Predicated region
    $region22: #{ctc_forward.1} parent=1 // pred_check
      _
    $region23: #{ctc_forward.1} parent=1 // pred_check_branch
      %27 = sbr.rel (0) target = $region25
    $region24: #{ctc_forward.1} parent=1 // pred_region
      _
    $region25: #{ctc_forward.1} parent=1 // pred_fallthru
      _
    // Predicated region
    $region26: #{ctc_forward.1} parent=1 // pred_check
      _
    $region27: #{ctc_forward.1} parent=1 // pred_check_branch
      %29 = sbr.rel (0) target = $region29
    $region28: #{ctc_forward.1} parent=1 // pred_region
      _
    $region29: #{ctc_forward.1} parent=1 // pred_fallthru
      _
    %p30 = scmp.eq.s32.totalorder 0, 0
    // Predicated region
    $region30: #{ctc_forward.1} parent=1 // pred_check
      %p31 = pneg %p30
    $region31: #{ctc_forward.1} parent=1 // pred_check_branch
      %33 = sbr.rel (%p31) target = $region33
    $region32: #{ctc_forward.1} parent=1 // pred_region
      %vm34 = vcmask 254976
      %35 = vst.msk [vmem:[#allocation2] sm:$0x3] %vm34, 0.0
      %36 = vst.msk [vmem:[#allocation3] sm:$0x3] %vm34, 0.0
      %37 = vst.msk [vmem:[#allocation4] sm:$0x3] %vm34, 0.0
      %38 = vst.msk [vmem:[#allocation5] sm:$0x3] %vm34, 0.0
      %vm39 = vcmask 261120
      %40 = vst.msk [vmem:[#allocation6] sm:$0xff] %vm39, 0.0
      %vm41 = vcmask 253952
      %42 = vst.msk [vmem:[#allocation6 + $0x8] sm:$0x1] %vm41, 0.0
      %43 = vst.msk [vmem:[#allocation6 + $0x10] sm:$0xff] %vm39, 0.0
      %44 = vst.msk [vmem:[#allocation6 + $0x18] sm:$0x1] %vm41, 0.0
    $region33: #{ctc_forward.1} parent=1 // pred_fallthru
      _
    %v45 = vld [vmem:[%s1] sm:$0xff]
    %v46 = vld [vmem:[%s1 + $0x8] sm:$0xff]
    %v47 = vld [vmem:[%s1 + $0x10] sm:$0xff]
    %v48 = vld [vmem:[%s1 + $0x18] sm:$0xff]
    %v49 = vld [vmem:[%s2] sm:$0xff]
    %v50 = vld [vmem:[%s2 + $0x8] sm:$0xff]
    %v51 = vld [vmem:[%s2 + $0x10] sm:$0xff]
    %v52 = vld [vmem:[%s2 + $0x18] sm:$0xff]
    %v53 = vld [vmem:[%s3] sm:$0x1]
    %v54 = vld [vmem:[%s4] sm:$0xff]
    %v55 = vld [vmem:[%s4 + $0x8] sm:$0xff]
    %v56 = vld [vmem:[%s4 + $0x10] sm:$0xff]
    %v57 = vld [vmem:[%s4 + $0x18] sm:$0xff]
    %v58 = vld [vmem:[%s5] sm:$0xff]
    %v59 = vld [vmem:[%s5 + $0x8] sm:$0xff]
    %v60 = vld [vmem:[%s5 + $0x10] sm:$0xff]
    %v61 = vld [vmem:[%s5 + $0x18] sm:$0xff]
    %v62 = vld [vmem:[%s6] sm:$0x1]
    %v63 = vld [vmem:[#allocation2] sm:$0x3]
    %v64 = vld [vmem:[#allocation3] sm:$0x3]
    %v65 = vld [vmem:[#allocation4] sm:$0x3]
    %v66 = vld [vmem:[#allocation5] sm:$0x3]
    %v67 = vld [vmem:[%s0] sm:$0x1]
    %v68 = vld [vmem:[%s0 + $0x8] sm:$0x1]
    %vm69 = vcmask 261120
    %v71 = vsel %vm69, %v63, 0
    %73 = vmatprep.subr.mxu0 0.0
    %74 = vmatpush1.msra.mxu0 %v49
    %75 = vmatprep.subr.mxu0 0.0
    %76 = vmatpush1.msra.mxu0 %v50
    %77 = vmatprep.subr.mxu0 0.0
    %78 = vmatpush1.msra.mxu0 %v51
    %79 = vmatprep.subr.mxu0 0.0
    %80 = vmatpush1.msra.mxu0 %v52
    %81 = vmatprep.subr.mxu0 0.0
    %82 = vmatpush1.msra.mxu0 0.0
    %83 = vmatprep.subr.mxu0 0.0
    %84 = vmatpush1.msra.mxu0 0.0
    %85 = vmatprep.subr.mxu0 0.0
    %86 = vmatpush1.msra.mxu0 0.0
    %87 = vmatprep.subr.mxu0 0.0
    %88 = vmatpush1.msra.mxu0 0.0
    %89 = vmatprep.subr.mxu0 0.0
    %90 = vmatpush1.msra.mxu0 0.0
    %91 = vmatprep.subr.mxu0 0.0
    %92 = vmatpush1.msra.mxu0 0.0
    %93 = vmatprep.subr.mxu0 0.0
    %94 = vmatpush1.msra.mxu0 0.0
    %95 = vmatprep.subr.mxu0 0.0
    %96 = vmatpush1.msra.mxu0 0.0
    %97 = vmatprep.subr.mxu0 0.0
    %98 = vmatpush1.msra.mxu0 0.0
    %99 = vmatprep.subr.mxu0 0.0
    %100 = vmatpush1.msra.mxu0 0.0
    %101 = vmatprep.subr.mxu0 0.0
    %102 = vmatpush1.msra.mxu0 0.0
    %103 = vmatprep.subr.mxu0 0.0
    %104 = vmatpush1.msra.mxu0 0.0
    %105 = vmatprep.subr.mxu0 0.0
    %106 = vmatpush1.msra.mxu0 0.0
    %107 = vmatprep.subr.mxu0 0.0
    %108 = vmatpush1.msra.mxu0 0.0
    %109 = vmatprep.subr.mxu0 0.0
    %110 = vmatpush1.msra.mxu0 0.0
    %111 = vmatprep.subr.mxu0 0.0
    %112 = vmatpush1.msra.mxu0 0.0
    %113 = vmatprep.subr.mxu0 0.0
    %114 = vmatpush1.msra.mxu0 0.0
    %115 = vmatprep.subr.mxu0 0.0
    %116 = vmatpush1.msra.mxu0 0.0
    %117 = vmatprep.subr.mxu0 0.0
    %118 = vmatpush1.msra.mxu0 0.0
    %119 = vmatprep.subr.mxu0 0.0
    %120 = vmatpush1.msra.mxu0 0.0
    %121 = vmatprep.subr.mxu0 0.0
    %122 = vmatpush1.msra.mxu0 0.0
    %123 = vmatprep.subr.mxu0 0.0
    %124 = vmatpush1.msra.mxu0 0.0
    %125 = vmatprep.subr.mxu0 0.0
    %126 = vmatpush1.msra.mxu0 0.0
    %127 = vmatprep.subr.mxu0 0.0
    %128 = vmatpush1.msra.mxu0 0.0
    %129 = vmatprep.subr.mxu0 0.0
    %130 = vmatpush1.msra.mxu0 0.0
    %131 = vmatprep.subr.mxu0 0.0
    %132 = vmatpush1.msra.mxu0 0.0
    %133 = vmatprep.subr.mxu0 0.0
    %134 = vmatpush1.msra.mxu0 0.0
    %135 = vmatprep.subr.mxu0 0.0
    %136 = vmatpush1.msra.mxu0 0.0
    %137 = vmatprep.mubr.f32.mxu0 0.0
    %138 = vmatmul.mubr.f32.gmra.mrb[0].mxu0 %v71
    %v139 = vpop.f32.mrb[0].mxu0
    %v140 = vadd.f32 0.0, %v139
    %v141 = vpop.f32.mrb[0].mxu0
    %142 = vdwg.mxu0
    %v145 = vrot.slane %v68, 7
    %vm146 = vcmask 1041409
    %v147 = vsel %vm146, %v145, %v67
    %v148 = vsel %vm69, %v147, 0
    %150 = vmatprep.subr.mxu0 0.0
    %151 = vmatpush1.msra.mxu0 %v45
    %152 = vmatprep.subr.mxu0 0.0
    %153 = vmatpush1.msra.mxu0 %v46
    %154 = vmatprep.subr.mxu0 0.0
    %155 = vmatpush1.msra.mxu0 %v47
    %156 = vmatprep.subr.mxu0 0.0
    %157 = vmatpush1.msra.mxu0 %v48
    %158 = vmatprep.subr.mxu0 0.0
    %159 = vmatpush1.msra.mxu0 0.0
    %160 = vmatprep.subr.mxu0 0.0
    %161 = vmatpush1.msra.mxu0 0.0
    %162 = vmatprep.subr.mxu0 0.0
    %163 = vmatpush1.msra.mxu0 0.0
    %164 = vmatprep.subr.mxu0 0.0
    %165 = vmatpush1.msra.mxu0 0.0
    %166 = vmatprep.subr.mxu0 0.0
    %167 = vmatpush1.msra.mxu0 0.0
    %168 = vmatprep.subr.mxu0 0.0
    %169 = vmatpush1.msra.mxu0 0.0
    %170 = vmatprep.subr.mxu0 0.0
    %171 = vmatpush1.msra.mxu0 0.0
    %172 = vmatprep.subr.mxu0 0.0
    %173 = vmatpush1.msra.mxu0 0.0
    %174 = vmatprep.subr.mxu0 0.0
    %175 = vmatpush1.msra.mxu0 0.0
    %176 = vmatprep.subr.mxu0 0.0
    %177 = vmatpush1.msra.mxu0 0.0
    %178 = vmatprep.subr.mxu0 0.0
    %179 = vmatpush1.msra.mxu0 0.0
    %180 = vmatprep.subr.mxu0 0.0
    %181 = vmatpush1.msra.mxu0 0.0
    %182 = vmatprep.subr.mxu0 0.0
    %183 = vmatpush1.msra.mxu0 0.0
    %184 = vmatprep.subr.mxu0 0.0
    %185 = vmatpush1.msra.mxu0 0.0
    %186 = vmatprep.subr.mxu0 0.0
    %187 = vmatpush1.msra.mxu0 0.0
    %188 = vmatprep.subr.mxu0 0.0
    %189 = vmatpush1.msra.mxu0 0.0
    %190 = vmatprep.subr.mxu0 0.0
    %191 = vmatpush1.msra.mxu0 0.0
    %192 = vmatprep.subr.mxu0 0.0
    %193 = vmatpush1.msra.mxu0 0.0
    %194 = vmatprep.subr.mxu0 0.0
    %195 = vmatpush1.msra.mxu0 0.0
    %196 = vmatprep.subr.mxu0 0.0
    %197 = vmatpush1.msra.mxu0 0.0
    %198 = vmatprep.subr.mxu0 0.0
    %199 = vmatpush1.msra.mxu0 0.0
    %200 = vmatprep.subr.mxu0 0.0
    %201 = vmatpush1.msra.mxu0 0.0
    %202 = vmatprep.subr.mxu0 0.0
    %203 = vmatpush1.msra.mxu0 0.0
    %204 = vmatprep.subr.mxu0 0.0
    %205 = vmatpush1.msra.mxu0 0.0
    %206 = vmatprep.subr.mxu0 0.0
    %207 = vmatpush1.msra.mxu0 0.0
    %208 = vmatprep.subr.mxu0 0.0
    %209 = vmatpush1.msra.mxu0 0.0
    %210 = vmatprep.subr.mxu0 0.0
    %211 = vmatpush1.msra.mxu0 0.0
    %212 = vmatprep.subr.mxu0 0.0
    %213 = vmatpush1.msra.mxu0 0.0
    %214 = vmatprep.mubr.f32.mxu0 0.0
    %215 = vmatmul.mubr.f32.gmra.mrb[0].mxu0 %v148
    %v216 = vpop.f32.mrb[0].mxu0
    %v217 = vadd.f32 %v140, %v216
    %v218 = vpop.f32.mrb[0].mxu0
    %219 = vdwg.mxu0
    %v221 = vlaneseq
    %v222 = vshrl.u32 %v221, 7
    %v223 = vsub.s32 0, %v222
    %v224 = vrot.slane %v53, %v223
    %v226 = vadd.f32 %v217, %v224
    %v227 = vmul.f32 %v226, 0.5
    %v228 = vtanh.pop %v227
    %v229 = vmul.f32 %v228, 0.5
    %v230 = vadd.f32 %v229, 0.5
    %v231 = vtanh.pop %v226
    %233 = vrot.lane.b32.xlu0 %v64, 32
    %v234 = vpop.permute.xlu0 %233
    %v236 = vmul.f32 %v230, %v234
    %238 = vrot.lane.b32.xlu0 %v231, 64
    %v239 = vpop.permute.xlu0 %238
    %v241 = vmul.f32 %v230, %v239
    %243 = vrot.lane.b32.xlu0 %v241, 32
    %v244 = vpop.permute.xlu0 %243
    %v246 = vadd.f32 %v236, %v244
    %v247 = vtanh.pop %v246
    %249 = vrot.lane.b32.xlu0 %v247, 64
    %v250 = vpop.permute.xlu0 %249
    %v252 = vmul.f32 %v230, %v250
    %v254 = vsel %vm69, %v65, 0
    %256 = vmatprep.subr.mxu0 0.0
    %257 = vmatpush1.msra.mxu0 %v58
    %258 = vmatprep.subr.mxu0 0.0
    %259 = vmatpush1.msra.mxu0 %v59
    %260 = vmatprep.subr.mxu0 0.0
    %261 = vmatpush1.msra.mxu0 %v60
    %262 = vmatprep.subr.mxu0 0.0
    %263 = vmatpush1.msra.mxu0 %v61
    %264 = vmatprep.subr.mxu0 0.0
    %265 = vmatpush1.msra.mxu0 0.0
    %266 = vmatprep.subr.mxu0 0.0
    %267 = vmatpush1.msra.mxu0 0.0
    %268 = vmatprep.subr.mxu0 0.0
    %269 = vmatpush1.msra.mxu0 0.0
    %270 = vmatprep.subr.mxu0 0.0
    %271 = vmatpush1.msra.mxu0 0.0
    %272 = vmatprep.subr.mxu0 0.0
    %273 = vmatpush1.msra.mxu0 0.0
    %274 = vmatprep.subr.mxu0 0.0
    %275 = vmatpush1.msra.mxu0 0.0
    %276 = vmatprep.subr.mxu0 0.0
    %277 = vmatpush1.msra.mxu0 0.0
    %278 = vmatprep.subr.mxu0 0.0
    %279 = vmatpush1.msra.mxu0 0.0
    %280 = vmatprep.subr.mxu0 0.0
    %281 = vmatpush1.msra.mxu0 0.0
    %282 = vmatprep.subr.mxu0 0.0
    %283 = vmatpush1.msra.mxu0 0.0
    %284 = vmatprep.subr.mxu0 0.0
    %285 = vmatpush1.msra.mxu0 0.0
    %286 = vmatprep.subr.mxu0 0.0
    %287 = vmatpush1.msra.mxu0 0.0
    %288 = vmatprep.subr.mxu0 0.0
    %289 = vmatpush1.msra.mxu0 0.0
    %290 = vmatprep.subr.mxu0 0.0
    %291 = vmatpush1.msra.mxu0 0.0
    %292 = vmatprep.subr.mxu0 0.0
    %293 = vmatpush1.msra.mxu0 0.0
    %294 = vmatprep.subr.mxu0 0.0
    %295 = vmatpush1.msra.mxu0 0.0
    %296 = vmatprep.subr.mxu0 0.0
    %297 = vmatpush1.msra.mxu0 0.0
    %298 = vmatprep.subr.mxu0 0.0
    %299 = vmatpush1.msra.mxu0 0.0
    %300 = vmatprep.subr.mxu0 0.0
    %301 = vmatpush1.msra.mxu0 0.0
    %302 = vmatprep.subr.mxu0 0.0
    %303 = vmatpush1.msra.mxu0 0.0
    %304 = vmatprep.subr.mxu0 0.0
    %305 = vmatpush1.msra.mxu0 0.0
    %306 = vmatprep.subr.mxu0 0.0
    %307 = vmatpush1.msra.mxu0 0.0
    %308 = vmatprep.subr.mxu0 0.0
    %309 = vmatpush1.msra.mxu0 0.0
    %310 = vmatprep.subr.mxu0 0.0
    %311 = vmatpush1.msra.mxu0 0.0
    %312 = vmatprep.subr.mxu0 0.0
    %313 = vmatpush1.msra.mxu0 0.0
    %314 = vmatprep.subr.mxu0 0.0
    %315 = vmatpush1.msra.mxu0 0.0
    %316 = vmatprep.subr.mxu0 0.0
    %317 = vmatpush1.msra.mxu0 0.0
    %318 = vmatprep.subr.mxu0 0.0
    %319 = vmatpush1.msra.mxu0 0.0
    %320 = vmatprep.mubr.f32.mxu0 0.0
    %321 = vmatmul.mubr.f32.gmra.mrb[0].mxu0 %v254
    %v322 = vpop.f32.mrb[0].mxu0
    %v323 = vadd.f32 0.0, %v322
    %v324 = vpop.f32.mrb[0].mxu0
    %325 = vdwg.mxu0
    %327 = vrot.lane.b32.xlu0 %v252, 32
    %v328 = vpop.permute.xlu0 %327
    %v329 = vsel %vm69, %v328, 0
    %331 = vmatprep.subr.mxu0 0.0
    %332 = vmatpush1.msra.mxu0 %v54
    %333 = vmatprep.subr.mxu0 0.0
    %334 = vmatpush1.msra.mxu0 %v55
    %335 = vmatprep.subr.mxu0 0.0
    %336 = vmatpush1.msra.mxu0 %v56
    %337 = vmatprep.subr.mxu0 0.0
    %338 = vmatpush1.msra.mxu0 %v57
    %339 = vmatprep.subr.mxu0 0.0
    %340 = vmatpush1.msra.mxu0 0.0
    %341 = vmatprep.subr.mxu0 0.0
    %342 = vmatpush1.msra.mxu0 0.0
    %343 = vmatprep.subr.mxu0 0.0
    %344 = vmatpush1.msra.mxu0 0.0
    %345 = vmatprep.subr.mxu0 0.0
    %346 = vmatpush1.msra.mxu0 0.0
    %347 = vmatprep.subr.mxu0 0.0
    %348 = vmatpush1.msra.mxu0 0.0
    %349 = vmatprep.subr.mxu0 0.0
    %350 = vmatpush1.msra.mxu0 0.0
    %351 = vmatprep.subr.mxu0 0.0
    %352 = vmatpush1.msra.mxu0 0.0
    %353 = vmatprep.subr.mxu0 0.0
    %354 = vmatpush1.msra.mxu0 0.0
    %355 = vmatprep.subr.mxu0 0.0
    %356 = vmatpush1.msra.mxu0 0.0
    %357 = vmatprep.subr.mxu0 0.0
    %358 = vmatpush1.msra.mxu0 0.0
    %359 = vmatprep.subr.mxu0 0.0
    %360 = vmatpush1.msra.mxu0 0.0
    %361 = vmatprep.subr.mxu0 0.0
    %362 = vmatpush1.msra.mxu0 0.0
    %363 = vmatprep.subr.mxu0 0.0
    %364 = vmatpush1.msra.mxu0 0.0
    %365 = vmatprep.subr.mxu0 0.0
    %366 = vmatpush1.msra.mxu0 0.0
    %367 = vmatprep.subr.mxu0 0.0
    %368 = vmatpush1.msra.mxu0 0.0
    %369 = vmatprep.subr.mxu0 0.0
    %370 = vmatpush1.msra.mxu0 0.0
    %371 = vmatprep.subr.mxu0 0.0
    %372 = vmatpush1.msra.mxu0 0.0
    %373 = vmatprep.subr.mxu0 0.0
    %374 = vmatpush1.msra.mxu0 0.0
    %375 = vmatprep.subr.mxu0 0.0
    %376 = vmatpush1.msra.mxu0 0.0
    %377 = vmatprep.subr.mxu0 0.0
    %378 = vmatpush1.msra.mxu0 0.0
    %379 = vmatprep.subr.mxu0 0.0
    %380 = vmatpush1.msra.mxu0 0.0
    %381 = vmatprep.subr.mxu0 0.0
    %382 = vmatpush1.msra.mxu0 0.0
    %383 = vmatprep.subr.mxu0 0.0
    %384 = vmatpush1.msra.mxu0 0.0
    %385 = vmatprep.subr.mxu0 0.0
    %386 = vmatpush1.msra.mxu0 0.0
    %387 = vmatprep.subr.mxu0 0.0
    %388 = vmatpush1.msra.mxu0 0.0
    %389 = vmatprep.subr.mxu0 0.0
    %390 = vmatpush1.msra.mxu0 0.0
    %391 = vmatprep.subr.mxu0 0.0
    %392 = vmatpush1.msra.mxu0 0.0
    %393 = vmatprep.subr.mxu0 0.0
    %394 = vmatpush1.msra.mxu0 0.0
    %395 = vmatprep.mubr.f32.mxu0 0.0
    %396 = vmatmul.mubr.f32.gmra.mrb[0].mxu0 %v329
    %v397 = vpop.f32.mrb[0].mxu0
    %v398 = vadd.f32 %v323, %v397
    %v399 = vpop.f32.mrb[0].mxu0
    %400 = vdwg.mxu0
    %v402 = vlaneseq
    %v403 = vshrl.u32 %v402, 7
    %v404 = vsub.s32 0, %v403
    %v405 = vrot.slane %v62, %v404
    %v407 = vadd.f32 %v398, %v405
    %v408 = vmul.f32 %v407, 0.5
    %v409 = vtanh.pop %v408
    %v410 = vmul.f32 %v409, 0.5
    %v411 = vadd.f32 %v410, 0.5
    %v412 = vtanh.pop %v407
    %414 = vrot.lane.b32.xlu0 %v66, 32
    %v415 = vpop.permute.xlu0 %414
    %v417 = vmul.f32 %v411, %v415
    %419 = vrot.lane.b32.xlu0 %v412, 64
    %v420 = vpop.permute.xlu0 %419
    %v422 = vmul.f32 %v411, %v420
    %424 = vrot.lane.b32.xlu0 %v422, 32
    %v425 = vpop.permute.xlu0 %424
    %v427 = vadd.f32 %v417, %v425
    %v428 = vtanh.pop %v427
    %430 = vrot.lane.b32.xlu0 %v428, 64
    %v431 = vpop.permute.xlu0 %430
    %v433 = vmul.f32 %v411, %v431
    %v436 = vunpack.c.l.s4 1966171168
    %v437 = vunpack.c.0.s8 %v436
    %v438 = vlaneseq
    %v439 = vshrl.u32 %v438, 7
    %v440 = vsub.s32 %v437, %v439
    %v441 = vrot.slane %v433, %v440
    %v442 = vcombine.high %v441, %v441
    %v444 = vunpack.c.l.s4 1966171168
    %v445 = vunpack.c.0.s8 %v444
    %v446 = vlaneseq
    %v447 = vshrl.u32 %v446, 7
    %v448 = vsub.s32 %v445, %v447
    %v449 = vrot.slane %v441, %v448
    %v451 = vunpack.c.l.s4 1966171168
    %v452 = vunpack.c.0.s8 %v451
    %v453 = vlaneseq
    %v454 = vshrl.u32 %v453, 7
    %v455 = vsub.s32 %v452, %v454
    %v456 = vrot.slane %v442, %v455
    %v457 = vlaneseq
    %v458 = vshrl.u32 %v457, 7
    %v459 = vsub.s32 0, %v458
    %v460 = vrot.slane %v449, %v459
    %v461 = vlaneseq
    %v462 = vshrl.u32 %v461, 7
    %v463 = vsub.s32 0, %v462
    %v464 = vrot.slane %v456, %v463
    %465 = vrot.lane.b32.xlu0 %v460, 32
    %v466 = vpop.permute.xlu0 %465
    %467 = vrot.lane.b32.xlu0 %v464, 32
    %v468 = vpop.permute.xlu0 %467
    %vm471 = vcmask 65536
    %472 = vst.msk [vmem:[#allocation7] sm:$0x1] %vm471, %v466
    %473 = vst.msk [vmem:[#allocation7 + $0x8] sm:$0x1] %vm471, %v468
    %v474 = vld [vmem:[%s0 + $0x1] sm:$0x1]
    %v475 = vld [vmem:[%s0 + $0x9] sm:$0x1]
    %476 = vmatprep.subr.mxu0 0.0
    %477 = vmatpush1.msra.mxu0 %v49
    %478 = vmatprep.subr.mxu0 0.0
    %479 = vmatpush1.msra.mxu0 %v50
    %480 = vmatprep.subr.mxu0 0.0
    %481 = vmatpush1.msra.mxu0 %v51
    %482 = vmatprep.subr.mxu0 0.0
    %483 = vmatpush1.msra.mxu0 %v52
    %484 = vmatprep.subr.mxu0 0.0
    %485 = vmatpush1.msra.mxu0 0.0
    %486 = vmatprep.subr.mxu0 0.0
    %487 = vmatpush1.msra.mxu0 0.0
    %488 = vmatprep.subr.mxu0 0.0
    %489 = vmatpush1.msra.mxu0 0.0
    %490 = vmatprep.subr.mxu0 0.0
    %491 = vmatpush1.msra.mxu0 0.0
    %492 = vmatprep.subr.mxu0 0.0
    %493 = vmatpush1.msra.mxu0 0.0
    %494 = vmatprep.subr.mxu0 0.0
    %495 = vmatpush1.msra.mxu0 0.0
    %496 = vmatprep.subr.mxu0 0.0
    %497 = vmatpush1.msra.mxu0 0.0
    %498 = vmatprep.subr.mxu0 0.0
    %499 = vmatpush1.msra.mxu0 0.0
    %500 = vmatprep.subr.mxu0 0.0
    %501 = vmatpush1.msra.mxu0 0.0
    %502 = vmatprep.subr.mxu0 0.0
    %503 = vmatpush1.msra.mxu0 0.0
    %504 = vmatprep.subr.mxu0 0.0
    %505 = vmatpush1.msra.mxu0 0.0
    %506 = vmatprep.subr.mxu0 0.0
    %507 = vmatpush1.msra.mxu0 0.0
    %508 = vmatprep.subr.mxu0 0.0
    %509 = vmatpush1.msra.mxu0 0.0
    %510 = vmatprep.subr.mxu0 0.0
    %511 = vmatpush1.msra.mxu0 0.0
    %512 = vmatprep.subr.mxu0 0.0
    %513 = vmatpush1.msra.mxu0 0.0
    %514 = vmatprep.subr.mxu0 0.0
    %515 = vmatpush1.msra.mxu0 0.0
    %516 = vmatprep.subr.mxu0 0.0
    %517 = vmatpush1.msra.mxu0 0.0
    %518 = vmatprep.subr.mxu0 0.0
    %519 = vmatpush1.msra.mxu0 0.0
    %520 = vmatprep.subr.mxu0 0.0
    %521 = vmatpush1.msra.mxu0 0.0
    %522 = vmatprep.subr.mxu0 0.0
    %523 = vmatpush1.msra.mxu0 0.0
    %524 = vmatprep.subr.mxu0 0.0
    %525 = vmatpush1.msra.mxu0 0.0
    %526 = vmatprep.subr.mxu0 0.0
    %527 = vmatpush1.msra.mxu0 0.0
    %528 = vmatprep.subr.mxu0 0.0
    %529 = vmatpush1.msra.mxu0 0.0
    %530 = vmatprep.subr.mxu0 0.0
    %531 = vmatpush1.msra.mxu0 0.0
    %532 = vmatprep.subr.mxu0 0.0
    %533 = vmatpush1.msra.mxu0 0.0
    %534 = vmatprep.subr.mxu0 0.0
    %535 = vmatpush1.msra.mxu0 0.0
    %536 = vmatprep.subr.mxu0 0.0
    %537 = vmatpush1.msra.mxu0 0.0
    %538 = vmatprep.subr.mxu0 0.0
    %539 = vmatpush1.msra.mxu0 0.0
    %540 = vmatprep.mubr.f32.mxu0 0.0
    %541 = vmatmul.mubr.f32.gmra.mrb[0].mxu0 %v329
    %v542 = vpop.f32.mrb[0].mxu0
    %v543 = vadd.f32 0.0, %v542
    %v544 = vpop.f32.mrb[0].mxu0
    %545 = vdwg.mxu0
    %v548 = vrot.slane %v475, 7
    %v549 = vsel %vm146, %v548, %v474
    %v550 = vsel %vm69, %v549, 0
    %552 = vmatprep.subr.mxu0 0.0
    %553 = vmatpush1.msra.mxu0 %v45
    %554 = vmatprep.subr.mxu0 0.0
    %555 = vmatpush1.msra.mxu0 %v46
    %556 = vmatprep.subr.mxu0 0.0
    %557 = vmatpush1.msra.mxu0 %v47
    %558 = vmatprep.subr.mxu0 0.0
    %559 = vmatpush1.msra.mxu0 %v48
    %560 = vmatprep.subr.mxu0 0.0
    %561 = vmatpush1.msra.mxu0 0.0
    %562 = vmatprep.subr.mxu0 0.0
    %563 = vmatpush1.msra.mxu0 0.0
    %564 = vmatprep.subr.mxu0 0.0
    %565 = vmatpush1.msra.mxu0 0.0
    %566 = vmatprep.subr.mxu0 0.0
    %567 = vmatpush1.msra.mxu0 0.0
    %568 = vmatprep.subr.mxu0 0.0
    %569 = vmatpush1.msra.mxu0 0.0
    %570 = vmatprep.subr.mxu0 0.0
    %571 = vmatpush1.msra.mxu0 0.0
    %572 = vmatprep.subr.mxu0 0.0
    %573 = vmatpush1.msra.mxu0 0.0
    %574 = vmatprep.subr.mxu0 0.0
    %575 = vmatpush1.msra.mxu0 0.0
    %576 = vmatprep.subr.mxu0 0.0
    %577 = vmatpush1.msra.mxu0 0.0
    %578 = vmatprep.subr.mxu0 0.0
    %579 = vmatpush1.msra.mxu0 0.0
    %580 = vmatprep.subr.mxu0 0.0
    %581 = vmatpush1.msra.mxu0 0.0
    %582 = vmatprep.subr.mxu0 0.0
    %583 = vmatpush1.msra.mxu0 0.0
    %584 = vmatprep.subr.mxu0 0.0
    %585 = vmatpush1.msra.mxu0 0.0
    %586 = vmatprep.subr.mxu0 0.0
    %587 = vmatpush1.msra.mxu0 0.0
    %588 = vmatprep.subr.mxu0 0.0
    %589 = vmatpush1.msra.mxu0 0.0
    %590 = vmatprep.subr.mxu0 0.0
    %591 = vmatpush1.msra.mxu0 0.0
    %592 = vmatprep.subr.mxu0 0.0
    %593 = vmatpush1.msra.mxu0 0.0
    %594 = vmatprep.subr.mxu0 0.0
    %595 = vmatpush1.msra.mxu0 0.0
    %596 = vmatprep.subr.mxu0 0.0
    %597 = vmatpush1.msra.mxu0 0.0
    %598 = vmatprep.subr.mxu0 0.0
    %599 = vmatpush1.msra.mxu0 0.0
    %600 = vmatprep.subr.mxu0 0.0
    %601 = vmatpush1.msra.mxu0 0.0
    %602 = vmatprep.subr.mxu0 0.0
    %603 = vmatpush1.msra.mxu0 0.0
    %604 = vmatprep.subr.mxu0 0.0
    %605 = vmatpush1.msra.mxu0 0.0
    %606 = vmatprep.subr.mxu0 0.0
    %607 = vmatpush1.msra.mxu0 0.0
    %608 = vmatprep.subr.mxu0 0.0
    %609 = vmatpush1.msra.mxu0 0.0
    %610 = vmatprep.subr.mxu0 0.0
    %611 = vmatpush1.msra.mxu0 0.0
    %612 = vmatprep.subr.mxu0 0.0
    %613 = vmatpush1.msra.mxu0 0.0
    %614 = vmatprep.subr.mxu0 0.0
    %615 = vmatpush1.msra.mxu0 0.0
    %616 = vmatprep.mubr.f32.mxu0 0.0
    %617 = vmatmul.mubr.f32.gmra.mrb[0].mxu0 %v550
    %v618 = vpop.f32.mrb[0].mxu0
    %v619 = vadd.f32 %v543, %v618
    %v620 = vpop.f32.mrb[0].mxu0
    %621 = vdwg.mxu0
    %v622 = vadd.f32 %v619, %v224
    %v623 = vmul.f32 %v622, 0.5
    %v624 = vtanh.pop %v623
    %v625 = vmul.f32 %v624, 0.5
    %v626 = vadd.f32 %v625, 0.5
    %v627 = vtanh.pop %v622
    %v628 = vmul.f32 %v626, %v246
    %630 = vrot.lane.b32.xlu0 %v627, 64
    %v631 = vpop.permute.xlu0 %630
    %v633 = vmul.f32 %v626, %v631
    %635 = vrot.lane.b32.xlu0 %v633, 32
    %v636 = vpop.permute.xlu0 %635
    %v638 = vadd.f32 %v628, %v636
    %v639 = vtanh.pop %v638
    %641 = vrot.lane.b32.xlu0 %v639, 64
    %v642 = vpop.permute.xlu0 %641
    %v644 = vmul.f32 %v626, %v642
    %645 = vrot.lane.b32.xlu0 %v433, 32
    %v646 = vpop.permute.xlu0 %645
    %v647 = vsel %vm69, %v646, 0
    %649 = vmatprep.subr.mxu0 0.0
    %650 = vmatpush1.msra.mxu0 %v58
    %651 = vmatprep.subr.mxu0 0.0
    %652 = vmatpush1.msra.mxu0 %v59
    %653 = vmatprep.subr.mxu0 0.0
    %654 = vmatpush1.msra.mxu0 %v60
    %655 = vmatprep.subr.mxu0 0.0
    %656 = vmatpush1.msra.mxu0 %v61
    %657 = vmatprep.subr.mxu0 0.0
    %658 = vmatpush1.msra.mxu0 0.0
    %659 = vmatprep.subr.mxu0 0.0
    %660 = vmatpush1.msra.mxu0 0.0
    %661 = vmatprep.subr.mxu0 0.0
    %662 = vmatpush1.msra.mxu0 0.0
    %663 = vmatprep.subr.mxu0 0.0
    %664 = vmatpush1.msra.mxu0 0.0
    %665 = vmatprep.subr.mxu0 0.0
    %666 = vmatpush1.msra.mxu0 0.0
    %667 = vmatprep.subr.mxu0 0.0
    %668 = vmatpush1.msra.mxu0 0.0
    %669 = vmatprep.subr.mxu0 0.0
    %670 = vmatpush1.msra.mxu0 0.0
    %671 = vmatprep.subr.mxu0 0.0
    %672 = vmatpush1.msra.mxu0 0.0
    %673 = vmatprep.subr.mxu0 0.0
    %674 = vmatpush1.msra.mxu0 0.0
    %675 = vmatprep.subr.mxu0 0.0
    %676 = vmatpush1.msra.mxu0 0.0
    %677 = vmatprep.subr.mxu0 0.0
    %678 = vmatpush1.msra.mxu0 0.0
    %679 = vmatprep.subr.mxu0 0.0
    %680 = vmatpush1.msra.mxu0 0.0
    %681 = vmatprep.subr.mxu0 0.0
    %682 = vmatpush1.msra.mxu0 0.0
    %683 = vmatprep.subr.mxu0 0.0
    %684 = vmatpush1.msra.mxu0 0.0
    %685 = vmatprep.subr.mxu0 0.0
    %686 = vmatpush1.msra.mxu0 0.0
    %687 = vmatprep.subr.mxu0 0.0
    %688 = vmatpush1.msra.mxu0 0.0
    %689 = vmatprep.subr.mxu0 0.0
    %690 = vmatpush1.msra.mxu0 0.0
    %691 = vmatprep.subr.mxu0 0.0
    %692 = vmatpush1.msra.mxu0 0.0
    %693 = vmatprep.subr.mxu0 0.0
    %694 = vmatpush1.msra.mxu0 0.0
    %695 = vmatprep.subr.mxu0 0.0
    %696 = vmatpush1.msra.mxu0 0.0
    %697 = vmatprep.subr.mxu0 0.0
    %698 = vmatpush1.msra.mxu0 0.0
    %699 = vmatprep.subr.mxu0 0.0
    %700 = vmatpush1.msra.mxu0 0.0
    %701 = vmatprep.subr.mxu0 0.0
    %702 = vmatpush1.msra.mxu0 0.0
    %703 = vmatprep.subr.mxu0 0.0
    %704 = vmatpush1.msra.mxu0 0.0
    %705 = vmatprep.subr.mxu0 0.0
    %706 = vmatpush1.msra.mxu0 0.0
    %707 = vmatprep.subr.mxu0 0.0
    %708 = vmatpush1.msra.mxu0 0.0
    %709 = vmatprep.subr.mxu0 0.0
    %710 = vmatpush1.msra.mxu0 0.0
    %711 = vmatprep.subr.mxu0 0.0
    %712 = vmatpush1.msra.mxu0 0.0
    %713 = vmatprep.mubr.f32.mxu0 0.0
    %714 = vmatmul.mubr.f32.gmra.mrb[0].mxu0 %v647
    %v715 = vpop.f32.mrb[0].mxu0
    %v716 = vadd.f32 0.0, %v715
    %v717 = vpop.f32.mrb[0].mxu0
    %718 = vdwg.mxu0
    %720 = vrot.lane.b32.xlu0 %v644, 32
    %v721 = vpop.permute.xlu0 %720
    %v722 = vsel %vm69, %v721, 0
    %724 = vmatprep.subr.mxu0 0.0
    %725 = vmatpush1.msra.mxu0 %v54
    %726 = vmatprep.subr.mxu0 0.0
    %727 = vmatpush1.msra.mxu0 %v55
    %728 = vmatprep.subr.mxu0 0.0
    %729 = vmatpush1.msra.mxu0 %v56
    %730 = vmatprep.subr.mxu0 0.0
    %731 = vmatpush1.msra.mxu0 %v57
    %732 = vmatprep.subr.mxu0 0.0
    %733 = vmatpush1.msra.mxu0 0.0
    %734 = vmatprep.subr.mxu0 0.0
    %735 = vmatpush1.msra.mxu0 0.0
    %736 = vmatprep.subr.mxu0 0.0
    %737 = vmatpush1.msra.mxu0 0.0
    %738 = vmatprep.subr.mxu0 0.0
    %739 = vmatpush1.msra.mxu0 0.0
    %740 = vmatprep.subr.mxu0 0.0
    %741 = vmatpush1.msra.mxu0 0.0
    %742 = vmatprep.subr.mxu0 0.0
    %743 = vmatpush1.msra.mxu0 0.0
    %744 = vmatprep.subr.mxu0 0.0
    %745 = vmatpush1.msra.mxu0 0.0
    %746 = vmatprep.subr.mxu0 0.0
    %747 = vmatpush1.msra.mxu0 0.0
    %748 = vmatprep.subr.mxu0 0.0
    %749 = vmatpush1.msra.mxu0 0.0
    %750 = vmatprep.subr.mxu0 0.0
    %751 = vmatpush1.msra.mxu0 0.0
    %752 = vmatprep.subr.mxu0 0.0
    %753 = vmatpush1.msra.mxu0 0.0
    %754 = vmatprep.subr.mxu0 0.0
    %755 = vmatpush1.msra.mxu0 0.0
    %756 = vmatprep.subr.mxu0 0.0
    %757 = vmatpush1.msra.mxu0 0.0
    %758 = vmatprep.subr.mxu0 0.0
    %759 = vmatpush1.msra.mxu0 0.0
    %760 = vmatprep.subr.mxu0 0.0
    %761 = vmatpush1.msra.mxu0 0.0
    %762 = vmatprep.subr.mxu0 0.0
    %763 = vmatpush1.msra.mxu0 0.0
    %764 = vmatprep.subr.mxu0 0.0
    %765 = vmatpush1.msra.mxu0 0.0
    %766 = vmatprep.subr.mxu0 0.0
    %767 = vmatpush1.msra.mxu0 0.0
    %768 = vmatprep.subr.mxu0 0.0
    %769 = vmatpush1.msra.mxu0 0.0
    %770 = vmatprep.subr.mxu0 0.0
    %771 = vmatpush1.msra.mxu0 0.0
    %772 = vmatprep.subr.mxu0 0.0
    %773 = vmatpush1.msra.mxu0 0.0
    %774 = vmatprep.subr.mxu0 0.0
    %775 = vmatpush1.msra.mxu0 0.0
    %776 = vmatprep.subr.mxu0 0.0
    %777 = vmatpush1.msra.mxu0 0.0
    %778 = vmatprep.subr.mxu0 0.0
    %779 = vmatpush1.msra.mxu0 0.0
    %780 = vmatprep.subr.mxu0 0.0
    %781 = vmatpush1.msra.mxu0 0.0
    %782 = vmatprep.subr.mxu0 0.0
    %783 = vmatpush1.msra.mxu0 0.0
    %784 = vmatprep.subr.mxu0 0.0
    %785 = vmatpush1.msra.mxu0 0.0
    %786 = vmatprep.subr.mxu0 0.0
    %787 = vmatpush1.msra.mxu0 0.0
    %788 = vmatprep.mubr.f32.mxu0 0.0
    %789 = vmatmul.mubr.f32.gmra.mrb[0].mxu0 %v722
    %v790 = vpop.f32.mrb[0].mxu0
    %v791 = vadd.f32 %v716, %v790
    %v792 = vpop.f32.mrb[0].mxu0
    %793 = vdwg.mxu0
    %v794 = vadd.f32 %v791, %v405
    %v795 = vmul.f32 %v794, 0.5
    %v796 = vtanh.pop %v795
    %v797 = vmul.f32 %v796, 0.5
    %v798 = vadd.f32 %v797, 0.5
    %v799 = vtanh.pop %v794
    %v800 = vmul.f32 %v798, %v427
    %802 = vrot.lane.b32.xlu0 %v799, 64
    %v803 = vpop.permute.xlu0 %802
    %v805 = vmul.f32 %v798, %v803
    %807 = vrot.lane.b32.xlu0 %v805, 32
    %v808 = vpop.permute.xlu0 %807
    %v810 = vadd.f32 %v800, %v808
    %v811 = vtanh.pop %v810
    %813 = vrot.lane.b32.xlu0 %v811, 64
    %v814 = vpop.permute.xlu0 %813
    %v816 = vmul.f32 %v798, %v814
    %v819 = vunpack.c.l.s4 1966171168
    %v820 = vunpack.c.0.s8 %v819
    %v821 = vlaneseq
    %v822 = vshrl.u32 %v821, 7
    %v823 = vsub.s32 %v820, %v822
    %v824 = vrot.slane %v816, %v823
    %v825 = vcombine.high %v824, %v824
    %v827 = vunpack.c.l.s4 1966171168
    %v828 = vunpack.c.0.s8 %v827
    %v829 = vlaneseq
    %v830 = vshrl.u32 %v829, 7
    %v831 = vsub.s32 %v828, %v830
    %v832 = vrot.slane %v824, %v831
    %v834 = vunpack.c.l.s4 1966171168
    %v835 = vunpack.c.0.s8 %v834
    %v836 = vlaneseq
    %v837 = vshrl.u32 %v836, 7
    %v838 = vsub.s32 %v835, %v837
    %v839 = vrot.slane %v825, %v838
    %v840 = vlaneseq
    %v841 = vshrl.u32 %v840, 7
    %v842 = vsub.s32 0, %v841
    %v843 = vrot.slane %v832, %v842
    %v844 = vlaneseq
    %v845 = vshrl.u32 %v844, 7
    %v846 = vsub.s32 0, %v845
    %v847 = vrot.slane %v839, %v846
    %848 = vrot.lane.b32.xlu0 %v843, 32
    %v849 = vpop.permute.xlu0 %848
    %850 = vrot.lane.b32.xlu0 %v847, 32
    %v851 = vpop.permute.xlu0 %850
    %854 = vst.msk [vmem:[#allocation7 + $0x1] sm:$0x1] %vm471, %v849
    %855 = vst.msk [vmem:[#allocation7 + $0x9] sm:$0x1] %vm471, %v851
    %v856 = vld [vmem:[%s0 + $0x2] sm:$0x1]
    %v857 = vld [vmem:[%s0 + $0xa] sm:$0x1]
    %858 = vmatprep.subr.mxu0 0.0
    %859 = vmatpush1.msra.mxu0 %v49
    %860 = vmatprep.subr.mxu0 0.0
    %861 = vmatpush1.msra.mxu0 %v50
    %862 = vmatprep.subr.mxu0 0.0
    %863 = vmatpush1.msra.mxu0 %v51
    %864 = vmatprep.subr.mxu0 0.0
    %865 = vmatpush1.msra.mxu0 %v52
    %866 = vmatprep.subr.mxu0 0.0
    %867 = vmatpush1.msra.mxu0 0.0
    %868 = vmatprep.subr.mxu0 0.0
    %869 = vmatpush1.msra.mxu0 0.0
    %870 = vmatprep.subr.mxu0 0.0
    %871 = vmatpush1.msra.mxu0 0.0
    %872 = vmatprep.subr.mxu0 0.0
    %873 = vmatpush1.msra.mxu0 0.0
    %874 = vmatprep.subr.mxu0 0.0
    %875 = vmatpush1.msra.mxu0 0.0
    %876 = vmatprep.subr.mxu0 0.0
    %877 = vmatpush1.msra.mxu0 0.0
    %878 = vmatprep.subr.mxu0 0.0
    %879 = vmatpush1.msra.mxu0 0.0
    %880 = vmatprep.subr.mxu0 0.0
    %881 = vmatpush1.msra.mxu0 0.0
    %882 = vmatprep.subr.mxu0 0.0
    %883 = vmatpush1.msra.mxu0 0.0
    %884 = vmatprep.subr.mxu0 0.0
    %885 = vmatpush1.msra.mxu0 0.0
    %886 = vmatprep.subr.mxu0 0.0
    %887 = vmatpush1.msra.mxu0 0.0
    %888 = vmatprep.subr.mxu0 0.0
    %889 = vmatpush1.msra.mxu0 0.0
    %890 = vmatprep.subr.mxu0 0.0
    %891 = vmatpush1.msra.mxu0 0.0
    %892 = vmatprep.subr.mxu0 0.0
    %893 = vmatpush1.msra.mxu0 0.0
    %894 = vmatprep.subr.mxu0 0.0
    %895 = vmatpush1.msra.mxu0 0.0
    %896 = vmatprep.subr.mxu0 0.0
    %897 = vmatpush1.msra.mxu0 0.0
    %898 = vmatprep.subr.mxu0 0.0
    %899 = vmatpush1.msra.mxu0 0.0
    %900 = vmatprep.subr.mxu0 0.0
    %901 = vmatpush1.msra.mxu0 0.0
    %902 = vmatprep.subr.mxu0 0.0
    %903 = vmatpush1.msra.mxu0 0.0
    %904 = vmatprep.subr.mxu0 0.0
    %905 = vmatpush1.msra.mxu0 0.0
    %906 = vmatprep.subr.mxu0 0.0
    %907 = vmatpush1.msra.mxu0 0.0
    %908 = vmatprep.subr.mxu0 0.0
    %909 = vmatpush1.msra.mxu0 0.0
    %910 = vmatprep.subr.mxu0 0.0
    %911 = vmatpush1.msra.mxu0 0.0
    %912 = vmatprep.subr.mxu0 0.0
    %913 = vmatpush1.msra.mxu0 0.0
    %914 = vmatprep.subr.mxu0 0.0
    %915 = vmatpush1.msra.mxu0 0.0
    %916 = vmatprep.subr.mxu0 0.0
    %917 = vmatpush1.msra.mxu0 0.0
    %918 = vmatprep.subr.mxu0 0.0
    %919 = vmatpush1.msra.mxu0 0.0
    %920 = vmatprep.subr.mxu0 0.0
    %921 = vmatpush1.msra.mxu0 0.0
    %922 = vmatprep.mubr.f32.mxu0 0.0
    %923 = vmatmul.mubr.f32.gmra.mrb[0].mxu0 %v722
    %v924 = vpop.f32.mrb[0].mxu0
    %v925 = vadd.f32 0.0, %v924
    %v926 = vpop.f32.mrb[0].mxu0
    %927 = vdwg.mxu0
    %v930 = vrot.slane %v857, 7
    %v931 = vsel %vm146, %v930, %v856
    %v932 = vsel %vm69, %v931, 0
    %934 = vmatprep.subr.mxu0 0.0
    %935 = vmatpush1.msra.mxu0 %v45
    %936 = vmatprep.subr.mxu0 0.0
    %937 = vmatpush1.msra.mxu0 %v46
    %938 = vmatprep.subr.mxu0 0.0
    %939 = vmatpush1.msra.mxu0 %v47
    %940 = vmatprep.subr.mxu0 0.0
    %941 = vmatpush1.msra.mxu0 %v48
    %942 = vmatprep.subr.mxu0 0.0
    %943 = vmatpush1.msra.mxu0 0.0
    %944 = vmatprep.subr.mxu0 0.0
    %945 = vmatpush1.msra.mxu0 0.0
    %946 = vmatprep.subr.mxu0 0.0
    %947 = vmatpush1.msra.mxu0 0.0
    %948 = vmatprep.subr.mxu0 0.0
    %949 = vmatpush1.msra.mxu0 0.0
    %950 = vmatprep.subr.mxu0 0.0
    %951 = vmatpush1.msra.mxu0 0.0
    %952 = vmatprep.subr.mxu0 0.0
    %953 = vmatpush1.msra.mxu0 0.0
    %954 = vmatprep.subr.mxu0 0.0
    %955 = vmatpush1.msra.mxu0 0.0
    %956 = vmatprep.subr.mxu0 0.0
    %957 = vmatpush1.msra.mxu0 0.0
    %958 = vmatprep.subr.mxu0 0.0
    %959 = vmatpush1.msra.mxu0 0.0
    %960 = vmatprep.subr.mxu0 0.0
    %961 = vmatpush1.msra.mxu0 0.0
    %962 = vmatprep.subr.mxu0 0.0
    %963 = vmatpush1.msra.mxu0 0.0
    %964 = vmatprep.subr.mxu0 0.0
    %965 = vmatpush1.msra.mxu0 0.0
    %966 = vmatprep.subr.mxu0 0.0
    %967 = vmatpush1.msra.mxu0 0.0
    %968 = vmatprep.subr.mxu0 0.0
    %969 = vmatpush1.msra.mxu0 0.0
    %970 = vmatprep.subr.mxu0 0.0
    %971 = vmatpush1.msra.mxu0 0.0
    %972 = vmatprep.subr.mxu0 0.0
    %973 = vmatpush1.msra.mxu0 0.0
    %974 = vmatprep.subr.mxu0 0.0
    %975 = vmatpush1.msra.mxu0 0.0
    %976 = vmatprep.subr.mxu0 0.0
    %977 = vmatpush1.msra.mxu0 0.0
    %978 = vmatprep.subr.mxu0 0.0
    %979 = vmatpush1.msra.mxu0 0.0
    %980 = vmatprep.subr.mxu0 0.0
    %981 = vmatpush1.msra.mxu0 0.0
    %982 = vmatprep.subr.mxu0 0.0
    %983 = vmatpush1.msra.mxu0 0.0
    %984 = vmatprep.subr.mxu0 0.0
    %985 = vmatpush1.msra.mxu0 0.0
    %986 = vmatprep.subr.mxu0 0.0
    %987 = vmatpush1.msra.mxu0 0.0
    %988 = vmatprep.subr.mxu0 0.0
    %989 = vmatpush1.msra.mxu0 0.0
    %990 = vmatprep.subr.mxu0 0.0
    %991 = vmatpush1.msra.mxu0 0.0
    %992 = vmatprep.subr.mxu0 0.0
    %993 = vmatpush1.msra.mxu0 0.0
    %994 = vmatprep.subr.mxu0 0.0
    %995 = vmatpush1.msra.mxu0 0.0
    %996 = vmatprep.subr.mxu0 0.0
    %997 = vmatpush1.msra.mxu0 0.0
    %998 = vmatprep.mubr.f32.mxu0 0.0
    %999 = vmatmul.mubr.f32.gmra.mrb[0].mxu0 %v932
    %v1000 = vpop.f32.mrb[0].mxu0
    %v1001 = vadd.f32 %v925, %v1000
    %v1002 = vpop.f32.mrb[0].mxu0
    %1003 = vdwg.mxu0
    %v1004 = vadd.f32 %v1001, %v224
    %v1005 = vmul.f32 %v1004, 0.5
    %v1006 = vtanh.pop %v1005
    %v1007 = vmul.f32 %v1006, 0.5
    %v1008 = vadd.f32 %v1007, 0.5
    %v1009 = vtanh.pop %v1004
    %v1010 = vmul.f32 %v1008, %v638
    %1012 = vrot.lane.b32.xlu0 %v1009, 64
    %v1013 = vpop.permute.xlu0 %1012
    %v1015 = vmul.f32 %v1008, %v1013
    %1017 = vrot.lane.b32.xlu0 %v1015, 32
    %v1018 = vpop.permute.xlu0 %1017
    %v1020 = vadd.f32 %v1010, %v1018
    %v1021 = vtanh.pop %v1020
    %1023 = vrot.lane.b32.xlu0 %v1021, 64
    %v1024 = vpop.permute.xlu0 %1023
    %v1026 = vmul.f32 %v1008, %v1024
    %1027 = vrot.lane.b32.xlu0 %v816, 32
    %v1028 = vpop.permute.xlu0 %1027
    %v1029 = vsel %vm69, %v1028, 0
    %1031 = vmatprep.subr.mxu0 0.0
    %1032 = vmatpush1.msra.mxu0 %v58
    %1033 = vmatprep.subr.mxu0 0.0
    %1034 = vmatpush1.msra.mxu0 %v59
    %1035 = vmatprep.subr.mxu0 0.0
    %1036 = vmatpush1.msra.mxu0 %v60
    %1037 = vmatprep.subr.mxu0 0.0
    %1038 = vmatpush1.msra.mxu0 %v61
    %1039 = vmatprep.subr.mxu0 0.0
    %1040 = vmatpush1.msra.mxu0 0.0
    %1041 = vmatprep.subr.mxu0 0.0
    %1042 = vmatpush1.msra.mxu0 0.0
    %1043 = vmatprep.subr.mxu0 0.0
    %1044 = vmatpush1.msra.mxu0 0.0
    %1045 = vmatprep.subr.mxu0 0.0
    %1046 = vmatpush1.msra.mxu0 0.0
    %1047 = vmatprep.subr.mxu0 0.0
    %1048 = vmatpush1.msra.mxu0 0.0
    %1049 = vmatprep.subr.mxu0 0.0
    %1050 = vmatpush1.msra.mxu0 0.0
    %1051 = vmatprep.subr.mxu0 0.0
    %1052 = vmatpush1.msra.mxu0 0.0
    %1053 = vmatprep.subr.mxu0 0.0
    %1054 = vmatpush1.msra.mxu0 0.0
    %1055 = vmatprep.subr.mxu0 0.0
    %1056 = vmatpush1.msra.mxu0 0.0
    %1057 = vmatprep.subr.mxu0 0.0
    %1058 = vmatpush1.msra.mxu0 0.0
    %1059 = vmatprep.subr.mxu0 0.0
    %1060 = vmatpush1.msra.mxu0 0.0
    %1061 = vmatprep.subr.mxu0 0.0
    %1062 = vmatpush1.msra.mxu0 0.0
    %1063 = vmatprep.subr.mxu0 0.0
    %1064 = vmatpush1.msra.mxu0 0.0
    %1065 = vmatprep.subr.mxu0 0.0
    %1066 = vmatpush1.msra.mxu0 0.0
    %1067 = vmatprep.subr.mxu0 0.0
    %1068 = vmatpush1.msra.mxu0 0.0
    %1069 = vmatprep.subr.mxu0 0.0
    %1070 = vmatpush1.msra.mxu0 0.0
    %1071 = vmatprep.subr.mxu0 0.0
    %1072 = vmatpush1.msra.mxu0 0.0
    %1073 = vmatprep.subr.mxu0 0.0
    %1074 = vmatpush1.msra.mxu0 0.0
    %1075 = vmatprep.subr.mxu0 0.0
    %1076 = vmatpush1.msra.mxu0 0.0
    %1077 = vmatprep.subr.mxu0 0.0
    %1078 = vmatpush1.msra.mxu0 0.0
    %1079 = vmatprep.subr.mxu0 0.0
    %1080 = vmatpush1.msra.mxu0 0.0
    %1081 = vmatprep.subr.mxu0 0.0
    %1082 = vmatpush1.msra.mxu0 0.0
    %1083 = vmatprep.subr.mxu0 0.0
    %1084 = vmatpush1.msra.mxu0 0.0
    %1085 = vmatprep.subr.mxu0 0.0
    %1086 = vmatpush1.msra.mxu0 0.0
    %1087 = vmatprep.subr.mxu0 0.0
    %1088 = vmatpush1.msra.mxu0 0.0
    %1089 = vmatprep.subr.mxu0 0.0
    %1090 = vmatpush1.msra.mxu0 0.0
    %1091 = vmatprep.subr.mxu0 0.0
    %1092 = vmatpush1.msra.mxu0 0.0
    %1093 = vmatprep.subr.mxu0 0.0
    %1094 = vmatpush1.msra.mxu0 0.0
    %1095 = vmatprep.mubr.f32.mxu0 0.0
    %1096 = vmatmul.mubr.f32.gmra.mrb[0].mxu0 %v1029
    %v1097 = vpop.f32.mrb[0].mxu0
    %v1098 = vadd.f32 0.0, %v1097
    %v1099 = vpop.f32.mrb[0].mxu0
    %1100 = vdwg.mxu0
    %1102 = vrot.lane.b32.xlu0 %v1026, 32
    %v1103 = vpop.permute.xlu0 %1102
    %v1104 = vsel %vm69, %v1103, 0
    %1106 = vmatprep.subr.mxu0 0.0
    %1107 = vmatpush1.msra.mxu0 %v54
    %1108 = vmatprep.subr.mxu0 0.0
    %1109 = vmatpush1.msra.mxu0 %v55
    %1110 = vmatprep.subr.mxu0 0.0
    %1111 = vmatpush1.msra.mxu0 %v56
    %1112 = vmatprep.subr.mxu0 0.0
    %1113 = vmatpush1.msra.mxu0 %v57
    %1114 = vmatprep.subr.mxu0 0.0
    %1115 = vmatpush1.msra.mxu0 0.0
    %1116 = vmatprep.subr.mxu0 0.0
    %1117 = vmatpush1.msra.mxu0 0.0
    %1118 = vmatprep.subr.mxu0 0.0
    %1119 = vmatpush1.msra.mxu0 0.0
    %1120 = vmatprep.subr.mxu0 0.0
    %1121 = vmatpush1.msra.mxu0 0.0
    %1122 = vmatprep.subr.mxu0 0.0
    %1123 = vmatpush1.msra.mxu0 0.0
    %1124 = vmatprep.subr.mxu0 0.0
    %1125 = vmatpush1.msra.mxu0 0.0
    %1126 = vmatprep.subr.mxu0 0.0
    %1127 = vmatpush1.msra.mxu0 0.0
    %1128 = vmatprep.subr.mxu0 0.0
    %1129 = vmatpush1.msra.mxu0 0.0
    %1130 = vmatprep.subr.mxu0 0.0
    %1131 = vmatpush1.msra.mxu0 0.0
    %1132 = vmatprep.subr.mxu0 0.0
    %1133 = vmatpush1.msra.mxu0 0.0
    %1134 = vmatprep.subr.mxu0 0.0
    %1135 = vmatpush1.msra.mxu0 0.0
    %1136 = vmatprep.subr.mxu0 0.0
    %1137 = vmatpush1.msra.mxu0 0.0
    %1138 = vmatprep.subr.mxu0 0.0
    %1139 = vmatpush1.msra.mxu0 0.0
    %1140 = vmatprep.subr.mxu0 0.0
    %1141 = vmatpush1.msra.mxu0 0.0
    %1142 = vmatprep.subr.mxu0 0.0
    %1143 = vmatpush1.msra.mxu0 0.0
    %1144 = vmatprep.subr.mxu0 0.0
    %1145 = vmatpush1.msra.mxu0 0.0
    %1146 = vmatprep.subr.mxu0 0.0
    %1147 = vmatpush1.msra.mxu0 0.0
    %1148 = vmatprep.subr.mxu0 0.0
    %1149 = vmatpush1.msra.mxu0 0.0
    %1150 = vmatprep.subr.mxu0 0.0
    %1151 = vmatpush1.msra.mxu0 0.0
    %1152 = vmatprep.subr.mxu0 0.0
    %1153 = vmatpush1.msra.mxu0 0.0
    %1154 = vmatprep.subr.mxu0 0.0
    %1155 = vmatpush1.msra.mxu0 0.0
    %1156 = vmatprep.subr.mxu0 0.0
    %1157 = vmatpush1.msra.mxu0 0.0
    %1158 = vmatprep.subr.mxu0 0.0
    %1159 = vmatpush1.msra.mxu0 0.0
    %1160 = vmatprep.subr.mxu0 0.0
    %1161 = vmatpush1.msra.mxu0 0.0
    %1162 = vmatprep.subr.mxu0 0.0
    %1163 = vmatpush1.msra.mxu0 0.0
    %1164 = vmatprep.subr.mxu0 0.0
    %1165 = vmatpush1.msra.mxu0 0.0
    %1166 = vmatprep.subr.mxu0 0.0
    %1167 = vmatpush1.msra.mxu0 0.0
    %1168 = vmatprep.subr.mxu0 0.0
    %1169 = vmatpush1.msra.mxu0 0.0
    %1170 = vmatprep.mubr.f32.mxu0 0.0
    %1171 = vmatmul.mubr.f32.gmra.mrb[0].mxu0 %v1104
    %v1172 = vpop.f32.mrb[0].mxu0
    %v1173 = vadd.f32 %v1098, %v1172
    %v1174 = vpop.f32.mrb[0].mxu0
    %1175 = vdwg.mxu0
    %v1176 = vadd.f32 %v1173, %v405
    %v1177 = vmul.f32 %v1176, 0.5
    %v1178 = vtanh.pop %v1177
    %v1179 = vmul.f32 %v1178, 0.5
    %v1180 = vadd.f32 %v1179, 0.5
    %v1181 = vtanh.pop %v1176
    %v1182 = vmul.f32 %v1180, %v810
    %1184 = vrot.lane.b32.xlu0 %v1181, 64
    %v1185 = vpop.permute.xlu0 %1184
    %v1187 = vmul.f32 %v1180, %v1185
    %1189 = vrot.lane.b32.xlu0 %v1187, 32
    %v1190 = vpop.permute.xlu0 %1189
    %v1192 = vadd.f32 %v1182, %v1190
    %v1193 = vtanh.pop %v1192
    %1195 = vrot.lane.b32.xlu0 %v1193, 64
    %v1196 = vpop.permute.xlu0 %1195
    %v1198 = vmul.f32 %v1180, %v1196
    %v1201 = vunpack.c.l.s4 1966171168
    %v1202 = vunpack.c.0.s8 %v1201
    %v1203 = vlaneseq
    %v1204 = vshrl.u32 %v1203, 7
    %v1205 = vsub.s32 %v1202, %v1204
    %v1206 = vrot.slane %v1198, %v1205
    %v1207 = vcombine.high %v1206, %v1206
    %v1209 = vunpack.c.l.s4 1966171168
    %v1210 = vunpack.c.0.s8 %v1209
    %v1211 = vlaneseq
    %v1212 = vshrl.u32 %v1211, 7
    %v1213 = vsub.s32 %v1210, %v1212
    %v1214 = vrot.slane %v1206, %v1213
    %v1216 = vunpack.c.l.s4 1966171168
    %v1217 = vunpack.c.0.s8 %v1216
    %v1218 = vlaneseq
    %v1219 = vshrl.u32 %v1218, 7
    %v1220 = vsub.s32 %v1217, %v1219
    %v1221 = vrot.slane %v1207, %v1220
    %v1222 = vlaneseq
    %v1223 = vshrl.u32 %v1222, 7
    %v1224 = vsub.s32 0, %v1223
    %v1225 = vrot.slane %v1214, %v1224
    %v1226 = vlaneseq
    %v1227 = vshrl.u32 %v1226, 7
    %v1228 = vsub.s32 0, %v1227
    %v1229 = vrot.slane %v1221, %v1228
    %1230 = vrot.lane.b32.xlu0 %v1225, 32
    %v1231 = vpop.permute.xlu0 %1230
    %1232 = vrot.lane.b32.xlu0 %v1229, 32
    %v1233 = vpop.permute.xlu0 %1232
    %1236 = vst.msk [vmem:[#allocation7 + $0x2] sm:$0x1] %vm471, %v1231
    %1237 = vst.msk [vmem:[#allocation7 + $0xa] sm:$0x1] %vm471, %v1233
    %v1238 = vld [vmem:[%s0 + $0x3] sm:$0x1]
    %v1239 = vld [vmem:[%s0 + $0xb] sm:$0x1]
    %1240 = vmatprep.subr.mxu0 0.0
    %1241 = vmatpush1.msra.mxu0 %v49
    %1242 = vmatprep.subr.mxu0 0.0
    %1243 = vmatpush1.msra.mxu0 %v50
    %1244 = vmatprep.subr.mxu0 0.0
    %1245 = vmatpush1.msra.mxu0 %v51
    %1246 = vmatprep.subr.mxu0 0.0
    %1247 = vmatpush1.msra.mxu0 %v52
    %1248 = vmatprep.subr.mxu0 0.0
    %1249 = vmatpush1.msra.mxu0 0.0
    %1250 = vmatprep.subr.mxu0 0.0
    %1251 = vmatpush1.msra.mxu0 0.0
    %1252 = vmatprep.subr.mxu0 0.0
    %1253 = vmatpush1.msra.mxu0 0.0
    %1254 = vmatprep.subr.mxu0 0.0
    %1255 = vmatpush1.msra.mxu0 0.0
    %1256 = vmatprep.subr.mxu0 0.0
    %1257 = vmatpush1.msra.mxu0 0.0
    %1258 = vmatprep.subr.mxu0 0.0
    %1259 = vmatpush1.msra.mxu0 0.0
    %1260 = vmatprep.subr.mxu0 0.0
    %1261 = vmatpush1.msra.mxu0 0.0
    %1262 = vmatprep.subr.mxu0 0.0
    %1263 = vmatpush1.msra.mxu0 0.0
    %1264 = vmatprep.subr.mxu0 0.0
    %1265 = vmatpush1.msra.mxu0 0.0
    %1266 = vmatprep.subr.mxu0 0.0
    %1267 = vmatpush1.msra.mxu0 0.0
    %1268 = vmatprep.subr.mxu0 0.0
    %1269 = vmatpush1.msra.mxu0 0.0
    %1270 = vmatprep.subr.mxu0 0.0
    %1271 = vmatpush1.msra.mxu0 0.0
    %1272 = vmatprep.subr.mxu0 0.0
    %1273 = vmatpush1.msra.mxu0 0.0
    %1274 = vmatprep.subr.mxu0 0.0
    %1275 = vmatpush1.msra.mxu0 0.0
    %1276 = vmatprep.subr.mxu0 0.0
    %1277 = vmatpush1.msra.mxu0 0.0
    %1278 = vmatprep.subr.mxu0 0.0
    %1279 = vmatpush1.msra.mxu0 0.0
    %1280 = vmatprep.subr.mxu0 0.0
    %1281 = vmatpush1.msra.mxu0 0.0
    %1282 = vmatprep.subr.mxu0 0.0
    %1283 = vmatpush1.msra.mxu0 0.0
    %1284 = vmatprep.subr.mxu0 0.0
    %1285 = vmatpush1.msra.mxu0 0.0
    %1286 = vmatprep.subr.mxu0 0.0
    %1287 = vmatpush1.msra.mxu0 0.0
    %1288 = vmatprep.subr.mxu0 0.0
    %1289 = vmatpush1.msra.mxu0 0.0
    %1290 = vmatprep.subr.mxu0 0.0
    %1291 = vmatpush1.msra.mxu0 0.0
    %1292 = vmatprep.subr.mxu0 0.0
    %1293 = vmatpush1.msra.mxu0 0.0
    %1294 = vmatprep.subr.mxu0 0.0
    %1295 = vmatpush1.msra.mxu0 0.0
    %1296 = vmatprep.subr.mxu0 0.0
    %1297 = vmatpush1.msra.mxu0 0.0
    %1298 = vmatprep.subr.mxu0 0.0
    %1299 = vmatpush1.msra.mxu0 0.0
    %1300 = vmatprep.subr.mxu0 0.0
    %1301 = vmatpush1.msra.mxu0 0.0
    %1302 = vmatprep.subr.mxu0 0.0
    %1303 = vmatpush1.msra.mxu0 0.0
    %1304 = vmatprep.mubr.f32.mxu0 0.0
    %1305 = vmatmul.mubr.f32.gmra.mrb[0].mxu0 %v1104
    %v1306 = vpop.f32.mrb[0].mxu0
    %v1307 = vadd.f32 0.0, %v1306
    %v1308 = vpop.f32.mrb[0].mxu0
    %1309 = vdwg.mxu0
    %v1312 = vrot.slane %v1239, 7
    %v1313 = vsel %vm146, %v1312, %v1238
    %v1314 = vsel %vm69, %v1313, 0
    %1316 = vmatprep.subr.mxu0 0.0
    %1317 = vmatpush1.msra.mxu0 %v45
    %1318 = vmatprep.subr.mxu0 0.0
    %1319 = vmatpush1.msra.mxu0 %v46
    %1320 = vmatprep.subr.mxu0 0.0
    %1321 = vmatpush1.msra.mxu0 %v47
    %1322 = vmatprep.subr.mxu0 0.0
    %1323 = vmatpush1.msra.mxu0 %v48
    %1324 = vmatprep.subr.mxu0 0.0
    %1325 = vmatpush1.msra.mxu0 0.0
    %1326 = vmatprep.subr.mxu0 0.0
    %1327 = vmatpush1.msra.mxu0 0.0
    %1328 = vmatprep.subr.mxu0 0.0
    %1329 = vmatpush1.msra.mxu0 0.0
    %1330 = vmatprep.subr.mxu0 0.0
    %1331 = vmatpush1.msra.mxu0 0.0
    %1332 = vmatprep.subr.mxu0 0.0
    %1333 = vmatpush1.msra.mxu0 0.0
    %1334 = vmatprep.subr.mxu0 0.0
    %1335 = vmatpush1.msra.mxu0 0.0
    %1336 = vmatprep.subr.mxu0 0.0
    %1337 = vmatpush1.msra.mxu0 0.0
    %1338 = vmatprep.subr.mxu0 0.0
    %1339 = vmatpush1.msra.mxu0 0.0
    %1340 = vmatprep.subr.mxu0 0.0
    %1341 = vmatpush1.msra.mxu0 0.0
    %1342 = vmatprep.subr.mxu0 0.0
    %1343 = vmatpush1.msra.mxu0 0.0
    %1344 = vmatprep.subr.mxu0 0.0
    %1345 = vmatpush1.msra.mxu0 0.0
    %1346 = vmatprep.subr.mxu0 0.0
    %1347 = vmatpush1.msra.mxu0 0.0
    %1348 = vmatprep.subr.mxu0 0.0
    %1349 = vmatpush1.msra.mxu0 0.0
    %1350 = vmatprep.subr.mxu0 0.0
    %1351 = vmatpush1.msra.mxu0 0.0
    %1352 = vmatprep.subr.mxu0 0.0
    %1353 = vmatpush1.msra.mxu0 0.0
    %1354 = vmatprep.subr.mxu0 0.0
    %1355 = vmatpush1.msra.mxu0 0.0
    %1356 = vmatprep.subr.mxu0 0.0
    %1357 = vmatpush1.msra.mxu0 0.0
    %1358 = vmatprep.subr.mxu0 0.0
    %1359 = vmatpush1.msra.mxu0 0.0
    %1360 = vmatprep.subr.mxu0 0.0
    %1361 = vmatpush1.msra.mxu0 0.0
    %1362 = vmatprep.subr.mxu0 0.0
    %1363 = vmatpush1.msra.mxu0 0.0
    %1364 = vmatprep.subr.mxu0 0.0
    %1365 = vmatpush1.msra.mxu0 0.0
    %1366 = vmatprep.subr.mxu0 0.0
    %1367 = vmatpush1.msra.mxu0 0.0
    %1368 = vmatprep.subr.mxu0 0.0
    %1369 = vmatpush1.msra.mxu0 0.0
    %1370 = vmatprep.subr.mxu0 0.0
    %1371 = vmatpush1.msra.mxu0 0.0
    %1372 = vmatprep.subr.mxu0 0.0
    %1373 = vmatpush1.msra.mxu0 0.0
    %1374 = vmatprep.subr.mxu0 0.0
    %1375 = vmatpush1.msra.mxu0 0.0
    %1376 = vmatprep.subr.mxu0 0.0
    %1377 = vmatpush1.msra.mxu0 0.0
    %1378 = vmatprep.subr.mxu0 0.0
    %1379 = vmatpush1.msra.mxu0 0.0
    %1380 = vmatprep.mubr.f32.mxu0 0.0
    %1381 = vmatmul.mubr.f32.gmra.mrb[0].mxu0 %v1314
    %v1382 = vpop.f32.mrb[0].mxu0
    %v1383 = vadd.f32 %v1307, %v1382
    %v1384 = vpop.f32.mrb[0].mxu0
    %1385 = vdwg.mxu0
    %v1386 = vadd.f32 %v1383, %v224
    %v1387 = vmul.f32 %v1386, 0.5
    %v1388 = vtanh.pop %v1387
    %v1389 = vmul.f32 %v1388, 0.5
    %v1390 = vadd.f32 %v1389, 0.5
    %v1391 = vtanh.pop %v1386
    %v1392 = vmul.f32 %v1390, %v1020
    %1394 = vrot.lane.b32.xlu0 %v1391, 64
    %v1395 = vpop.permute.xlu0 %1394
    %v1397 = vmul.f32 %v1390, %v1395
    %1399 = vrot.lane.b32.xlu0 %v1397, 32
    %v1400 = vpop.permute.xlu0 %1399
    %v1402 = vadd.f32 %v1392, %v1400
    %v1403 = vtanh.pop %v1402
    %1405 = vrot.lane.b32.xlu0 %v1403, 64
    %v1406 = vpop.permute.xlu0 %1405
    %v1408 = vmul.f32 %v1390, %v1406
    %1409 = vrot.lane.b32.xlu0 %v1198, 32
    %v1410 = vpop.permute.xlu0 %1409
    %v1411 = vsel %vm69, %v1410, 0
    %1413 = vmatprep.subr.mxu0 0.0
    %1414 = vmatpush1.msra.mxu0 %v58
    %1415 = vmatprep.subr.mxu0 0.0
    %1416 = vmatpush1.msra.mxu0 %v59
    %1417 = vmatprep.subr.mxu0 0.0
    %1418 = vmatpush1.msra.mxu0 %v60
    %1419 = vmatprep.subr.mxu0 0.0
    %1420 = vmatpush1.msra.mxu0 %v61
    %1421 = vmatprep.subr.mxu0 0.0
    %1422 = vmatpush1.msra.mxu0 0.0
    %1423 = vmatprep.subr.mxu0 0.0
    %1424 = vmatpush1.msra.mxu0 0.0
    %1425 = vmatprep.subr.mxu0 0.0
    %1426 = vmatpush1.msra.mxu0 0.0
    %1427 = vmatprep.subr.mxu0 0.0
    %1428 = vmatpush1.msra.mxu0 0.0
    %1429 = vmatprep.subr.mxu0 0.0
    %1430 = vmatpush1.msra.mxu0 0.0
    %1431 = vmatprep.subr.mxu0 0.0
    %1432 = vmatpush1.msra.mxu0 0.0
    %1433 = vmatprep.subr.mxu0 0.0
    %1434 = vmatpush1.msra.mxu0 0.0
    %1435 = vmatprep.subr.mxu0 0.0
    %1436 = vmatpush1.msra.mxu0 0.0
    %1437 = vmatprep.subr.mxu0 0.0
    %1438 = vmatpush1.msra.mxu0 0.0
    %1439 = vmatprep.subr.mxu0 0.0
    %1440 = vmatpush1.msra.mxu0 0.0
    %1441 = vmatprep.subr.mxu0 0.0
    %1442 = vmatpush1.msra.mxu0 0.0
    %1443 = vmatprep.subr.mxu0 0.0
    %1444 = vmatpush1.msra.mxu0 0.0
    %1445 = vmatprep.subr.mxu0 0.0
    %1446 = vmatpush1.msra.mxu0 0.0
    %1447 = vmatprep.subr.mxu0 0.0
    %1448 = vmatpush1.msra.mxu0 0.0
    %1449 = vmatprep.subr.mxu0 0.0
    %1450 = vmatpush1.msra.mxu0 0.0
    %1451 = vmatprep.subr.mxu0 0.0
    %1452 = vmatpush1.msra.mxu0 0.0
    %1453 = vmatprep.subr.mxu0 0.0
    %1454 = vmatpush1.msra.mxu0 0.0
    %1455 = vmatprep.subr.mxu0 0.0
    %1456 = vmatpush1.msra.mxu0 0.0
    %1457 = vmatprep.subr.mxu0 0.0
    %1458 = vmatpush1.msra.mxu0 0.0
    %1459 = vmatprep.subr.mxu0 0.0
    %1460 = vmatpush1.msra.mxu0 0.0
    %1461 = vmatprep.subr.mxu0 0.0
    %1462 = vmatpush1.msra.mxu0 0.0
    %1463 = vmatprep.subr.mxu0 0.0
    %1464 = vmatpush1.msra.mxu0 0.0
    %1465 = vmatprep.subr.mxu0 0.0
    %1466 = vmatpush1.msra.mxu0 0.0
    %1467 = vmatprep.subr.mxu0 0.0
    %1468 = vmatpush1.msra.mxu0 0.0
    %1469 = vmatprep.subr.mxu0 0.0
    %1470 = vmatpush1.msra.mxu0 0.0
    %1471 = vmatprep.subr.mxu0 0.0
    %1472 = vmatpush1.msra.mxu0 0.0
    %1473 = vmatprep.subr.mxu0 0.0
    %1474 = vmatpush1.msra.mxu0 0.0
    %1475 = vmatprep.subr.mxu0 0.0
    %1476 = vmatpush1.msra.mxu0 0.0
    %1477 = vmatprep.mubr.f32.mxu0 0.0
    %1478 = vmatmul.mubr.f32.gmra.mrb[0].mxu0 %v1411
    %v1479 = vpop.f32.mrb[0].mxu0
    %v1480 = vadd.f32 0.0, %v1479
    %v1481 = vpop.f32.mrb[0].mxu0
    %1482 = vdwg.mxu0
    %1484 = vrot.lane.b32.xlu0 %v1408, 32
    %v1485 = vpop.permute.xlu0 %1484
    %v1486 = vsel %vm69, %v1485, 0
    %1488 = vmatprep.subr.mxu0 0.0
    %1489 = vmatpush1.msra.mxu0 %v54
    %1490 = vmatprep.subr.mxu0 0.0
    %1491 = vmatpush1.msra.mxu0 %v55
    %1492 = vmatprep.subr.mxu0 0.0
    %1493 = vmatpush1.msra.mxu0 %v56
    %1494 = vmatprep.subr.mxu0 0.0
    %1495 = vmatpush1.msra.mxu0 %v57
    %1496 = vmatprep.subr.mxu0 0.0
    %1497 = vmatpush1.msra.mxu0 0.0
    %1498 = vmatprep.subr.mxu0 0.0
    %1499 = vmatpush1.msra.mxu0 0.0
    %1500 = vmatprep.subr.mxu0 0.0
    %1501 = vmatpush1.msra.mxu0 0.0
    %1502 = vmatprep.subr.mxu0 0.0
    %1503 = vmatpush1.msra.mxu0 0.0
    %1504 = vmatprep.subr.mxu0 0.0
    %1505 = vmatpush1.msra.mxu0 0.0
    %1506 = vmatprep.subr.mxu0 0.0
    %1507 = vmatpush1.msra.mxu0 0.0
    %1508 = vmatprep.subr.mxu0 0.0
    %1509 = vmatpush1.msra.mxu0 0.0
    %1510 = vmatprep.subr.mxu0 0.0
    %1511 = vmatpush1.msra.mxu0 0.0
    %1512 = vmatprep.subr.mxu0 0.0
    %1513 = vmatpush1.msra.mxu0 0.0
    %1514 = vmatprep.subr.mxu0 0.0
    %1515 = vmatpush1.msra.mxu0 0.0
    %1516 = vmatprep.subr.mxu0 0.0
    %1517 = vmatpush1.msra.mxu0 0.0
    %1518 = vmatprep.subr.mxu0 0.0
    %1519 = vmatpush1.msra.mxu0 0.0
    %1520 = vmatprep.subr.mxu0 0.0
    %1521 = vmatpush1.msra.mxu0 0.0
    %1522 = vmatprep.subr.mxu0 0.0
    %1523 = vmatpush1.msra.mxu0 0.0
    %1524 = vmatprep.subr.mxu0 0.0
    %1525 = vmatpush1.msra.mxu0 0.0
    %1526 = vmatprep.subr.mxu0 0.0
    %1527 = vmatpush1.msra.mxu0 0.0
    %1528 = vmatprep.subr.mxu0 0.0
    %1529 = vmatpush1.msra.mxu0 0.0
    %1530 = vmatprep.subr.mxu0 0.0
    %1531 = vmatpush1.msra.mxu0 0.0
    %1532 = vmatprep.subr.mxu0 0.0
    %1533 = vmatpush1.msra.mxu0 0.0
    %1534 = vmatprep.subr.mxu0 0.0
    %1535 = vmatpush1.msra.mxu0 0.0
    %1536 = vmatprep.subr.mxu0 0.0
    %1537 = vmatpush1.msra.mxu0 0.0
    %1538 = vmatprep.subr.mxu0 0.0
    %1539 = vmatpush1.msra.mxu0 0.0
    %1540 = vmatprep.subr.mxu0 0.0
    %1541 = vmatpush1.msra.mxu0 0.0
    %1542 = vmatprep.subr.mxu0 0.0
    %1543 = vmatpush1.msra.mxu0 0.0
    %1544 = vmatprep.subr.mxu0 0.0
    %1545 = vmatpush1.msra.mxu0 0.0
    %1546 = vmatprep.subr.mxu0 0.0
    %1547 = vmatpush1.msra.mxu0 0.0
    %1548 = vmatprep.subr.mxu0 0.0
    %1549 = vmatpush1.msra.mxu0 0.0
    %1550 = vmatprep.subr.mxu0 0.0
    %1551 = vmatpush1.msra.mxu0 0.0
    %1552 = vmatprep.mubr.f32.mxu0 0.0
    %1553 = vmatmul.mubr.f32.gmra.mrb[0].mxu0 %v1486
    %v1554 = vpop.f32.mrb[0].mxu0
    %v1555 = vadd.f32 %v1480, %v1554
    %v1556 = vpop.f32.mrb[0].mxu0
    %1557 = vdwg.mxu0
    %v1558 = vadd.f32 %v1555, %v405
    %v1559 = vmul.f32 %v1558, 0.5
    %v1560 = vtanh.pop %v1559
    %v1561 = vmul.f32 %v1560, 0.5
    %v1562 = vadd.f32 %v1561, 0.5
    %v1563 = vtanh.pop %v1558
    %v1564 = vmul.f32 %v1562, %v1192
    %1566 = vrot.lane.b32.xlu0 %v1563, 64
    %v1567 = vpop.permute.xlu0 %1566
    %v1569 = vmul.f32 %v1562, %v1567
    %1571 = vrot.lane.b32.xlu0 %v1569, 32
    %v1572 = vpop.permute.xlu0 %1571
    %v1574 = vadd.f32 %v1564, %v1572
    %v1575 = vtanh.pop %v1574
    %1577 = vrot.lane.b32.xlu0 %v1575, 64
    %v1578 = vpop.permute.xlu0 %1577
    %v1580 = vmul.f32 %v1562, %v1578
    %v1583 = vunpack.c.l.s4 1966171168
    %v1584 = vunpack.c.0.s8 %v1583
    %v1585 = vlaneseq
    %v1586 = vshrl.u32 %v1585, 7
    %v1587 = vsub.s32 %v1584, %v1586
    %v1588 = vrot.slane %v1580, %v1587
    %v1589 = vcombine.high %v1588, %v1588
    %v1591 = vunpack.c.l.s4 1966171168
    %v1592 = vunpack.c.0.s8 %v1591
    %v1593 = vlaneseq
    %v1594 = vshrl.u32 %v1593, 7
    %v1595 = vsub.s32 %v1592, %v1594
    %v1596 = vrot.slane %v1588, %v1595
    %v1598 = vunpack.c.l.s4 1966171168
    %v1599 = vunpack.c.0.s8 %v1598
    %v1600 = vlaneseq
    %v1601 = vshrl.u32 %v1600, 7
    %v1602 = vsub.s32 %v1599, %v1601
    %v1603 = vrot.slane %v1589, %v1602
    %v1604 = vlaneseq
    %v1605 = vshrl.u32 %v1604, 7
    %v1606 = vsub.s32 0, %v1605
    %v1607 = vrot.slane %v1596, %v1606
    %v1608 = vlaneseq
    %v1609 = vshrl.u32 %v1608, 7
    %v1610 = vsub.s32 0, %v1609
    %v1611 = vrot.slane %v1603, %v1610
    %1612 = vrot.lane.b32.xlu0 %v1607, 32
    %v1613 = vpop.permute.xlu0 %1612
    %1614 = vrot.lane.b32.xlu0 %v1611, 32
    %v1615 = vpop.permute.xlu0 %1614
    %1618 = vst.msk [vmem:[#allocation7 + $0x3] sm:$0x1] %vm471, %v1613
    %1619 = vst.msk [vmem:[#allocation7 + $0xb] sm:$0x1] %vm471, %v1615
    %v1620 = vld [vmem:[%s0 + $0x4] sm:$0x1]
    %v1621 = vld [vmem:[%s0 + $0xc] sm:$0x1]
    %1622 = vmatprep.subr.mxu0 0.0
    %1623 = vmatpush1.msra.mxu0 %v49
    %1624 = vmatprep.subr.mxu0 0.0
    %1625 = vmatpush1.msra.mxu0 %v50
    %1626 = vmatprep.subr.mxu0 0.0
    %1627 = vmatpush1.msra.mxu0 %v51
    %1628 = vmatprep.subr.mxu0 0.0
    %1629 = vmatpush1.msra.mxu0 %v52
    %1630 = vmatprep.subr.mxu0 0.0
    %1631 = vmatpush1.msra.mxu0 0.0
    %1632 = vmatprep.subr.mxu0 0.0
    %1633 = vmatpush1.msra.mxu0 0.0
    %1634 = vmatprep.subr.mxu0 0.0
    %1635 = vmatpush1.msra.mxu0 0.0
    %1636 = vmatprep.subr.mxu0 0.0
    %1637 = vmatpush1.msra.mxu0 0.0
    %1638 = vmatprep.subr.mxu0 0.0
    %1639 = vmatpush1.msra.mxu0 0.0
    %1640 = vmatprep.subr.mxu0 0.0
    %1641 = vmatpush1.msra.mxu0 0.0
    %1642 = vmatprep.subr.mxu0 0.0
    %1643 = vmatpush1.msra.mxu0 0.0
    %1644 = vmatprep.subr.mxu0 0.0
    %1645 = vmatpush1.msra.mxu0 0.0
    %1646 = vmatprep.subr.mxu0 0.0
    %1647 = vmatpush1.msra.mxu0 0.0
    %1648 = vmatprep.subr.mxu0 0.0
    %1649 = vmatpush1.msra.mxu0 0.0
    %1650 = vmatprep.subr.mxu0 0.0
    %1651 = vmatpush1.msra.mxu0 0.0
    %1652 = vmatprep.subr.mxu0 0.0
    %1653 = vmatpush1.msra.mxu0 0.0
    %1654 = vmatprep.subr.mxu0 0.0
    %1655 = vmatpush1.msra.mxu0 0.0
    %1656 = vmatprep.subr.mxu0 0.0
    %1657 = vmatpush1.msra.mxu0 0.0
    %1658 = vmatprep.subr.mxu0 0.0
    %1659 = vmatpush1.msra.mxu0 0.0
    %1660 = vmatprep.subr.mxu0 0.0
    %1661 = vmatpush1.msra.mxu0 0.0
    %1662 = vmatprep.subr.mxu0 0.0
    %1663 = vmatpush1.msra.mxu0 0.0
    %1664 = vmatprep.subr.mxu0 0.0
    %1665 = vmatpush1.msra.mxu0 0.0
    %1666 = vmatprep.subr.mxu0 0.0
    %1667 = vmatpush1.msra.mxu0 0.0
    %1668 = vmatprep.subr.mxu0 0.0
    %1669 = vmatpush1.msra.mxu0 0.0
    %1670 = vmatprep.subr.mxu0 0.0
    %1671 = vmatpush1.msra.mxu0 0.0
    %1672 = vmatprep.subr.mxu0 0.0
    %1673 = vmatpush1.msra.mxu0 0.0
    %1674 = vmatprep.subr.mxu0 0.0
    %1675 = vmatpush1.msra.mxu0 0.0
    %1676 = vmatprep.subr.mxu0 0.0
    %1677 = vmatpush1.msra.mxu0 0.0
    %1678 = vmatprep.subr.mxu0 0.0
    %1679 = vmatpush1.msra.mxu0 0.0
    %1680 = vmatprep.subr.mxu0 0.0
    %1681 = vmatpush1.msra.mxu0 0.0
    %1682 = vmatprep.subr.mxu0 0.0
    %1683 = vmatpush1.msra.mxu0 0.0
    %1684 = vmatprep.subr.mxu0 0.0
    %1685 = vmatpush1.msra.mxu0 0.0
    %1686 = vmatprep.mubr.f32.mxu0 0.0
    %1687 = vmatmul.mubr.f32.gmra.mrb[0].mxu0 %v1486
    %v1688 = vpop.f32.mrb[0].mxu0
    %v1689 = vadd.f32 0.0, %v1688
    %v1690 = vpop.f32.mrb[0].mxu0
    %1691 = vdwg.mxu0
    %v1694 = vrot.slane %v1621, 7
    %v1695 = vsel %vm146, %v1694, %v1620
    %v1696 = vsel %vm69, %v1695, 0
    %1698 = vmatprep.subr.mxu0 0.0
    %1699 = vmatpush1.msra.mxu0 %v45
    %1700 = vmatprep.subr.mxu0 0.0
    %1701 = vmatpush1.msra.mxu0 %v46
    %1702 = vmatprep.subr.mxu0 0.0
    %1703 = vmatpush1.msra.mxu0 %v47
    %1704 = vmatprep.subr.mxu0 0.0
    %1705 = vmatpush1.msra.mxu0 %v48
    %1706 = vmatprep.subr.mxu0 0.0
    %1707 = vmatpush1.msra.mxu0 0.0
    %1708 = vmatprep.subr.mxu0 0.0
    %1709 = vmatpush1.msra.mxu0 0.0
    %1710 = vmatprep.subr.mxu0 0.0
    %1711 = vmatpush1.msra.mxu0 0.0
    %1712 = vmatprep.subr.mxu0 0.0
    %1713 = vmatpush1.msra.mxu0 0.0
    %1714 = vmatprep.subr.mxu0 0.0
    %1715 = vmatpush1.msra.mxu0 0.0
    %1716 = vmatprep.subr.mxu0 0.0
    %1717 = vmatpush1.msra.mxu0 0.0
    %1718 = vmatprep.subr.mxu0 0.0
    %1719 = vmatpush1.msra.mxu0 0.0
    %1720 = vmatprep.subr.mxu0 0.0
    %1721 = vmatpush1.msra.mxu0 0.0
    %1722 = vmatprep.subr.mxu0 0.0
    %1723 = vmatpush1.msra.mxu0 0.0
    %1724 = vmatprep.subr.mxu0 0.0
    %1725 = vmatpush1.msra.mxu0 0.0
    %1726 = vmatprep.subr.mxu0 0.0
    %1727 = vmatpush1.msra.mxu0 0.0
    %1728 = vmatprep.subr.mxu0 0.0
    %1729 = vmatpush1.msra.mxu0 0.0
    %1730 = vmatprep.subr.mxu0 0.0
    %1731 = vmatpush1.msra.mxu0 0.0
    %1732 = vmatprep.subr.mxu0 0.0
    %1733 = vmatpush1.msra.mxu0 0.0
    %1734 = vmatprep.subr.mxu0 0.0
    %1735 = vmatpush1.msra.mxu0 0.0
    %1736 = vmatprep.subr.mxu0 0.0
    %1737 = vmatpush1.msra.mxu0 0.0
    %1738 = vmatprep.subr.mxu0 0.0
    %1739 = vmatpush1.msra.mxu0 0.0
    %1740 = vmatprep.subr.mxu0 0.0
    %1741 = vmatpush1.msra.mxu0 0.0
    %1742 = vmatprep.subr.mxu0 0.0
    %1743 = vmatpush1.msra.mxu0 0.0
    %1744 = vmatprep.subr.mxu0 0.0
    %1745 = vmatpush1.msra.mxu0 0.0
    %1746 = vmatprep.subr.mxu0 0.0
    %1747 = vmatpush1.msra.mxu0 0.0
    %1748 = vmatprep.subr.mxu0 0.0
    %1749 = vmatpush1.msra.mxu0 0.0
    %1750 = vmatprep.subr.mxu0 0.0
    %1751 = vmatpush1.msra.mxu0 0.0
    %1752 = vmatprep.subr.mxu0 0.0
    %1753 = vmatpush1.msra.mxu0 0.0
    %1754 = vmatprep.subr.mxu0 0.0
    %1755 = vmatpush1.msra.mxu0 0.0
    %1756 = vmatprep.subr.mxu0 0.0
    %1757 = vmatpush1.msra.mxu0 0.0
    %1758 = vmatprep.subr.mxu0 0.0
    %1759 = vmatpush1.msra.mxu0 0.0
    %1760 = vmatprep.subr.mxu0 0.0
    %1761 = vmatpush1.msra.mxu0 0.0
    %1762 = vmatprep.mubr.f32.mxu0 0.0
    %1763 = vmatmul.mubr.f32.gmra.mrb[0].mxu0 %v1696
    %v1764 = vpop.f32.mrb[0].mxu0
    %v1765 = vadd.f32 %v1689, %v1764
    %v1766 = vpop.f32.mrb[0].mxu0
    %1767 = vdwg.mxu0
    %v1768 = vadd.f32 %v1765, %v224
    %v1769 = vmul.f32 %v1768, 0.5
    %v1770 = vtanh.pop %v1769
    %v1771 = vmul.f32 %v1770, 0.5
    %v1772 = vadd.f32 %v1771, 0.5
    %v1773 = vtanh.pop %v1768
    %v1774 = vmul.f32 %v1772, %v1402
    %1776 = vrot.lane.b32.xlu0 %v1773, 64
    %v1777 = vpop.permute.xlu0 %1776
    %v1779 = vmul.f32 %v1772, %v1777
    %1781 = vrot.lane.b32.xlu0 %v1779, 32
    %v1782 = vpop.permute.xlu0 %1781
    %v1784 = vadd.f32 %v1774, %v1782
    %v1785 = vtanh.pop %v1784
    %1787 = vrot.lane.b32.xlu0 %v1785, 64
    %v1788 = vpop.permute.xlu0 %1787
    %v1790 = vmul.f32 %v1772, %v1788
    %1791 = vrot.lane.b32.xlu0 %v1580, 32
    %v1792 = vpop.permute.xlu0 %1791
    %v1793 = vsel %vm69, %v1792, 0
    %1795 = vmatprep.subr.mxu0 0.0
    %1796 = vmatpush1.msra.mxu0 %v58
    %1797 = vmatprep.subr.mxu0 0.0
    %1798 = vmatpush1.msra.mxu0 %v59
    %1799 = vmatprep.subr.mxu0 0.0
    %1800 = vmatpush1.msra.mxu0 %v60
    %1801 = vmatprep.subr.mxu0 0.0
    %1802 = vmatpush1.msra.mxu0 %v61
    %1803 = vmatprep.subr.mxu0 0.0
    %1804 = vmatpush1.msra.mxu0 0.0
    %1805 = vmatprep.subr.mxu0 0.0
    %1806 = vmatpush1.msra.mxu0 0.0
    %1807 = vmatprep.subr.mxu0 0.0
    %1808 = vmatpush1.msra.mxu0 0.0
    %1809 = vmatprep.subr.mxu0 0.0
    %1810 = vmatpush1.msra.mxu0 0.0
    %1811 = vmatprep.subr.mxu0 0.0
    %1812 = vmatpush1.msra.mxu0 0.0
    %1813 = vmatprep.subr.mxu0 0.0
    %1814 = vmatpush1.msra.mxu0 0.0
    %1815 = vmatprep.subr.mxu0 0.0
    %1816 = vmatpush1.msra.mxu0 0.0
    %1817 = vmatprep.subr.mxu0 0.0
    %1818 = vmatpush1.msra.mxu0 0.0
    %1819 = vmatprep.subr.mxu0 0.0
    %1820 = vmatpush1.msra.mxu0 0.0
    %1821 = vmatprep.subr.mxu0 0.0
    %1822 = vmatpush1.msra.mxu0 0.0
    %1823 = vmatprep.subr.mxu0 0.0
    %1824 = vmatpush1.msra.mxu0 0.0
    %1825 = vmatprep.subr.mxu0 0.0
    %1826 = vmatpush1.msra.mxu0 0.0
    %1827 = vmatprep.subr.mxu0 0.0
    %1828 = vmatpush1.msra.mxu0 0.0
    %1829 = vmatprep.subr.mxu0 0.0
    %1830 = vmatpush1.msra.mxu0 0.0
    %1831 = vmatprep.subr.mxu0 0.0
    %1832 = vmatpush1.msra.mxu0 0.0
    %1833 = vmatprep.subr.mxu0 0.0
    %1834 = vmatpush1.msra.mxu0 0.0
    %1835 = vmatprep.subr.mxu0 0.0
    %1836 = vmatpush1.msra.mxu0 0.0
    %1837 = vmatprep.subr.mxu0 0.0
    %1838 = vmatpush1.msra.mxu0 0.0
    %1839 = vmatprep.subr.mxu0 0.0
    %1840 = vmatpush1.msra.mxu0 0.0
    %1841 = vmatprep.subr.mxu0 0.0
    %1842 = vmatpush1.msra.mxu0 0.0
    %1843 = vmatprep.subr.mxu0 0.0
    %1844 = vmatpush1.msra.mxu0 0.0
    %1845 = vmatprep.subr.mxu0 0.0
    %1846 = vmatpush1.msra.mxu0 0.0
    %1847 = vmatprep.subr.mxu0 0.0
    %1848 = vmatpush1.msra.mxu0 0.0
    %1849 = vmatprep.subr.mxu0 0.0
    %1850 = vmatpush1.msra.mxu0 0.0
    %1851 = vmatprep.subr.mxu0 0.0
    %1852 = vmatpush1.msra.mxu0 0.0
    %1853 = vmatprep.subr.mxu0 0.0
    %1854 = vmatpush1.msra.mxu0 0.0
    %1855 = vmatprep.subr.mxu0 0.0
    %1856 = vmatpush1.msra.mxu0 0.0
    %1857 = vmatprep.subr.mxu0 0.0
    %1858 = vmatpush1.msra.mxu0 0.0
    %1859 = vmatprep.mubr.f32.mxu0 0.0
    %1860 = vmatmul.mubr.f32.gmra.mrb[0].mxu0 %v1793
    %v1861 = vpop.f32.mrb[0].mxu0
    %v1862 = vadd.f32 0.0, %v1861
    %v1863 = vpop.f32.mrb[0].mxu0
    %1864 = vdwg.mxu0
    %1866 = vrot.lane.b32.xlu0 %v1790, 32
    %v1867 = vpop.permute.xlu0 %1866
    %v1868 = vsel %vm69, %v1867, 0
    %1870 = vmatprep.subr.mxu0 0.0
    %1871 = vmatpush1.msra.mxu0 %v54
    %1872 = vmatprep.subr.mxu0 0.0
    %1873 = vmatpush1.msra.mxu0 %v55
    %1874 = vmatprep.subr.mxu0 0.0
    %1875 = vmatpush1.msra.mxu0 %v56
    %1876 = vmatprep.subr.mxu0 0.0
    %1877 = vmatpush1.msra.mxu0 %v57
    %1878 = vmatprep.subr.mxu0 0.0
    %1879 = vmatpush1.msra.mxu0 0.0
    %1880 = vmatprep.subr.mxu0 0.0
    %1881 = vmatpush1.msra.mxu0 0.0
    %1882 = vmatprep.subr.mxu0 0.0
    %1883 = vmatpush1.msra.mxu0 0.0
    %1884 = vmatprep.subr.mxu0 0.0
    %1885 = vmatpush1.msra.mxu0 0.0
    %1886 = vmatprep.subr.mxu0 0.0
    %1887 = vmatpush1.msra.mxu0 0.0
    %1888 = vmatprep.subr.mxu0 0.0
    %1889 = vmatpush1.msra.mxu0 0.0
    %1890 = vmatprep.subr.mxu0 0.0
    %1891 = vmatpush1.msra.mxu0 0.0
    %1892 = vmatprep.subr.mxu0 0.0
    %1893 = vmatpush1.msra.mxu0 0.0
    %1894 = vmatprep.subr.mxu0 0.0
    %1895 = vmatpush1.msra.mxu0 0.0
    %1896 = vmatprep.subr.mxu0 0.0
    %1897 = vmatpush1.msra.mxu0 0.0
    %1898 = vmatprep.subr.mxu0 0.0
    %1899 = vmatpush1.msra.mxu0 0.0
    %1900 = vmatprep.subr.mxu0 0.0
    %1901 = vmatpush1.msra.mxu0 0.0
    %1902 = vmatprep.subr.mxu0 0.0
    %1903 = vmatpush1.msra.mxu0 0.0
    %1904 = vmatprep.subr.mxu0 0.0
    %1905 = vmatpush1.msra.mxu0 0.0
    %1906 = vmatprep.subr.mxu0 0.0
    %1907 = vmatpush1.msra.mxu0 0.0
    %1908 = vmatprep.subr.mxu0 0.0
    %1909 = vmatpush1.msra.mxu0 0.0
    %1910 = vmatprep.subr.mxu0 0.0
    %1911 = vmatpush1.msra.mxu0 0.0
    %1912 = vmatprep.subr.mxu0 0.0
    %1913 = vmatpush1.msra.mxu0 0.0
    %1914 = vmatprep.subr.mxu0 0.0
    %1915 = vmatpush1.msra.mxu0 0.0
    %1916 = vmatprep.subr.mxu0 0.0
    %1917 = vmatpush1.msra.mxu0 0.0
    %1918 = vmatprep.subr.mxu0 0.0
    %1919 = vmatpush1.msra.mxu0 0.0
    %1920 = vmatprep.subr.mxu0 0.0
    %1921 = vmatpush1.msra.mxu0 0.0
    %1922 = vmatprep.subr.mxu0 0.0
    %1923 = vmatpush1.msra.mxu0 0.0
    %1924 = vmatprep.subr.mxu0 0.0
    %1925 = vmatpush1.msra.mxu0 0.0
    %1926 = vmatprep.subr.mxu0 0.0
    %1927 = vmatpush1.msra.mxu0 0.0
    %1928 = vmatprep.subr.mxu0 0.0
    %1929 = vmatpush1.msra.mxu0 0.0
    %1930 = vmatprep.subr.mxu0 0.0
    %1931 = vmatpush1.msra.mxu0 0.0
    %1932 = vmatprep.subr.mxu0 0.0
    %1933 = vmatpush1.msra.mxu0 0.0
    %1934 = vmatprep.mubr.f32.mxu0 0.0
    %1935 = vmatmul.mubr.f32.gmra.mrb[0].mxu0 %v1868
    %v1936 = vpop.f32.mrb[0].mxu0
    %v1937 = vadd.f32 %v1862, %v1936
    %v1938 = vpop.f32.mrb[0].mxu0
    %1939 = vdwg.mxu0
    %v1940 = vadd.f32 %v1937, %v405
    %v1941 = vmul.f32 %v1940, 0.5
    %v1942 = vtanh.pop %v1941
    %v1943 = vmul.f32 %v1942, 0.5
    %v1944 = vadd.f32 %v1943, 0.5
    %v1945 = vtanh.pop %v1940
    %v1946 = vmul.f32 %v1944, %v1574
    %1948 = vrot.lane.b32.xlu0 %v1945, 64
    %v1949 = vpop.permute.xlu0 %1948
    %v1951 = vmul.f32 %v1944, %v1949
    %1953 = vrot.lane.b32.xlu0 %v1951, 32
    %v1954 = vpop.permute.xlu0 %1953
    %v1956 = vadd.f32 %v1946, %v1954
    %v1957 = vtanh.pop %v1956
    %1959 = vrot.lane.b32.xlu0 %v1957, 64
    %v1960 = vpop.permute.xlu0 %1959
    %v1962 = vmul.f32 %v1944, %v1960
    %v1965 = vunpack.c.l.s4 1966171168
    %v1966 = vunpack.c.0.s8 %v1965
    %v1967 = vlaneseq
    %v1968 = vshrl.u32 %v1967, 7
    %v1969 = vsub.s32 %v1966, %v1968
    %v1970 = vrot.slane %v1962, %v1969
    %v1971 = vcombine.high %v1970, %v1970
    %v1973 = vunpack.c.l.s4 1966171168
    %v1974 = vunpack.c.0.s8 %v1973
    %v1975 = vlaneseq
    %v1976 = vshrl.u32 %v1975, 7
    %v1977 = vsub.s32 %v1974, %v1976
    %v1978 = vrot.slane %v1970, %v1977
    %v1980 = vunpack.c.l.s4 1966171168
    %v1981 = vunpack.c.0.s8 %v1980
    %v1982 = vlaneseq
    %v1983 = vshrl.u32 %v1982, 7
    %v1984 = vsub.s32 %v1981, %v1983
    %v1985 = vrot.slane %v1971, %v1984
    %v1986 = vlaneseq
    %v1987 = vshrl.u32 %v1986, 7
    %v1988 = vsub.s32 0, %v1987
    %v1989 = vrot.slane %v1978, %v1988
    %v1990 = vlaneseq
    %v1991 = vshrl.u32 %v1990, 7
    %v1992 = vsub.s32 0, %v1991
    %v1993 = vrot.slane %v1985, %v1992
    %1994 = vrot.lane.b32.xlu0 %v1989, 32
    %v1995 = vpop.permute.xlu0 %1994
    %1996 = vrot.lane.b32.xlu0 %v1993, 32
    %v1997 = vpop.permute.xlu0 %1996
    %2000 = vst.msk [vmem:[#allocation7 + $0x4] sm:$0x1] %vm471, %v1995
    %2001 = vst.msk [vmem:[#allocation7 + $0xc] sm:$0x1] %vm471, %v1997
    %v2002 = vld [vmem:[%s0 + $0x5] sm:$0x1]
    %v2003 = vld [vmem:[%s0 + $0xd] sm:$0x1]
    %2004 = vmatprep.subr.mxu0 0.0
    %2005 = vmatpush1.msra.mxu0 %v49
    %2006 = vmatprep.subr.mxu0 0.0
    %2007 = vmatpush1.msra.mxu0 %v50
    %2008 = vmatprep.subr.mxu0 0.0
    %2009 = vmatpush1.msra.mxu0 %v51
    %2010 = vmatprep.subr.mxu0 0.0
    %2011 = vmatpush1.msra.mxu0 %v52
    %2012 = vmatprep.subr.mxu0 0.0
    %2013 = vmatpush1.msra.mxu0 0.0
    %2014 = vmatprep.subr.mxu0 0.0
    %2015 = vmatpush1.msra.mxu0 0.0
    %2016 = vmatprep.subr.mxu0 0.0
    %2017 = vmatpush1.msra.mxu0 0.0
    %2018 = vmatprep.subr.mxu0 0.0
    %2019 = vmatpush1.msra.mxu0 0.0
    %2020 = vmatprep.subr.mxu0 0.0
    %2021 = vmatpush1.msra.mxu0 0.0
    %2022 = vmatprep.subr.mxu0 0.0
    %2023 = vmatpush1.msra.mxu0 0.0
    %2024 = vmatprep.subr.mxu0 0.0
    %2025 = vmatpush1.msra.mxu0 0.0
    %2026 = vmatprep.subr.mxu0 0.0
    %2027 = vmatpush1.msra.mxu0 0.0
    %2028 = vmatprep.subr.mxu0 0.0
    %2029 = vmatpush1.msra.mxu0 0.0
    %2030 = vmatprep.subr.mxu0 0.0
    %2031 = vmatpush1.msra.mxu0 0.0
    %2032 = vmatprep.subr.mxu0 0.0
    %2033 = vmatpush1.msra.mxu0 0.0
    %2034 = vmatprep.subr.mxu0 0.0
    %2035 = vmatpush1.msra.mxu0 0.0
    %2036 = vmatprep.subr.mxu0 0.0
    %2037 = vmatpush1.msra.mxu0 0.0
    %2038 = vmatprep.subr.mxu0 0.0
    %2039 = vmatpush1.msra.mxu0 0.0
    %2040 = vmatprep.subr.mxu0 0.0
    %2041 = vmatpush1.msra.mxu0 0.0
    %2042 = vmatprep.subr.mxu0 0.0
    %2043 = vmatpush1.msra.mxu0 0.0
    %2044 = vmatprep.subr.mxu0 0.0
    %2045 = vmatpush1.msra.mxu0 0.0
    %2046 = vmatprep.subr.mxu0 0.0
    %2047 = vmatpush1.msra.mxu0 0.0
    %2048 = vmatprep.subr.mxu0 0.0
    %2049 = vmatpush1.msra.mxu0 0.0
    %2050 = vmatprep.subr.mxu0 0.0
    %2051 = vmatpush1.msra.mxu0 0.0
    %2052 = vmatprep.subr.mxu0 0.0
    %2053 = vmatpush1.msra.mxu0 0.0
    %2054 = vmatprep.subr.mxu0 0.0
    %2055 = vmatpush1.msra.mxu0 0.0
    %2056 = vmatprep.subr.mxu0 0.0
    %2057 = vmatpush1.msra.mxu0 0.0
    %2058 = vmatprep.subr.mxu0 0.0
    %2059 = vmatpush1.msra.mxu0 0.0
    %2060 = vmatprep.subr.mxu0 0.0
    %2061 = vmatpush1.msra.mxu0 0.0
    %2062 = vmatprep.subr.mxu0 0.0
    %2063 = vmatpush1.msra.mxu0 0.0
    %2064 = vmatprep.subr.mxu0 0.0
    %2065 = vmatpush1.msra.mxu0 0.0
    %2066 = vmatprep.subr.mxu0 0.0
    %2067 = vmatpush1.msra.mxu0 0.0
    %2068 = vmatprep.mubr.f32.mxu0 0.0
    %2069 = vmatmul.mubr.f32.gmra.mrb[0].mxu0 %v1868
    %v2070 = vpop.f32.mrb[0].mxu0
    %v2071 = vadd.f32 0.0, %v2070
    %v2072 = vpop.f32.mrb[0].mxu0
    %2073 = vdwg.mxu0
    %v2076 = vrot.slane %v2003, 7
    %v2077 = vsel %vm146, %v2076, %v2002
    %v2078 = vsel %vm69, %v2077, 0
    %2080 = vmatprep.subr.mxu0 0.0
    %2081 = vmatpush1.msra.mxu0 %v45
    %2082 = vmatprep.subr.mxu0 0.0
    %2083 = vmatpush1.msra.mxu0 %v46
    %2084 = vmatprep.subr.mxu0 0.0
    %2085 = vmatpush1.msra.mxu0 %v47
    %2086 = vmatprep.subr.mxu0 0.0
    %2087 = vmatpush1.msra.mxu0 %v48
    %2088 = vmatprep.subr.mxu0 0.0
    %2089 = vmatpush1.msra.mxu0 0.0
    %2090 = vmatprep.subr.mxu0 0.0
    %2091 = vmatpush1.msra.mxu0 0.0
    %2092 = vmatprep.subr.mxu0 0.0
    %2093 = vmatpush1.msra.mxu0 0.0
    %2094 = vmatprep.subr.mxu0 0.0
    %2095 = vmatpush1.msra.mxu0 0.0
    %2096 = vmatprep.subr.mxu0 0.0
    %2097 = vmatpush1.msra.mxu0 0.0
    %2098 = vmatprep.subr.mxu0 0.0
    %2099 = vmatpush1.msra.mxu0 0.0
    %2100 = vmatprep.subr.mxu0 0.0
    %2101 = vmatpush1.msra.mxu0 0.0
    %2102 = vmatprep.subr.mxu0 0.0
    %2103 = vmatpush1.msra.mxu0 0.0
    %2104 = vmatprep.subr.mxu0 0.0
    %2105 = vmatpush1.msra.mxu0 0.0
    %2106 = vmatprep.subr.mxu0 0.0
    %2107 = vmatpush1.msra.mxu0 0.0
    %2108 = vmatprep.subr.mxu0 0.0
    %2109 = vmatpush1.msra.mxu0 0.0
    %2110 = vmatprep.subr.mxu0 0.0
    %2111 = vmatpush1.msra.mxu0 0.0
    %2112 = vmatprep.subr.mxu0 0.0
    %2113 = vmatpush1.msra.mxu0 0.0
    %2114 = vmatprep.subr.mxu0 0.0
    %2115 = vmatpush1.msra.mxu0 0.0
    %2116 = vmatprep.subr.mxu0 0.0
    %2117 = vmatpush1.msra.mxu0 0.0
    %2118 = vmatprep.subr.mxu0 0.0
    %2119 = vmatpush1.msra.mxu0 0.0
    %2120 = vmatprep.subr.mxu0 0.0
    %2121 = vmatpush1.msra.mxu0 0.0
    %2122 = vmatprep.subr.mxu0 0.0
    %2123 = vmatpush1.msra.mxu0 0.0
    %2124 = vmatprep.subr.mxu0 0.0
    %2125 = vmatpush1.msra.mxu0 0.0
    %2126 = vmatprep.subr.mxu0 0.0
    %2127 = vmatpush1.msra.mxu0 0.0
    %2128 = vmatprep.subr.mxu0 0.0
    %2129 = vmatpush1.msra.mxu0 0.0
    %2130 = vmatprep.subr.mxu0 0.0
    %2131 = vmatpush1.msra.mxu0 0.0
    %2132 = vmatprep.subr.mxu0 0.0
    %2133 = vmatpush1.msra.mxu0 0.0
    %2134 = vmatprep.subr.mxu0 0.0
    %2135 = vmatpush1.msra.mxu0 0.0
    %2136 = vmatprep.subr.mxu0 0.0
    %2137 = vmatpush1.msra.mxu0 0.0
    %2138 = vmatprep.subr.mxu0 0.0
    %2139 = vmatpush1.msra.mxu0 0.0
    %2140 = vmatprep.subr.mxu0 0.0
    %2141 = vmatpush1.msra.mxu0 0.0
    %2142 = vmatprep.subr.mxu0 0.0
    %2143 = vmatpush1.msra.mxu0 0.0
    %2144 = vmatprep.mubr.f32.mxu0 0.0
    %2145 = vmatmul.mubr.f32.gmra.mrb[0].mxu0 %v2078
    %v2146 = vpop.f32.mrb[0].mxu0
    %v2147 = vadd.f32 %v2071, %v2146
    %v2148 = vpop.f32.mrb[0].mxu0
    %2149 = vdwg.mxu0
    %v2150 = vadd.f32 %v2147, %v224
    %v2151 = vmul.f32 %v2150, 0.5
    %v2152 = vtanh.pop %v2151
    %v2153 = vmul.f32 %v2152, 0.5
    %v2154 = vadd.f32 %v2153, 0.5
    %v2155 = vtanh.pop %v2150
    %v2156 = vmul.f32 %v2154, %v1784
    %2158 = vrot.lane.b32.xlu0 %v2155, 64
    %v2159 = vpop.permute.xlu0 %2158
    %v2161 = vmul.f32 %v2154, %v2159
    %2163 = vrot.lane.b32.xlu0 %v2161, 32
    %v2164 = vpop.permute.xlu0 %2163
    %v2166 = vadd.f32 %v2156, %v2164
    %v2167 = vtanh.pop %v2166
    %2169 = vrot.lane.b32.xlu0 %v2167, 64
    %v2170 = vpop.permute.xlu0 %2169
    %v2172 = vmul.f32 %v2154, %v2170
    %2173 = vrot.lane.b32.xlu0 %v1962, 32
    %v2174 = vpop.permute.xlu0 %2173
    %v2175 = vsel %vm69, %v2174, 0
    %2177 = vmatprep.subr.mxu0 0.0
    %2178 = vmatpush1.msra.mxu0 %v58
    %2179 = vmatprep.subr.mxu0 0.0
    %2180 = vmatpush1.msra.mxu0 %v59
    %2181 = vmatprep.subr.mxu0 0.0
    %2182 = vmatpush1.msra.mxu0 %v60
    %2183 = vmatprep.subr.mxu0 0.0
    %2184 = vmatpush1.msra.mxu0 %v61
    %2185 = vmatprep.subr.mxu0 0.0
    %2186 = vmatpush1.msra.mxu0 0.0
    %2187 = vmatprep.subr.mxu0 0.0
    %2188 = vmatpush1.msra.mxu0 0.0
    %2189 = vmatprep.subr.mxu0 0.0
    %2190 = vmatpush1.msra.mxu0 0.0
    %2191 = vmatprep.subr.mxu0 0.0
    %2192 = vmatpush1.msra.mxu0 0.0
    %2193 = vmatprep.subr.mxu0 0.0
    %2194 = vmatpush1.msra.mxu0 0.0
    %2195 = vmatprep.subr.mxu0 0.0
    %2196 = vmatpush1.msra.mxu0 0.0
    %2197 = vmatprep.subr.mxu0 0.0
    %2198 = vmatpush1.msra.mxu0 0.0
    %2199 = vmatprep.subr.mxu0 0.0
    %2200 = vmatpush1.msra.mxu0 0.0
    %2201 = vmatprep.subr.mxu0 0.0
    %2202 = vmatpush1.msra.mxu0 0.0
    %2203 = vmatprep.subr.mxu0 0.0
    %2204 = vmatpush1.msra.mxu0 0.0
    %2205 = vmatprep.subr.mxu0 0.0
    %2206 = vmatpush1.msra.mxu0 0.0
    %2207 = vmatprep.subr.mxu0 0.0
    %2208 = vmatpush1.msra.mxu0 0.0
    %2209 = vmatprep.subr.mxu0 0.0
    %2210 = vmatpush1.msra.mxu0 0.0
    %2211 = vmatprep.subr.mxu0 0.0
    %2212 = vmatpush1.msra.mxu0 0.0
    %2213 = vmatprep.subr.mxu0 0.0
    %2214 = vmatpush1.msra.mxu0 0.0
    %2215 = vmatprep.subr.mxu0 0.0
    %2216 = vmatpush1.msra.mxu0 0.0
    %2217 = vmatprep.subr.mxu0 0.0
    %2218 = vmatpush1.msra.mxu0 0.0
    %2219 = vmatprep.subr.mxu0 0.0
    %2220 = vmatpush1.msra.mxu0 0.0
    %2221 = vmatprep.subr.mxu0 0.0
    %2222 = vmatpush1.msra.mxu0 0.0
    %2223 = vmatprep.subr.mxu0 0.0
    %2224 = vmatpush1.msra.mxu0 0.0
    %2225 = vmatprep.subr.mxu0 0.0
    %2226 = vmatpush1.msra.mxu0 0.0
    %2227 = vmatprep.subr.mxu0 0.0
    %2228 = vmatpush1.msra.mxu0 0.0
    %2229 = vmatprep.subr.mxu0 0.0
    %2230 = vmatpush1.msra.mxu0 0.0
    %2231 = vmatprep.subr.mxu0 0.0
    %2232 = vmatpush1.msra.mxu0 0.0
    %2233 = vmatprep.subr.mxu0 0.0
    %2234 = vmatpush1.msra.mxu0 0.0
    %2235 = vmatprep.subr.mxu0 0.0
    %2236 = vmatpush1.msra.mxu0 0.0
    %2237 = vmatprep.subr.mxu0 0.0
    %2238 = vmatpush1.msra.mxu0 0.0
    %2239 = vmatprep.subr.mxu0 0.0
    %2240 = vmatpush1.msra.mxu0 0.0
    %2241 = vmatprep.mubr.f32.mxu0 0.0
    %2242 = vmatmul.mubr.f32.gmra.mrb[0].mxu0 %v2175
    %v2243 = vpop.f32.mrb[0].mxu0
    %v2244 = vadd.f32 0.0, %v2243
    %v2245 = vpop.f32.mrb[0].mxu0
    %2246 = vdwg.mxu0
    %2248 = vrot.lane.b32.xlu0 %v2172, 32
    %v2249 = vpop.permute.xlu0 %2248
    %v2250 = vsel %vm69, %v2249, 0
    %2252 = vmatprep.subr.mxu0 0.0
    %2253 = vmatpush1.msra.mxu0 %v54
    %2254 = vmatprep.subr.mxu0 0.0
    %2255 = vmatpush1.msra.mxu0 %v55
    %2256 = vmatprep.subr.mxu0 0.0
    %2257 = vmatpush1.msra.mxu0 %v56
    %2258 = vmatprep.subr.mxu0 0.0
    %2259 = vmatpush1.msra.mxu0 %v57
    %2260 = vmatprep.subr.mxu0 0.0
    %2261 = vmatpush1.msra.mxu0 0.0
    %2262 = vmatprep.subr.mxu0 0.0
    %2263 = vmatpush1.msra.mxu0 0.0
    %2264 = vmatprep.subr.mxu0 0.0
    %2265 = vmatpush1.msra.mxu0 0.0
    %2266 = vmatprep.subr.mxu0 0.0
    %2267 = vmatpush1.msra.mxu0 0.0
    %2268 = vmatprep.subr.mxu0 0.0
    %2269 = vmatpush1.msra.mxu0 0.0
    %2270 = vmatprep.subr.mxu0 0.0
    %2271 = vmatpush1.msra.mxu0 0.0
    %2272 = vmatprep.subr.mxu0 0.0
    %2273 = vmatpush1.msra.mxu0 0.0
    %2274 = vmatprep.subr.mxu0 0.0
    %2275 = vmatpush1.msra.mxu0 0.0
    %2276 = vmatprep.subr.mxu0 0.0
    %2277 = vmatpush1.msra.mxu0 0.0
    %2278 = vmatprep.subr.mxu0 0.0
    %2279 = vmatpush1.msra.mxu0 0.0
    %2280 = vmatprep.subr.mxu0 0.0
    %2281 = vmatpush1.msra.mxu0 0.0
    %2282 = vmatprep.subr.mxu0 0.0
    %2283 = vmatpush1.msra.mxu0 0.0
    %2284 = vmatprep.subr.mxu0 0.0
    %2285 = vmatpush1.msra.mxu0 0.0
    %2286 = vmatprep.subr.mxu0 0.0
    %2287 = vmatpush1.msra.mxu0 0.0
    %2288 = vmatprep.subr.mxu0 0.0
    %2289 = vmatpush1.msra.mxu0 0.0
    %2290 = vmatprep.subr.mxu0 0.0
    %2291 = vmatpush1.msra.mxu0 0.0
    %2292 = vmatprep.subr.mxu0 0.0
    %2293 = vmatpush1.msra.mxu0 0.0
    %2294 = vmatprep.subr.mxu0 0.0
    %2295 = vmatpush1.msra.mxu0 0.0
    %2296 = vmatprep.subr.mxu0 0.0
    %2297 = vmatpush1.msra.mxu0 0.0
    %2298 = vmatprep.subr.mxu0 0.0
    %2299 = vmatpush1.msra.mxu0 0.0
    %2300 = vmatprep.subr.mxu0 0.0
    %2301 = vmatpush1.msra.mxu0 0.0
    %2302 = vmatprep.subr.mxu0 0.0
    %2303 = vmatpush1.msra.mxu0 0.0
    %2304 = vmatprep.subr.mxu0 0.0
    %2305 = vmatpush1.msra.mxu0 0.0
    %2306 = vmatprep.subr.mxu0 0.0
    %2307 = vmatpush1.msra.mxu0 0.0
    %2308 = vmatprep.subr.mxu0 0.0
    %2309 = vmatpush1.msra.mxu0 0.0
    %2310 = vmatprep.subr.mxu0 0.0
    %2311 = vmatpush1.msra.mxu0 0.0
    %2312 = vmatprep.subr.mxu0 0.0
    %2313 = vmatpush1.msra.mxu0 0.0
    %2314 = vmatprep.subr.mxu0 0.0
    %2315 = vmatpush1.msra.mxu0 0.0
    %2316 = vmatprep.mubr.f32.mxu0 0.0
    %2317 = vmatmul.mubr.f32.gmra.mrb[0].mxu0 %v2250
    %v2318 = vpop.f32.mrb[0].mxu0
    %v2319 = vadd.f32 %v2244, %v2318
    %v2320 = vpop.f32.mrb[0].mxu0
    %2321 = vdwg.mxu0
    %v2322 = vadd.f32 %v2319, %v405
    %v2323 = vmul.f32 %v2322, 0.5
    %v2324 = vtanh.pop %v2323
    %v2325 = vmul.f32 %v2324, 0.5
    %v2326 = vadd.f32 %v2325, 0.5
    %v2327 = vtanh.pop %v2322
    %v2328 = vmul.f32 %v2326, %v1956
    %2330 = vrot.lane.b32.xlu0 %v2327, 64
    %v2331 = vpop.permute.xlu0 %2330
    %v2333 = vmul.f32 %v2326, %v2331
    %2335 = vrot.lane.b32.xlu0 %v2333, 32
    %v2336 = vpop.permute.xlu0 %2335
    %v2338 = vadd.f32 %v2328, %v2336
    %v2339 = vtanh.pop %v2338
    %2341 = vrot.lane.b32.xlu0 %v2339, 64
    %v2342 = vpop.permute.xlu0 %2341
    %v2344 = vmul.f32 %v2326, %v2342
    %v2347 = vunpack.c.l.s4 1966171168
    %v2348 = vunpack.c.0.s8 %v2347
    %v2349 = vlaneseq
    %v2350 = vshrl.u32 %v2349, 7
    %v2351 = vsub.s32 %v2348, %v2350
    %v2352 = vrot.slane %v2344, %v2351
    %v2353 = vcombine.high %v2352, %v2352
    %v2355 = vunpack.c.l.s4 1966171168
    %v2356 = vunpack.c.0.s8 %v2355
    %v2357 = vlaneseq
    %v2358 = vshrl.u32 %v2357, 7
    %v2359 = vsub.s32 %v2356, %v2358
    %v2360 = vrot.slane %v2352, %v2359
    %v2362 = vunpack.c.l.s4 1966171168
    %v2363 = vunpack.c.0.s8 %v2362
    %v2364 = vlaneseq
    %v2365 = vshrl.u32 %v2364, 7
    %v2366 = vsub.s32 %v2363, %v2365
    %v2367 = vrot.slane %v2353, %v2366
    %v2368 = vlaneseq
    %v2369 = vshrl.u32 %v2368, 7
    %v2370 = vsub.s32 0, %v2369
    %v2371 = vrot.slane %v2360, %v2370
    %v2372 = vlaneseq
    %v2373 = vshrl.u32 %v2372, 7
    %v2374 = vsub.s32 0, %v2373
    %v2375 = vrot.slane %v2367, %v2374
    %2376 = vrot.lane.b32.xlu0 %v2371, 32
    %v2377 = vpop.permute.xlu0 %2376
    %2378 = vrot.lane.b32.xlu0 %v2375, 32
    %v2379 = vpop.permute.xlu0 %2378
    %2382 = vst.msk [vmem:[#allocation7 + $0x5] sm:$0x1] %vm471, %v2377
    %2383 = vst.msk [vmem:[#allocation7 + $0xd] sm:$0x1] %vm471, %v2379
    %v2384 = vld [vmem:[%s0 + $0x6] sm:$0x1]
    %v2385 = vld [vmem:[%s0 + $0xe] sm:$0x1]
    %2386 = vmatprep.subr.mxu0 0.0
    %2387 = vmatpush1.msra.mxu0 %v49
    %2388 = vmatprep.subr.mxu0 0.0
    %2389 = vmatpush1.msra.mxu0 %v50
    %2390 = vmatprep.subr.mxu0 0.0
    %2391 = vmatpush1.msra.mxu0 %v51
    %2392 = vmatprep.subr.mxu0 0.0
    %2393 = vmatpush1.msra.mxu0 %v52
    %2394 = vmatprep.subr.mxu0 0.0
    %2395 = vmatpush1.msra.mxu0 0.0
    %2396 = vmatprep.subr.mxu0 0.0
    %2397 = vmatpush1.msra.mxu0 0.0
    %2398 = vmatprep.subr.mxu0 0.0
    %2399 = vmatpush1.msra.mxu0 0.0
    %2400 = vmatprep.subr.mxu0 0.0
    %2401 = vmatpush1.msra.mxu0 0.0
    %2402 = vmatprep.subr.mxu0 0.0
    %2403 = vmatpush1.msra.mxu0 0.0
    %2404 = vmatprep.subr.mxu0 0.0
    %2405 = vmatpush1.msra.mxu0 0.0
    %2406 = vmatprep.subr.mxu0 0.0
    %2407 = vmatpush1.msra.mxu0 0.0
    %2408 = vmatprep.subr.mxu0 0.0
    %2409 = vmatpush1.msra.mxu0 0.0
    %2410 = vmatprep.subr.mxu0 0.0
    %2411 = vmatpush1.msra.mxu0 0.0
    %2412 = vmatprep.subr.mxu0 0.0
    %2413 = vmatpush1.msra.mxu0 0.0
    %2414 = vmatprep.subr.mxu0 0.0
    %2415 = vmatpush1.msra.mxu0 0.0
    %2416 = vmatprep.subr.mxu0 0.0
    %2417 = vmatpush1.msra.mxu0 0.0
    %2418 = vmatprep.subr.mxu0 0.0
    %2419 = vmatpush1.msra.mxu0 0.0
    %2420 = vmatprep.subr.mxu0 0.0
    %2421 = vmatpush1.msra.mxu0 0.0
    %2422 = vmatprep.subr.mxu0 0.0
    %2423 = vmatpush1.msra.mxu0 0.0
    %2424 = vmatprep.subr.mxu0 0.0
    %2425 = vmatpush1.msra.mxu0 0.0
    %2426 = vmatprep.subr.mxu0 0.0
    %2427 = vmatpush1.msra.mxu0 0.0
    %2428 = vmatprep.subr.mxu0 0.0
    %2429 = vmatpush1.msra.mxu0 0.0
    %2430 = vmatprep.subr.mxu0 0.0
    %2431 = vmatpush1.msra.mxu0 0.0
    %2432 = vmatprep.subr.mxu0 0.0
    %2433 = vmatpush1.msra.mxu0 0.0
    %2434 = vmatprep.subr.mxu0 0.0
    %2435 = vmatpush1.msra.mxu0 0.0
    %2436 = vmatprep.subr.mxu0 0.0
    %2437 = vmatpush1.msra.mxu0 0.0
    %2438 = vmatprep.subr.mxu0 0.0
    %2439 = vmatpush1.msra.mxu0 0.0
    %2440 = vmatprep.subr.mxu0 0.0
    %2441 = vmatpush1.msra.mxu0 0.0
    %2442 = vmatprep.subr.mxu0 0.0
    %2443 = vmatpush1.msra.mxu0 0.0
    %2444 = vmatprep.subr.mxu0 0.0
    %2445 = vmatpush1.msra.mxu0 0.0
    %2446 = vmatprep.subr.mxu0 0.0
    %2447 = vmatpush1.msra.mxu0 0.0
    %2448 = vmatprep.subr.mxu0 0.0
    %2449 = vmatpush1.msra.mxu0 0.0
    %2450 = vmatprep.mubr.f32.mxu0 0.0
    %2451 = vmatmul.mubr.f32.gmra.mrb[0].mxu0 %v2250
    %v2452 = vpop.f32.mrb[0].mxu0
    %v2453 = vadd.f32 0.0, %v2452
    %v2454 = vpop.f32.mrb[0].mxu0
    %2455 = vdwg.mxu0
    %v2458 = vrot.slane %v2385, 7
    %v2459 = vsel %vm146, %v2458, %v2384
    %v2460 = vsel %vm69, %v2459, 0
    %2462 = vmatprep.subr.mxu0 0.0
    %2463 = vmatpush1.msra.mxu0 %v45
    %2464 = vmatprep.subr.mxu0 0.0
    %2465 = vmatpush1.msra.mxu0 %v46
    %2466 = vmatprep.subr.mxu0 0.0
    %2467 = vmatpush1.msra.mxu0 %v47
    %2468 = vmatprep.subr.mxu0 0.0
    %2469 = vmatpush1.msra.mxu0 %v48
    %2470 = vmatprep.subr.mxu0 0.0
    %2471 = vmatpush1.msra.mxu0 0.0
    %2472 = vmatprep.subr.mxu0 0.0
    %2473 = vmatpush1.msra.mxu0 0.0
    %2474 = vmatprep.subr.mxu0 0.0
    %2475 = vmatpush1.msra.mxu0 0.0
    %2476 = vmatprep.subr.mxu0 0.0
    %2477 = vmatpush1.msra.mxu0 0.0
    %2478 = vmatprep.subr.mxu0 0.0
    %2479 = vmatpush1.msra.mxu0 0.0
    %2480 = vmatprep.subr.mxu0 0.0
    %2481 = vmatpush1.msra.mxu0 0.0
    %2482 = vmatprep.subr.mxu0 0.0
    %2483 = vmatpush1.msra.mxu0 0.0
    %2484 = vmatprep.subr.mxu0 0.0
    %2485 = vmatpush1.msra.mxu0 0.0
    %2486 = vmatprep.subr.mxu0 0.0
    %2487 = vmatpush1.msra.mxu0 0.0
    %2488 = vmatprep.subr.mxu0 0.0
    %2489 = vmatpush1.msra.mxu0 0.0
    %2490 = vmatprep.subr.mxu0 0.0
    %2491 = vmatpush1.msra.mxu0 0.0
    %2492 = vmatprep.subr.mxu0 0.0
    %2493 = vmatpush1.msra.mxu0 0.0
    %2494 = vmatprep.subr.mxu0 0.0
    %2495 = vmatpush1.msra.mxu0 0.0
    %2496 = vmatprep.subr.mxu0 0.0
    %2497 = vmatpush1.msra.mxu0 0.0
    %2498 = vmatprep.subr.mxu0 0.0
    %2499 = vmatpush1.msra.mxu0 0.0
    %2500 = vmatprep.subr.mxu0 0.0
    %2501 = vmatpush1.msra.mxu0 0.0
    %2502 = vmatprep.subr.mxu0 0.0
    %2503 = vmatpush1.msra.mxu0 0.0
    %2504 = vmatprep.subr.mxu0 0.0
    %2505 = vmatpush1.msra.mxu0 0.0
    %2506 = vmatprep.subr.mxu0 0.0
    %2507 = vmatpush1.msra.mxu0 0.0
    %2508 = vmatprep.subr.mxu0 0.0
    %2509 = vmatpush1.msra.mxu0 0.0
    %2510 = vmatprep.subr.mxu0 0.0
    %2511 = vmatpush1.msra.mxu0 0.0
    %2512 = vmatprep.subr.mxu0 0.0
    %2513 = vmatpush1.msra.mxu0 0.0
    %2514 = vmatprep.subr.mxu0 0.0
    %2515 = vmatpush1.msra.mxu0 0.0
    %2516 = vmatprep.subr.mxu0 0.0
    %2517 = vmatpush1.msra.mxu0 0.0
    %2518 = vmatprep.subr.mxu0 0.0
    %2519 = vmatpush1.msra.mxu0 0.0
    %2520 = vmatprep.subr.mxu0 0.0
    %2521 = vmatpush1.msra.mxu0 0.0
    %2522 = vmatprep.subr.mxu0 0.0
    %2523 = vmatpush1.msra.mxu0 0.0
    %2524 = vmatprep.subr.mxu0 0.0
    %2525 = vmatpush1.msra.mxu0 0.0
    %2526 = vmatprep.mubr.f32.mxu0 0.0
    %2527 = vmatmul.mubr.f32.gmra.mrb[0].mxu0 %v2460
    %v2528 = vpop.f32.mrb[0].mxu0
    %v2529 = vadd.f32 %v2453, %v2528
    %v2530 = vpop.f32.mrb[0].mxu0
    %2531 = vdwg.mxu0
    %v2532 = vadd.f32 %v2529, %v224
    %v2533 = vmul.f32 %v2532, 0.5
    %v2534 = vtanh.pop %v2533
    %v2535 = vmul.f32 %v2534, 0.5
    %v2536 = vadd.f32 %v2535, 0.5
    %v2537 = vtanh.pop %v2532
    %v2538 = vmul.f32 %v2536, %v2166
    %2540 = vrot.lane.b32.xlu0 %v2537, 64
    %v2541 = vpop.permute.xlu0 %2540
    %v2543 = vmul.f32 %v2536, %v2541
    %2545 = vrot.lane.b32.xlu0 %v2543, 32
    %v2546 = vpop.permute.xlu0 %2545
    %v2548 = vadd.f32 %v2538, %v2546
    %v2549 = vtanh.pop %v2548
    %2551 = vrot.lane.b32.xlu0 %v2549, 64
    %v2552 = vpop.permute.xlu0 %2551
    %v2554 = vmul.f32 %v2536, %v2552
    %2555 = vrot.lane.b32.xlu0 %v2344, 32
    %v2556 = vpop.permute.xlu0 %2555
    %v2557 = vsel %vm69, %v2556, 0
    %2559 = vmatprep.subr.mxu0 0.0
    %2560 = vmatpush1.msra.mxu0 %v58
    %2561 = vmatprep.subr.mxu0 0.0
    %2562 = vmatpush1.msra.mxu0 %v59
    %2563 = vmatprep.subr.mxu0 0.0
    %2564 = vmatpush1.msra.mxu0 %v60
    %2565 = vmatprep.subr.mxu0 0.0
    %2566 = vmatpush1.msra.mxu0 %v61
    %2567 = vmatprep.subr.mxu0 0.0
    %2568 = vmatpush1.msra.mxu0 0.0
    %2569 = vmatprep.subr.mxu0 0.0
    %2570 = vmatpush1.msra.mxu0 0.0
    %2571 = vmatprep.subr.mxu0 0.0
    %2572 = vmatpush1.msra.mxu0 0.0
    %2573 = vmatprep.subr.mxu0 0.0
    %2574 = vmatpush1.msra.mxu0 0.0
    %2575 = vmatprep.subr.mxu0 0.0
    %2576 = vmatpush1.msra.mxu0 0.0
    %2577 = vmatprep.subr.mxu0 0.0
    %2578 = vmatpush1.msra.mxu0 0.0
    %2579 = vmatprep.subr.mxu0 0.0
    %2580 = vmatpush1.msra.mxu0 0.0
    %2581 = vmatprep.subr.mxu0 0.0
    %2582 = vmatpush1.msra.mxu0 0.0
    %2583 = vmatprep.subr.mxu0 0.0
    %2584 = vmatpush1.msra.mxu0 0.0
    %2585 = vmatprep.subr.mxu0 0.0
    %2586 = vmatpush1.msra.mxu0 0.0
    %2587 = vmatprep.subr.mxu0 0.0
    %2588 = vmatpush1.msra.mxu0 0.0
    %2589 = vmatprep.subr.mxu0 0.0
    %2590 = vmatpush1.msra.mxu0 0.0
    %2591 = vmatprep.subr.mxu0 0.0
    %2592 = vmatpush1.msra.mxu0 0.0
    %2593 = vmatprep.subr.mxu0 0.0
    %2594 = vmatpush1.msra.mxu0 0.0
    %2595 = vmatprep.subr.mxu0 0.0
    %2596 = vmatpush1.msra.mxu0 0.0
    %2597 = vmatprep.subr.mxu0 0.0
    %2598 = vmatpush1.msra.mxu0 0.0
    %2599 = vmatprep.subr.mxu0 0.0
    %2600 = vmatpush1.msra.mxu0 0.0
    %2601 = vmatprep.subr.mxu0 0.0
    %2602 = vmatpush1.msra.mxu0 0.0
    %2603 = vmatprep.subr.mxu0 0.0
    %2604 = vmatpush1.msra.mxu0 0.0
    %2605 = vmatprep.subr.mxu0 0.0
    %2606 = vmatpush1.msra.mxu0 0.0
    %2607 = vmatprep.subr.mxu0 0.0
    %2608 = vmatpush1.msra.mxu0 0.0
    %2609 = vmatprep.subr.mxu0 0.0
    %2610 = vmatpush1.msra.mxu0 0.0
    %2611 = vmatprep.subr.mxu0 0.0
    %2612 = vmatpush1.msra.mxu0 0.0
    %2613 = vmatprep.subr.mxu0 0.0
    %2614 = vmatpush1.msra.mxu0 0.0
    %2615 = vmatprep.subr.mxu0 0.0
    %2616 = vmatpush1.msra.mxu0 0.0
    %2617 = vmatprep.subr.mxu0 0.0
    %2618 = vmatpush1.msra.mxu0 0.0
    %2619 = vmatprep.subr.mxu0 0.0
    %2620 = vmatpush1.msra.mxu0 0.0
    %2621 = vmatprep.subr.mxu0 0.0
    %2622 = vmatpush1.msra.mxu0 0.0
    %2623 = vmatprep.mubr.f32.mxu0 0.0
    %2624 = vmatmul.mubr.f32.gmra.mrb[0].mxu0 %v2557
    %v2625 = vpop.f32.mrb[0].mxu0
    %v2626 = vadd.f32 0.0, %v2625
    %v2627 = vpop.f32.mrb[0].mxu0
    %2628 = vdwg.mxu0
    %2630 = vrot.lane.b32.xlu0 %v2554, 32
    %v2631 = vpop.permute.xlu0 %2630
    %v2632 = vsel %vm69, %v2631, 0
    %2634 = vmatprep.subr.mxu0 0.0
    %2635 = vmatpush1.msra.mxu0 %v54
    %2636 = vmatprep.subr.mxu0 0.0
    %2637 = vmatpush1.msra.mxu0 %v55
    %2638 = vmatprep.subr.mxu0 0.0
    %2639 = vmatpush1.msra.mxu0 %v56
    %2640 = vmatprep.subr.mxu0 0.0
    %2641 = vmatpush1.msra.mxu0 %v57
    %2642 = vmatprep.subr.mxu0 0.0
    %2643 = vmatpush1.msra.mxu0 0.0
    %2644 = vmatprep.subr.mxu0 0.0
    %2645 = vmatpush1.msra.mxu0 0.0
    %2646 = vmatprep.subr.mxu0 0.0
    %2647 = vmatpush1.msra.mxu0 0.0
    %2648 = vmatprep.subr.mxu0 0.0
    %2649 = vmatpush1.msra.mxu0 0.0
    %2650 = vmatprep.subr.mxu0 0.0
    %2651 = vmatpush1.msra.mxu0 0.0
    %2652 = vmatprep.subr.mxu0 0.0
    %2653 = vmatpush1.msra.mxu0 0.0
    %2654 = vmatprep.subr.mxu0 0.0
    %2655 = vmatpush1.msra.mxu0 0.0
    %2656 = vmatprep.subr.mxu0 0.0
    %2657 = vmatpush1.msra.mxu0 0.0
    %2658 = vmatprep.subr.mxu0 0.0
    %2659 = vmatpush1.msra.mxu0 0.0
    %2660 = vmatprep.subr.mxu0 0.0
    %2661 = vmatpush1.msra.mxu0 0.0
    %2662 = vmatprep.subr.mxu0 0.0
    %2663 = vmatpush1.msra.mxu0 0.0
    %2664 = vmatprep.subr.mxu0 0.0
    %2665 = vmatpush1.msra.mxu0 0.0
    %2666 = vmatprep.subr.mxu0 0.0
    %2667 = vmatpush1.msra.mxu0 0.0
    %2668 = vmatprep.subr.mxu0 0.0
    %2669 = vmatpush1.msra.mxu0 0.0
    %2670 = vmatprep.subr.mxu0 0.0
    %2671 = vmatpush1.msra.mxu0 0.0
    %2672 = vmatprep.subr.mxu0 0.0
    %2673 = vmatpush1.msra.mxu0 0.0
    %2674 = vmatprep.subr.mxu0 0.0
    %2675 = vmatpush1.msra.mxu0 0.0
    %2676 = vmatprep.subr.mxu0 0.0
    %2677 = vmatpush1.msra.mxu0 0.0
    %2678 = vmatprep.subr.mxu0 0.0
    %2679 = vmatpush1.msra.mxu0 0.0
    %2680 = vmatprep.subr.mxu0 0.0
    %2681 = vmatpush1.msra.mxu0 0.0
    %2682 = vmatprep.subr.mxu0 0.0
    %2683 = vmatpush1.msra.mxu0 0.0
    %2684 = vmatprep.subr.mxu0 0.0
    %2685 = vmatpush1.msra.mxu0 0.0
    %2686 = vmatprep.subr.mxu0 0.0
    %2687 = vmatpush1.msra.mxu0 0.0
    %2688 = vmatprep.subr.mxu0 0.0
    %2689 = vmatpush1.msra.mxu0 0.0
    %2690 = vmatprep.subr.mxu0 0.0
    %2691 = vmatpush1.msra.mxu0 0.0
    %2692 = vmatprep.subr.mxu0 0.0
    %2693 = vmatpush1.msra.mxu0 0.0
    %2694 = vmatprep.subr.mxu0 0.0
    %2695 = vmatpush1.msra.mxu0 0.0
    %2696 = vmatprep.subr.mxu0 0.0
    %2697 = vmatpush1.msra.mxu0 0.0
    %2698 = vmatprep.mubr.f32.mxu0 0.0
    %2699 = vmatmul.mubr.f32.gmra.mrb[0].mxu0 %v2632
    %v2700 = vpop.f32.mrb[0].mxu0
    %v2701 = vadd.f32 %v2626, %v2700
    %v2702 = vpop.f32.mrb[0].mxu0
    %2703 = vdwg.mxu0
    %v2704 = vadd.f32 %v2701, %v405
    %v2705 = vmul.f32 %v2704, 0.5
    %v2706 = vtanh.pop %v2705
    %v2707 = vmul.f32 %v2706, 0.5
    %v2708 = vadd.f32 %v2707, 0.5
    %v2709 = vtanh.pop %v2704
    %v2710 = vmul.f32 %v2708, %v2338
    %2712 = vrot.lane.b32.xlu0 %v2709, 64
    %v2713 = vpop.permute.xlu0 %2712
    %v2715 = vmul.f32 %v2708, %v2713
    %2717 = vrot.lane.b32.xlu0 %v2715, 32
    %v2718 = vpop.permute.xlu0 %2717
    %v2720 = vadd.f32 %v2710, %v2718
    %v2721 = vtanh.pop %v2720
    %2723 = vrot.lane.b32.xlu0 %v2721, 64
    %v2724 = vpop.permute.xlu0 %2723
    %v2726 = vmul.f32 %v2708, %v2724
    %v2729 = vunpack.c.l.s4 1966171168
    %v2730 = vunpack.c.0.s8 %v2729
    %v2731 = vlaneseq
    %v2732 = vshrl.u32 %v2731, 7
    %v2733 = vsub.s32 %v2730, %v2732
    %v2734 = vrot.slane %v2726, %v2733
    %v2735 = vcombine.high %v2734, %v2734
    %v2737 = vunpack.c.l.s4 1966171168
    %v2738 = vunpack.c.0.s8 %v2737
    %v2739 = vlaneseq
    %v2740 = vshrl.u32 %v2739, 7
    %v2741 = vsub.s32 %v2738, %v2740
    %v2742 = vrot.slane %v2734, %v2741
    %v2744 = vunpack.c.l.s4 1966171168
    %v2745 = vunpack.c.0.s8 %v2744
    %v2746 = vlaneseq
    %v2747 = vshrl.u32 %v2746, 7
    %v2748 = vsub.s32 %v2745, %v2747
    %v2749 = vrot.slane %v2735, %v2748
    %v2750 = vlaneseq
    %v2751 = vshrl.u32 %v2750, 7
    %v2752 = vsub.s32 0, %v2751
    %v2753 = vrot.slane %v2742, %v2752
    %v2754 = vlaneseq
    %v2755 = vshrl.u32 %v2754, 7
    %v2756 = vsub.s32 0, %v2755
    %v2757 = vrot.slane %v2749, %v2756
    %2758 = vrot.lane.b32.xlu0 %v2753, 32
    %v2759 = vpop.permute.xlu0 %2758
    %2760 = vrot.lane.b32.xlu0 %v2757, 32
    %v2761 = vpop.permute.xlu0 %2760
    %2764 = vst.msk [vmem:[#allocation7 + $0x6] sm:$0x1] %vm471, %v2759
    %2765 = vst.msk [vmem:[#allocation7 + $0xe] sm:$0x1] %vm471, %v2761
    %v2766 = vld [vmem:[%s0 + $0x7] sm:$0x1]
    %v2767 = vld [vmem:[%s0 + $0xf] sm:$0x1]
    %2768 = vmatprep.subr.mxu0 0.0
    %2769 = vmatpush1.msra.mxu0 %v49
    %2770 = vmatprep.subr.mxu0 0.0
    %2771 = vmatpush1.msra.mxu0 %v50
    %2772 = vmatprep.subr.mxu0 0.0
    %2773 = vmatpush1.msra.mxu0 %v51
    %2774 = vmatprep.subr.mxu0 0.0
    %2775 = vmatpush1.msra.mxu0 %v52
    %2776 = vmatprep.subr.mxu0 0.0
    %2777 = vmatpush1.msra.mxu0 0.0
    %2778 = vmatprep.subr.mxu0 0.0
    %2779 = vmatpush1.msra.mxu0 0.0
    %2780 = vmatprep.subr.mxu0 0.0
    %2781 = vmatpush1.msra.mxu0 0.0
    %2782 = vmatprep.subr.mxu0 0.0
    %2783 = vmatpush1.msra.mxu0 0.0
    %2784 = vmatprep.subr.mxu0 0.0
    %2785 = vmatpush1.msra.mxu0 0.0
    %2786 = vmatprep.subr.mxu0 0.0
    %2787 = vmatpush1.msra.mxu0 0.0
    %2788 = vmatprep.subr.mxu0 0.0
    %2789 = vmatpush1.msra.mxu0 0.0
    %2790 = vmatprep.subr.mxu0 0.0
    %2791 = vmatpush1.msra.mxu0 0.0
    %2792 = vmatprep.subr.mxu0 0.0
    %2793 = vmatpush1.msra.mxu0 0.0
    %2794 = vmatprep.subr.mxu0 0.0
    %2795 = vmatpush1.msra.mxu0 0.0
    %2796 = vmatprep.subr.mxu0 0.0
    %2797 = vmatpush1.msra.mxu0 0.0
    %2798 = vmatprep.subr.mxu0 0.0
    %2799 = vmatpush1.msra.mxu0 0.0
    %2800 = vmatprep.subr.mxu0 0.0
    %2801 = vmatpush1.msra.mxu0 0.0
    %2802 = vmatprep.subr.mxu0 0.0
    %2803 = vmatpush1.msra.mxu0 0.0
    %2804 = vmatprep.subr.mxu0 0.0
    %2805 = vmatpush1.msra.mxu0 0.0
    %2806 = vmatprep.subr.mxu0 0.0
    %2807 = vmatpush1.msra.mxu0 0.0
    %2808 = vmatprep.subr.mxu0 0.0
    %2809 = vmatpush1.msra.mxu0 0.0
    %2810 = vmatprep.subr.mxu0 0.0
    %2811 = vmatpush1.msra.mxu0 0.0
    %2812 = vmatprep.subr.mxu0 0.0
    %2813 = vmatpush1.msra.mxu0 0.0
    %2814 = vmatprep.subr.mxu0 0.0
    %2815 = vmatpush1.msra.mxu0 0.0
    %2816 = vmatprep.subr.mxu0 0.0
    %2817 = vmatpush1.msra.mxu0 0.0
    %2818 = vmatprep.subr.mxu0 0.0
    %2819 = vmatpush1.msra.mxu0 0.0
    %2820 = vmatprep.subr.mxu0 0.0
    %2821 = vmatpush1.msra.mxu0 0.0
    %2822 = vmatprep.subr.mxu0 0.0
    %2823 = vmatpush1.msra.mxu0 0.0
    %2824 = vmatprep.subr.mxu0 0.0
    %2825 = vmatpush1.msra.mxu0 0.0
    %2826 = vmatprep.subr.mxu0 0.0
    %2827 = vmatpush1.msra.mxu0 0.0
    %2828 = vmatprep.subr.mxu0 0.0
    %2829 = vmatpush1.msra.mxu0 0.0
    %2830 = vmatprep.subr.mxu0 0.0
    %2831 = vmatpush1.msra.mxu0 0.0
    %2832 = vmatprep.mubr.f32.mxu0 0.0
    %2833 = vmatmul.mubr.f32.gmra.mrb[0].mxu0 %v2632
    %v2834 = vpop.f32.mrb[0].mxu0
    %v2835 = vadd.f32 0.0, %v2834
    %v2836 = vpop.f32.mrb[0].mxu0
    %2837 = vdwg.mxu0
    %v2840 = vrot.slane %v2767, 7
    %v2841 = vsel %vm146, %v2840, %v2766
    %v2842 = vsel %vm69, %v2841, 0
    %2844 = vmatprep.subr.mxu0 0.0
    %2845 = vmatpush1.msra.mxu0 %v45
    %2846 = vmatprep.subr.mxu0 0.0
    %2847 = vmatpush1.msra.mxu0 %v46
    %2848 = vmatprep.subr.mxu0 0.0
    %2849 = vmatpush1.msra.mxu0 %v47
    %2850 = vmatprep.subr.mxu0 0.0
    %2851 = vmatpush1.msra.mxu0 %v48
    %2852 = vmatprep.subr.mxu0 0.0
    %2853 = vmatpush1.msra.mxu0 0.0
    %2854 = vmatprep.subr.mxu0 0.0
    %2855 = vmatpush1.msra.mxu0 0.0
    %2856 = vmatprep.subr.mxu0 0.0
    %2857 = vmatpush1.msra.mxu0 0.0
    %2858 = vmatprep.subr.mxu0 0.0
    %2859 = vmatpush1.msra.mxu0 0.0
    %2860 = vmatprep.subr.mxu0 0.0
    %2861 = vmatpush1.msra.mxu0 0.0
    %2862 = vmatprep.subr.mxu0 0.0
    %2863 = vmatpush1.msra.mxu0 0.0
    %2864 = vmatprep.subr.mxu0 0.0
    %2865 = vmatpush1.msra.mxu0 0.0
    %2866 = vmatprep.subr.mxu0 0.0
    %2867 = vmatpush1.msra.mxu0 0.0
    %2868 = vmatprep.subr.mxu0 0.0
    %2869 = vmatpush1.msra.mxu0 0.0
    %2870 = vmatprep.subr.mxu0 0.0
    %2871 = vmatpush1.msra.mxu0 0.0
    %2872 = vmatprep.subr.mxu0 0.0
    %2873 = vmatpush1.msra.mxu0 0.0
    %2874 = vmatprep.subr.mxu0 0.0
    %2875 = vmatpush1.msra.mxu0 0.0
    %2876 = vmatprep.subr.mxu0 0.0
    %2877 = vmatpush1.msra.mxu0 0.0
    %2878 = vmatprep.subr.mxu0 0.0
    %2879 = vmatpush1.msra.mxu0 0.0
    %2880 = vmatprep.subr.mxu0 0.0
    %2881 = vmatpush1.msra.mxu0 0.0
    %2882 = vmatprep.subr.mxu0 0.0
    %2883 = vmatpush1.msra.mxu0 0.0
    %2884 = vmatprep.subr.mxu0 0.0
    %2885 = vmatpush1.msra.mxu0 0.0
    %2886 = vmatprep.subr.mxu0 0.0
    %2887 = vmatpush1.msra.mxu0 0.0
    %2888 = vmatprep.subr.mxu0 0.0
    %2889 = vmatpush1.msra.mxu0 0.0
    %2890 = vmatprep.subr.mxu0 0.0
    %2891 = vmatpush1.msra.mxu0 0.0
    %2892 = vmatprep.subr.mxu0 0.0
    %2893 = vmatpush1.msra.mxu0 0.0
    %2894 = vmatprep.subr.mxu0 0.0
    %2895 = vmatpush1.msra.mxu0 0.0
    %2896 = vmatprep.subr.mxu0 0.0
    %2897 = vmatpush1.msra.mxu0 0.0
    %2898 = vmatprep.subr.mxu0 0.0
    %2899 = vmatpush1.msra.mxu0 0.0
    %2900 = vmatprep.subr.mxu0 0.0
    %2901 = vmatpush1.msra.mxu0 0.0
    %2902 = vmatprep.subr.mxu0 0.0
    %2903 = vmatpush1.msra.mxu0 0.0
    %2904 = vmatprep.subr.mxu0 0.0
    %2905 = vmatpush1.msra.mxu0 0.0
    %2906 = vmatprep.subr.mxu0 0.0
    %2907 = vmatpush1.msra.mxu0 0.0
    %2908 = vmatprep.mubr.f32.mxu0 0.0
    %2909 = vmatmul.mubr.f32.gmra.mrb[0].mxu0 %v2842
    %v2910 = vpop.f32.mrb[0].mxu0
    %v2911 = vadd.f32 %v2835, %v2910
    %v2912 = vpop.f32.mrb[0].mxu0
    %2913 = vdwg.mxu0
    %v2914 = vadd.f32 %v2911, %v224
    %v2915 = vmul.f32 %v2914, 0.5
    %v2916 = vtanh.pop %v2915
    %v2917 = vmul.f32 %v2916, 0.5
    %v2918 = vadd.f32 %v2917, 0.5
    %v2919 = vtanh.pop %v2914
    %v2920 = vmul.f32 %v2918, %v2548
    %2922 = vrot.lane.b32.xlu0 %v2919, 64
    %v2923 = vpop.permute.xlu0 %2922
    %v2925 = vmul.f32 %v2918, %v2923
    %2927 = vrot.lane.b32.xlu0 %v2925, 32
    %v2928 = vpop.permute.xlu0 %2927
    %v2930 = vadd.f32 %v2920, %v2928
    %v2931 = vtanh.pop %v2930
    %2933 = vrot.lane.b32.xlu0 %v2931, 64
    %v2934 = vpop.permute.xlu0 %2933
    %v2936 = vmul.f32 %v2918, %v2934
    %2937 = vrot.lane.b32.xlu0 %v2726, 32
    %v2938 = vpop.permute.xlu0 %2937
    %v2939 = vsel %vm69, %v2938, 0
    %2941 = vmatprep.subr.mxu0 0.0
    %2942 = vmatpush1.msra.mxu0 %v58
    %2943 = vmatprep.subr.mxu0 0.0
    %2944 = vmatpush1.msra.mxu0 %v59
    %2945 = vmatprep.subr.mxu0 0.0
    %2946 = vmatpush1.msra.mxu0 %v60
    %2947 = vmatprep.subr.mxu0 0.0
    %2948 = vmatpush1.msra.mxu0 %v61
    %2949 = vmatprep.subr.mxu0 0.0
    %2950 = vmatpush1.msra.mxu0 0.0
    %2951 = vmatprep.subr.mxu0 0.0
    %2952 = vmatpush1.msra.mxu0 0.0
    %2953 = vmatprep.subr.mxu0 0.0
    %2954 = vmatpush1.msra.mxu0 0.0
    %2955 = vmatprep.subr.mxu0 0.0
    %2956 = vmatpush1.msra.mxu0 0.0
    %2957 = vmatprep.subr.mxu0 0.0
    %2958 = vmatpush1.msra.mxu0 0.0
    %2959 = vmatprep.subr.mxu0 0.0
    %2960 = vmatpush1.msra.mxu0 0.0
    %2961 = vmatprep.subr.mxu0 0.0
    %2962 = vmatpush1.msra.mxu0 0.0
    %2963 = vmatprep.subr.mxu0 0.0
    %2964 = vmatpush1.msra.mxu0 0.0
    %2965 = vmatprep.subr.mxu0 0.0
    %2966 = vmatpush1.msra.mxu0 0.0
    %2967 = vmatprep.subr.mxu0 0.0
    %2968 = vmatpush1.msra.mxu0 0.0
    %2969 = vmatprep.subr.mxu0 0.0
    %2970 = vmatpush1.msra.mxu0 0.0
    %2971 = vmatprep.subr.mxu0 0.0
    %2972 = vmatpush1.msra.mxu0 0.0
    %2973 = vmatprep.subr.mxu0 0.0
    %2974 = vmatpush1.msra.mxu0 0.0
    %2975 = vmatprep.subr.mxu0 0.0
    %2976 = vmatpush1.msra.mxu0 0.0
    %2977 = vmatprep.subr.mxu0 0.0
    %2978 = vmatpush1.msra.mxu0 0.0
    %2979 = vmatprep.subr.mxu0 0.0
    %2980 = vmatpush1.msra.mxu0 0.0
    %2981 = vmatprep.subr.mxu0 0.0
    %2982 = vmatpush1.msra.mxu0 0.0
    %2983 = vmatprep.subr.mxu0 0.0
    %2984 = vmatpush1.msra.mxu0 0.0
    %2985 = vmatprep.subr.mxu0 0.0
    %2986 = vmatpush1.msra.mxu0 0.0
    %2987 = vmatprep.subr.mxu0 0.0
    %2988 = vmatpush1.msra.mxu0 0.0
    %2989 = vmatprep.subr.mxu0 0.0
    %2990 = vmatpush1.msra.mxu0 0.0
    %2991 = vmatprep.subr.mxu0 0.0
    %2992 = vmatpush1.msra.mxu0 0.0
    %2993 = vmatprep.subr.mxu0 0.0
    %2994 = vmatpush1.msra.mxu0 0.0
    %2995 = vmatprep.subr.mxu0 0.0
    %2996 = vmatpush1.msra.mxu0 0.0
    %2997 = vmatprep.subr.mxu0 0.0
    %2998 = vmatpush1.msra.mxu0 0.0
    %2999 = vmatprep.subr.mxu0 0.0
    %3000 = vmatpush1.msra.mxu0 0.0
    %3001 = vmatprep.subr.mxu0 0.0
    %3002 = vmatpush1.msra.mxu0 0.0
    %3003 = vmatprep.subr.mxu0 0.0
    %3004 = vmatpush1.msra.mxu0 0.0
    %3005 = vmatprep.mubr.f32.mxu0 0.0
    %3006 = vmatmul.mubr.f32.gmra.mrb[0].mxu0 %v2939
    %v3007 = vpop.f32.mrb[0].mxu0
    %v3008 = vadd.f32 0.0, %v3007
    %v3009 = vpop.f32.mrb[0].mxu0
    %3010 = vdwg.mxu0
    %3012 = vrot.lane.b32.xlu0 %v2936, 32
    %v3013 = vpop.permute.xlu0 %3012
    %v3014 = vsel %vm69, %v3013, 0
    %3016 = vmatprep.subr.mxu0 0.0
    %3017 = vmatpush1.msra.mxu0 %v54
    %3018 = vmatprep.subr.mxu0 0.0
    %3019 = vmatpush1.msra.mxu0 %v55
    %3020 = vmatprep.subr.mxu0 0.0
    %3021 = vmatpush1.msra.mxu0 %v56
    %3022 = vmatprep.subr.mxu0 0.0
    %3023 = vmatpush1.msra.mxu0 %v57
    %3024 = vmatprep.subr.mxu0 0.0
    %3025 = vmatpush1.msra.mxu0 0.0
    %3026 = vmatprep.subr.mxu0 0.0
    %3027 = vmatpush1.msra.mxu0 0.0
    %3028 = vmatprep.subr.mxu0 0.0
    %3029 = vmatpush1.msra.mxu0 0.0
    %3030 = vmatprep.subr.mxu0 0.0
    %3031 = vmatpush1.msra.mxu0 0.0
    %3032 = vmatprep.subr.mxu0 0.0
    %3033 = vmatpush1.msra.mxu0 0.0
    %3034 = vmatprep.subr.mxu0 0.0
    %3035 = vmatpush1.msra.mxu0 0.0
    %3036 = vmatprep.subr.mxu0 0.0
    %3037 = vmatpush1.msra.mxu0 0.0
    %3038 = vmatprep.subr.mxu0 0.0
    %3039 = vmatpush1.msra.mxu0 0.0
    %3040 = vmatprep.subr.mxu0 0.0
    %3041 = vmatpush1.msra.mxu0 0.0
    %3042 = vmatprep.subr.mxu0 0.0
    %3043 = vmatpush1.msra.mxu0 0.0
    %3044 = vmatprep.subr.mxu0 0.0
    %3045 = vmatpush1.msra.mxu0 0.0
    %3046 = vmatprep.subr.mxu0 0.0
    %3047 = vmatpush1.msra.mxu0 0.0
    %3048 = vmatprep.subr.mxu0 0.0
    %3049 = vmatpush1.msra.mxu0 0.0
    %3050 = vmatprep.subr.mxu0 0.0
    %3051 = vmatpush1.msra.mxu0 0.0
    %3052 = vmatprep.subr.mxu0 0.0
    %3053 = vmatpush1.msra.mxu0 0.0
    %3054 = vmatprep.subr.mxu0 0.0
    %3055 = vmatpush1.msra.mxu0 0.0
    %3056 = vmatprep.subr.mxu0 0.0
    %3057 = vmatpush1.msra.mxu0 0.0
    %3058 = vmatprep.subr.mxu0 0.0
    %3059 = vmatpush1.msra.mxu0 0.0
    %3060 = vmatprep.subr.mxu0 0.0
    %3061 = vmatpush1.msra.mxu0 0.0
    %3062 = vmatprep.subr.mxu0 0.0
    %3063 = vmatpush1.msra.mxu0 0.0
    %3064 = vmatprep.subr.mxu0 0.0
    %3065 = vmatpush1.msra.mxu0 0.0
    %3066 = vmatprep.subr.mxu0 0.0
    %3067 = vmatpush1.msra.mxu0 0.0
    %3068 = vmatprep.subr.mxu0 0.0
    %3069 = vmatpush1.msra.mxu0 0.0
    %3070 = vmatprep.subr.mxu0 0.0
    %3071 = vmatpush1.msra.mxu0 0.0
    %3072 = vmatprep.subr.mxu0 0.0
    %3073 = vmatpush1.msra.mxu0 0.0
    %3074 = vmatprep.subr.mxu0 0.0
    %3075 = vmatpush1.msra.mxu0 0.0
    %3076 = vmatprep.subr.mxu0 0.0
    %3077 = vmatpush1.msra.mxu0 0.0
    %3078 = vmatprep.subr.mxu0 0.0
    %3079 = vmatpush1.msra.mxu0 0.0
    %3080 = vmatprep.mubr.f32.mxu0 0.0
    %3081 = vmatmul.mubr.f32.gmra.mrb[0].mxu0 %v3014
    %v3082 = vpop.f32.mrb[0].mxu0
    %v3083 = vadd.f32 %v3008, %v3082
    %v3084 = vpop.f32.mrb[0].mxu0
    %3085 = vdwg.mxu0
    %v3086 = vadd.f32 %v3083, %v405
    %v3087 = vmul.f32 %v3086, 0.5
    %v3088 = vtanh.pop %v3087
    %v3089 = vmul.f32 %v3088, 0.5
    %v3090 = vadd.f32 %v3089, 0.5
    %v3091 = vtanh.pop %v3086
    %v3092 = vmul.f32 %v3090, %v2720
    %3094 = vrot.lane.b32.xlu0 %v3091, 64
    %v3095 = vpop.permute.xlu0 %3094
    %v3097 = vmul.f32 %v3090, %v3095
    %3099 = vrot.lane.b32.xlu0 %v3097, 32
    %v3100 = vpop.permute.xlu0 %3099
    %v3102 = vadd.f32 %v3092, %v3100
    %v3103 = vtanh.pop %v3102
    %3105 = vrot.lane.b32.xlu0 %v3103, 64
    %v3106 = vpop.permute.xlu0 %3105
    %v3108 = vmul.f32 %v3090, %v3106
    %v3111 = vunpack.c.l.s4 1966171168
    %v3112 = vunpack.c.0.s8 %v3111
    %v3113 = vlaneseq
    %v3114 = vshrl.u32 %v3113, 7
    %v3115 = vsub.s32 %v3112, %v3114
    %v3116 = vrot.slane %v3108, %v3115
    %v3117 = vcombine.high %v3116, %v3116
    %v3119 = vunpack.c.l.s4 1966171168
    %v3120 = vunpack.c.0.s8 %v3119
    %v3121 = vlaneseq
    %v3122 = vshrl.u32 %v3121, 7
    %v3123 = vsub.s32 %v3120, %v3122
    %v3124 = vrot.slane %v3116, %v3123
    %v3126 = vunpack.c.l.s4 1966171168
    %v3127 = vunpack.c.0.s8 %v3126
    %v3128 = vlaneseq
    %v3129 = vshrl.u32 %v3128, 7
    %v3130 = vsub.s32 %v3127, %v3129
    %v3131 = vrot.slane %v3117, %v3130
    %v3132 = vlaneseq
    %v3133 = vshrl.u32 %v3132, 7
    %v3134 = vsub.s32 0, %v3133
    %v3135 = vrot.slane %v3124, %v3134
    %v3136 = vlaneseq
    %v3137 = vshrl.u32 %v3136, 7
    %v3138 = vsub.s32 0, %v3137
    %v3139 = vrot.slane %v3131, %v3138
    %3140 = vrot.lane.b32.xlu0 %v3135, 32
    %v3141 = vpop.permute.xlu0 %3140
    %3142 = vrot.lane.b32.xlu0 %v3139, 32
    %v3143 = vpop.permute.xlu0 %3142
    %3146 = vst.msk [vmem:[#allocation7 + $0x7] sm:$0x1] %vm471, %v3141
    %3147 = vst.msk [vmem:[#allocation7 + $0xf] sm:$0x1] %vm471, %v3143
    %vm3149 = vcmask 254976
    %3150 = vst.msk [vmem:[#allocation2] sm:$0x3] %vm3149, %v3013
    %3152 = vrot.lane.b32.xlu0 %v2930, 96
    %v3153 = vpop.permute.xlu0 %3152
    %3155 = vst.msk [vmem:[#allocation3] sm:$0x3] %vm3149, %v3153
    %3156 = vrot.lane.b32.xlu0 %v3108, 32
    %v3157 = vpop.permute.xlu0 %3156
    %3159 = vst.msk [vmem:[#allocation4] sm:$0x3] %vm3149, %v3157
    %3161 = vrot.lane.b32.xlu0 %v3102, 96
    %v3162 = vpop.permute.xlu0 %3161
    %3164 = vst.msk [vmem:[#allocation5] sm:$0x3] %vm3149, %v3162
    %v3165 = vld [vmem:[#allocation7] sm:$0xff]
    %v3166 = vld [vmem:[#allocation7 + $0x8] sm:$0xff]
    %vm3167 = vcmask 72704
    %v3168 = vsel %vm3167, %v3165, -inf
    %3169 = vmax.xlane.f32.xlu0 %v3168
    %v3170 = vpop.xlane.xlu0 %3169
    %v3171 = vsel %vm3167, %v3166, -inf
    %3172 = vmax.xlane.f32.xlu0 %v3171
    %v3173 = vpop.xlane.xlu0 %3172
    %v3174 = vsub.f32 %v3165, %v3170
    %v3175 = vsub.f32 %v3166, %v3173
    %v3176 = vmul.f32 %v3174, 1.442695
    %v3177 = vpow.pop %v3176
    %v3178 = vmul.f32 %v3175, 1.442695
    %v3179 = vpow.pop %v3178
    %v3180 = vsel %vm3167, %v3177, 0.0
    %3181 = vadd.xlane.f32.xlu0 %v3180
    %v3182 = vpop.xlane.xlu0 %3181
    %v3183 = vsel %vm3167, %v3179, 0.0
    %3184 = vadd.xlane.f32.xlu0 %v3183
    %v3185 = vpop.xlane.xlu0 %3184
    %v3186 = vrcp.pop %v3182
    %v3187 = vrcp.pop %v3185
    %v3188 = vmul.f32 %v3177, %v3186
    %v3189 = vmul.f32 %v3179, %v3187
    %v3190 = vld [vmem:[%s0] sm:$0xff]
    %v3191 = vld [vmem:[%s0 + $0x8] sm:$0xff]
    %v3192 = vld [vmem:[#allocation6] sm:$0xff]
    %v3193 = vld [vmem:[#allocation6 + $0x8] sm:$0x1]
    %v3194 = vld [vmem:[#allocation6 + $0x10] sm:$0xff]
    %v3195 = vld [vmem:[#allocation6 + $0x18] sm:$0x1]
    %3196 = vxpose.xlu0.b32.start [1/16] %v3188, 128
    %3197 = vxpose.xlu0.b32.cont [2/16] 0.0, 128
    %3198 = vxpose.xlu0.b32.cont [3/16] 0.0, 128
    %3199 = vxpose.xlu0.b32.cont [4/16] 0.0, 128
    %3200 = vxpose.xlu0.b32.cont [5/16] 0.0, 128
    %3201 = vxpose.xlu0.b32.cont [6/16] 0.0, 128
    %3202 = vxpose.xlu0.b32.cont [7/16] 0.0, 128
    %3203 = vxpose.xlu0.b32.cont [8/16] 0.0, 128
    %3204 = vxpose.xlu0.b32.cont [9/16] 0.0, 128
    %3205 = vxpose.xlu0.b32.cont [10/16] 0.0, 128
    %3206 = vxpose.xlu0.b32.cont [11/16] 0.0, 128
    %3207 = vxpose.xlu0.b32.cont [12/16] 0.0, 128
    %3208 = vxpose.xlu0.b32.cont [13/16] 0.0, 128
    %3209 = vxpose.xlu0.b32.cont [14/16] 0.0, 128
    %3210 = vxpose.xlu0.b32.cont [15/16] 0.0, 128
    %3211 = vxpose.xlu0.b32.end [16/16] 0.0, 128
    %v3212 = vpop.trf.xlu0
    %v3213 = vpop.trf.xlu0
    %v3214 = vpop.trf.xlu0
    %v3215 = vpop.trf.xlu0
    %v3216 = vpop.trf.xlu0
    %v3217 = vpop.trf.xlu0
    %v3218 = vpop.trf.xlu0
    %v3219 = vpop.trf.xlu0
    %v3220 = vpop.trf.xlu0
    %v3221 = vpop.trf.xlu0
    %v3222 = vpop.trf.xlu0
    %v3223 = vpop.trf.xlu0
    %v3224 = vpop.trf.xlu0
    %v3225 = vpop.trf.xlu0
    %v3226 = vpop.trf.xlu0
    %v3227 = vpop.trf.xlu0
    %vm3228 = vcmask 64512
    %v3230 = vsel %vm3228, %v3212, 0
    %v3233 = vsel %vm3228, %v3213, 0
    %3235 = vmatprep.subr.mxu0 0.0
    %3236 = vmatpush1.msra.mxu0 %v3190
    %3237 = vmatprep.subr.mxu0 0.0
    %3238 = vmatpush1.msra.mxu0 0.0
    %3239 = vmatprep.subr.mxu0 0.0
    %3240 = vmatpush1.msra.mxu0 0.0
    %3241 = vmatprep.subr.mxu0 0.0
    %3242 = vmatpush1.msra.mxu0 0.0
    %3243 = vmatprep.subr.mxu0 0.0
    %3244 = vmatpush1.msra.mxu0 0.0
    %3245 = vmatprep.subr.mxu0 0.0
    %3246 = vmatpush1.msra.mxu0 0.0
    %3247 = vmatprep.subr.mxu0 0.0
    %3248 = vmatpush1.msra.mxu0 0.0
    %3249 = vmatprep.subr.mxu0 0.0
    %3250 = vmatpush1.msra.mxu0 0.0
    %3251 = vmatprep.subr.mxu0 0.0
    %3252 = vmatpush1.msra.mxu0 0.0
    %3253 = vmatprep.subr.mxu0 0.0
    %3254 = vmatpush1.msra.mxu0 0.0
    %3255 = vmatprep.subr.mxu0 0.0
    %3256 = vmatpush1.msra.mxu0 0.0
    %3257 = vmatprep.subr.mxu0 0.0
    %3258 = vmatpush1.msra.mxu0 0.0
    %3259 = vmatprep.subr.mxu0 0.0
    %3260 = vmatpush1.msra.mxu0 0.0
    %3261 = vmatprep.subr.mxu0 0.0
    %3262 = vmatpush1.msra.mxu0 0.0
    %3263 = vmatprep.subr.mxu0 0.0
    %3264 = vmatpush1.msra.mxu0 0.0
    %3265 = vmatprep.subr.mxu0 0.0
    %3266 = vmatpush1.msra.mxu0 0.0
    %3267 = vmatprep.subr.mxu0 0.0
    %3268 = vmatpush1.msra.mxu0 0.0
    %3269 = vmatprep.subr.mxu0 0.0
    %3270 = vmatpush1.msra.mxu0 0.0
    %3271 = vmatprep.subr.mxu0 0.0
    %3272 = vmatpush1.msra.mxu0 0.0
    %3273 = vmatprep.subr.mxu0 0.0
    %3274 = vmatpush1.msra.mxu0 0.0
    %3275 = vmatprep.subr.mxu0 0.0
    %3276 = vmatpush1.msra.mxu0 0.0
    %3277 = vmatprep.subr.mxu0 0.0
    %3278 = vmatpush1.msra.mxu0 0.0
    %3279 = vmatprep.subr.mxu0 0.0
    %3280 = vmatpush1.msra.mxu0 0.0
    %3281 = vmatprep.subr.mxu0 0.0
    %3282 = vmatpush1.msra.mxu0 0.0
    %3283 = vmatprep.subr.mxu0 0.0
    %3284 = vmatpush1.msra.mxu0 0.0
    %3285 = vmatprep.subr.mxu0 0.0
    %3286 = vmatpush1.msra.mxu0 0.0
    %3287 = vmatprep.subr.mxu0 0.0
    %3288 = vmatpush1.msra.mxu0 0.0
    %3289 = vmatprep.subr.mxu0 0.0
    %3290 = vmatpush1.msra.mxu0 0.0
    %3291 = vmatprep.subr.mxu0 0.0
    %3292 = vmatpush1.msra.mxu0 0.0
    %3293 = vmatprep.subr.mxu0 0.0
    %3294 = vmatpush1.msra.mxu0 0.0
    %3295 = vmatprep.subr.mxu0 0.0
    %3296 = vmatpush1.msra.mxu0 0.0
    %3297 = vmatprep.subr.mxu0 0.0
    %3298 = vmatpush1.msra.mxu0 0.0
    %3299 = vmatprep.mubr.f32.mxu0 0.0
    %3300 = vmatmul.mubr.f32.gmra.mrb[0].mxu0 %v3230
    %v3301 = vpop.f32.mrb[0].mxu0
    %v3302 = vadd.f32 0.0, %v3301
    %v3303 = vpop.f32.mrb[0].mxu0
    %3304 = vmatprep.mubr.f32.mxu0 0.0
    %3305 = vmatmul.mubr.f32.gmra.mrb[0].mxu0 %v3233
    %v3306 = vpop.f32.mrb[0].mxu0
    %v3307 = vadd.f32 0.0, %v3306
    %v3308 = vpop.f32.mrb[0].mxu0
    %3309 = vdwg.mxu0
    %3310 = vxpose.xlu0.b32.start [1/16] %v3189, 128
    %3311 = vxpose.xlu0.b32.cont [2/16] 0.0, 128
    %3312 = vxpose.xlu0.b32.cont [3/16] 0.0, 128
    %3313 = vxpose.xlu0.b32.cont [4/16] 0.0, 128
    %3314 = vxpose.xlu0.b32.cont [5/16] 0.0, 128
    %3315 = vxpose.xlu0.b32.cont [6/16] 0.0, 128
    %3316 = vxpose.xlu0.b32.cont [7/16] 0.0, 128
    %3317 = vxpose.xlu0.b32.cont [8/16] 0.0, 128
    %3318 = vxpose.xlu0.b32.cont [9/16] 0.0, 128
    %3319 = vxpose.xlu0.b32.cont [10/16] 0.0, 128
    %3320 = vxpose.xlu0.b32.cont [11/16] 0.0, 128
    %3321 = vxpose.xlu0.b32.cont [12/16] 0.0, 128
    %3322 = vxpose.xlu0.b32.cont [13/16] 0.0, 128
    %3323 = vxpose.xlu0.b32.cont [14/16] 0.0, 128
    %3324 = vxpose.xlu0.b32.cont [15/16] 0.0, 128
    %3325 = vxpose.xlu0.b32.end [16/16] 0.0, 128
    %v3326 = vpop.trf.xlu0
    %v3327 = vpop.trf.xlu0
    %v3328 = vpop.trf.xlu0
    %v3329 = vpop.trf.xlu0
    %v3330 = vpop.trf.xlu0
    %v3331 = vpop.trf.xlu0
    %v3332 = vpop.trf.xlu0
    %v3333 = vpop.trf.xlu0
    %v3334 = vpop.trf.xlu0
    %v3335 = vpop.trf.xlu0
    %v3336 = vpop.trf.xlu0
    %v3337 = vpop.trf.xlu0
    %v3338 = vpop.trf.xlu0
    %v3339 = vpop.trf.xlu0
    %v3340 = vpop.trf.xlu0
    %v3341 = vpop.trf.xlu0
    %v3343 = vsel %vm3228, %v3326, 0
    %v3346 = vsel %vm3228, %v3327, 0
    %3348 = vmatprep.subr.mxu0 0.0
    %3349 = vmatpush1.msra.mxu0 %v3191
    %3350 = vmatprep.subr.mxu0 0.0
    %3351 = vmatpush1.msra.mxu0 0.0
    %3352 = vmatprep.subr.mxu0 0.0
    %3353 = vmatpush1.msra.mxu0 0.0
    %3354 = vmatprep.subr.mxu0 0.0
    %3355 = vmatpush1.msra.mxu0 0.0
    %3356 = vmatprep.subr.mxu0 0.0
    %3357 = vmatpush1.msra.mxu0 0.0
    %3358 = vmatprep.subr.mxu0 0.0
    %3359 = vmatpush1.msra.mxu0 0.0
    %3360 = vmatprep.subr.mxu0 0.0
    %3361 = vmatpush1.msra.mxu0 0.0
    %3362 = vmatprep.subr.mxu0 0.0
    %3363 = vmatpush1.msra.mxu0 0.0
    %3364 = vmatprep.subr.mxu0 0.0
    %3365 = vmatpush1.msra.mxu0 0.0
    %3366 = vmatprep.subr.mxu0 0.0
    %3367 = vmatpush1.msra.mxu0 0.0
    %3368 = vmatprep.subr.mxu0 0.0
    %3369 = vmatpush1.msra.mxu0 0.0
    %3370 = vmatprep.subr.mxu0 0.0
    %3371 = vmatpush1.msra.mxu0 0.0
    %3372 = vmatprep.subr.mxu0 0.0
    %3373 = vmatpush1.msra.mxu0 0.0
    %3374 = vmatprep.subr.mxu0 0.0
    %3375 = vmatpush1.msra.mxu0 0.0
    %3376 = vmatprep.subr.mxu0 0.0
    %3377 = vmatpush1.msra.mxu0 0.0
    %3378 = vmatprep.subr.mxu0 0.0
    %3379 = vmatpush1.msra.mxu0 0.0
    %3380 = vmatprep.subr.mxu0 0.0
    %3381 = vmatpush1.msra.mxu0 0.0
    %3382 = vmatprep.subr.mxu0 0.0
    %3383 = vmatpush1.msra.mxu0 0.0
    %3384 = vmatprep.subr.mxu0 0.0
    %3385 = vmatpush1.msra.mxu0 0.0
    %3386 = vmatprep.subr.mxu0 0.0
    %3387 = vmatpush1.msra.mxu0 0.0
    %3388 = vmatprep.subr.mxu0 0.0
    %3389 = vmatpush1.msra.mxu0 0.0
    %3390 = vmatprep.subr.mxu0 0.0
    %3391 = vmatpush1.msra.mxu0 0.0
    %3392 = vmatprep.subr.mxu0 0.0
    %3393 = vmatpush1.msra.mxu0 0.0
    %3394 = vmatprep.subr.mxu0 0.0
    %3395 = vmatpush1.msra.mxu0 0.0
    %3396 = vmatprep.subr.mxu0 0.0
    %3397 = vmatpush1.msra.mxu0 0.0
    %3398 = vmatprep.subr.mxu0 0.0
    %3399 = vmatpush1.msra.mxu0 0.0
    %3400 = vmatprep.subr.mxu0 0.0
    %3401 = vmatpush1.msra.mxu0 0.0
    %3402 = vmatprep.subr.mxu0 0.0
    %3403 = vmatpush1.msra.mxu0 0.0
    %3404 = vmatprep.subr.mxu0 0.0
    %3405 = vmatpush1.msra.mxu0 0.0
    %3406 = vmatprep.subr.mxu0 0.0
    %3407 = vmatpush1.msra.mxu0 0.0
    %3408 = vmatprep.subr.mxu0 0.0
    %3409 = vmatpush1.msra.mxu0 0.0
    %3410 = vmatprep.subr.mxu0 0.0
    %3411 = vmatpush1.msra.mxu0 0.0
    %3412 = vmatprep.mubr.f32.mxu0 0.0
    %3413 = vmatmul.mubr.f32.gmra.mrb[0].mxu0 %v3343
    %v3414 = vpop.f32.mrb[0].mxu0
    %v3415 = vadd.f32 0.0, %v3414
    %v3416 = vpop.f32.mrb[0].mxu0
    %3417 = vmatprep.mubr.f32.mxu0 0.0
    %3418 = vmatmul.mubr.f32.gmra.mrb[0].mxu0 %v3346
    %v3419 = vpop.f32.mrb[0].mxu0
    %v3420 = vadd.f32 0.0, %v3419
    %v3421 = vpop.f32.mrb[0].mxu0
    %3422 = vdwg.mxu0
    %v3423 = vadd.f32 %v3192, %v3302
    %v3424 = vadd.f32 %v3193, %v3307
    %v3425 = vadd.f32 %v3194, %v3415
    %v3426 = vadd.f32 %v3195, %v3420
    %3427 = vst.msk [vmem:[#allocation6] sm:$0xff] %vm69, %v3423
    %vm3428 = vcmask 253952
    %3429 = vst.msk [vmem:[#allocation6 + $0x8] sm:$0x1] %vm3428, %v3424
    %3430 = vst.msk [vmem:[#allocation6 + $0x10] sm:$0xff] %vm69, %v3425
    %3431 = vst.msk [vmem:[#allocation6 + $0x18] sm:$0x1] %vm3428, %v3426
    // Predicated region
    $region34: #{ctc_forward.1} parent=1 // pred_check
      %p3432 = pneg %p30
    $region35: #{ctc_forward.1} parent=1 // pred_check_branch
      %3434 = sbr.rel (%p3432) target = $region37
    $region36: #{ctc_forward.1} parent=1 // pred_region
      %v3435 = vld [vmem:[#allocation6 + $0x1] sm:$0xff]
      %v3436 = vld [vmem:[#allocation6 + $0x11] sm:$0xff]
      %3437 = vst.msk [vmem:[#allocation9] sm:$0xff] %vm69, %v3435
      %3438 = vst.msk [vmem:[#allocation9 + $0x8] sm:$0xff] %vm69, %v3436
    $region37: #{ctc_forward.1} parent=1 // pred_fallthru
      _
    // Predicated region
    $region38: #{ctc_forward.1} parent=1 // pred_check
      _
    $region39: #{ctc_forward.1} parent=1 // pred_check_branch
      %3440 = sbr.rel (0) target = $region41
    $region40: #{ctc_forward.1} parent=1 // pred_region
      %s3442 = ssub.s32 256, 256
      %3443 = vsyncadd [#allocation8], %s3442
      %s3444 = sshll.u32 [#allocation7], 4
      %s3445 = int_to_ptr.vmem [resolvable:$true] %s3444
      %3450 = dma.vmem_to_hbm [thread:$0]  %s3445, 256, %s7, [#allocation8], 128, 128, 8
    $region41: #{ctc_forward.1} parent=1 // pred_fallthru
      _
    // Predicated region
    $region42: #{ctc_forward.1} parent=1 // pred_check
      _
    $region43: #{ctc_forward.1} parent=1 // pred_check_branch
      %3452 = sbr.rel (0) target = $region45
    $region44: #{ctc_forward.1} parent=1 // pred_region
      %s3454 = ssub.s32 256, 256
      %3455 = vsyncadd [#allocation10], %s3454
      %s3456 = sshll.u32 [#allocation9], 4
      %s3457 = int_to_ptr.vmem [resolvable:$true] %s3456
      %3462 = dma.vmem_to_hbm [thread:$0]  %s3457, 256, %s8, [#allocation10], 128, 128, 8
    $region45: #{ctc_forward.1} parent=1 // pred_fallthru
      _
    // Predicated region
    $region46: #{ctc_forward.1} parent=1 // pred_check
      _
    $region47: #{ctc_forward.1} parent=1 // pred_check_branch
      %3464 = sbr.rel (0) target = $region49
    $region48: #{ctc_forward.1} parent=1 // pred_region
      %3465 = dma.done [#allocation8], 256
    $region49: #{ctc_forward.1} parent=1 // pred_fallthru
      _
    // Predicated region
    $region50: #{ctc_forward.1} parent=1 // pred_check
      _
    $region51: #{ctc_forward.1} parent=1 // pred_check_branch
      %3467 = sbr.rel (0) target = $region53
    $region52: #{ctc_forward.1} parent=1 // pred_region
      %3468 = dma.done [#allocation10], 256
    $region53: #{ctc_forward.1} parent=1 // pred_fallthru
      _
    %3469 = vsyncpa [#allocation8], 1
    %3470 = vsyncpa [#allocation10], 1

</llo_original>
